<compile_context>
chip_gen: v5e
topology: v5e:2x2
jax: 0.10.0
libtpu: 0.0.40
codegen_flags: <defaults>
</compile_context>

<pallas_src>
import jax
import jax.numpy as jnp
from jax.experimental import pallas as pl
from jax.experimental.pallas import tpu as pltpu

NEG_SLOPE = 0.2                    # LeakyReLU negative_slope
H_CHUNK = 256                      # hidden-dim tile inside the attention kernel
VMEM_LIMIT_BYTES = 32 * 1024 * 1024
_HI = jax.lax.Precision.HIGHEST


def _leaky(x):
    return jnp.where(x >= 0, x, NEG_SLOPE * x)


def _round_up(x, m):
    return (x + m - 1) // m * m


def _pad_rows(x, mult):
    pad = (-x.shape[0]) % mult
    if pad == 0:
        return x
    widths = [(0, pad)] + [(0, 0)] * (x.ndim - 1)
    return jnp.pad(x, widths)


# ------------------------------ Pallas kernels ------------------------------

def proj_kernel(x_ref, wp_ref, bp_ref, o_ref):
    # supports_proj = LeakyReLU(word_vec @ Wp + bp); bf16 into the MXU, f32 accumulate.
    x = x_ref[...].astype(jnp.bfloat16)
    y = jnp.dot(x, wp_ref[...], preferred_element_type=jnp.float32) + bp_ref[...]
    o_ref[...] = _leaky(y).astype(o_ref.dtype)


def attn_kernel(q_ref, ka_ref, mask_ref,
                w1q_ref, w1ka_ref, b1_ref, w2_ref,
                wpp_ref, bp_ref, b2_ref, out_ref):
    # q_ref   : [Bt, Cin]        bf16   supports[src_idx] tile
    # ka_ref  : [Bt*K, Cin+4]    bf16   concat(supports[neighs_idx], aux), flattened
    # mask_ref: [Bt, K]          f32
    # weights : w1q [Cin,H] bf16, w1ka=[w1k;w1a] [Cin+4,H] bf16, b1/w2 [1,H] f32,
    #           wpp = Wp zero-padded over the aux columns [Cin+4,Cout] bf16,
    #           bp [1,Cout] f32, b2 scalar in SMEM.
    bt, k = mask_ref.shape
    h_total = w1q_ref.shape[1]
    cout = wpp_ref.shape[1]
    hc = H_CHUNK if h_total % H_CHUNK == 0 else h_total

    q = q_ref[...]                     # [Bt, Cin]      bf16
    ka2d = ka_ref[...]                 # [Bt*K, Cin+4]  bf16

    # --- atn_proj MLP, hidden dim chunked: only [Bt,K,hc] is ever live, never
    #     the full [Bt,K,1024] activation (VMEM / vreg pressure). ---
    scores = jnp.zeros((bt, k), jnp.float32)
    for lo in range(0, h_total, hc):   # static unroll, H/hc chunks
        hi = lo + hc
        hq = jnp.dot(q, w1q_ref[:, lo:hi],
                     preferred_element_type=jnp.float32)              # [Bt, hc]
        hka = jnp.dot(ka2d, w1ka_ref[:, lo:hi],
                      preferred_element_type=jnp.float32)             # [Bt*K, hc]
        hid = hka.reshape(bt, k, hc) + hq[:, None, :] + b1_ref[:, lo:hi]
        hid = _leaky(hid)
        scores = scores + jnp.sum(hid * w2_ref[:, lo:hi], axis=-1)    # [Bt, K]
    scores = scores + b2_ref[0]

    # --- masked softmax over the K neighbors (f32 on the VPU/EUP) ---
    scores = jnp.where(mask_ref[...] > 0.5, scores, jnp.float32(-1000000.0))
    m = jnp.max(scores, axis=-1, keepdims=True)
    e = jnp.exp(scores - m)
    probs = e / jnp.sum(e, axis=-1, keepdims=True)                    # [Bt, K]

    # --- proj(supports)[neighs_idx] recomputed in-kernel (removes the [B,K,Cout]
    #     HBM gather); wpp's aux rows are exactly zero so ka2d @ wpp == key @ Wp. ---
    kp = jnp.dot(ka2d, wpp_ref[...], preferred_element_type=jnp.float32) + bp_ref[...]
    kp = _leaky(kp).reshape(bt, k, cout)                              # [Bt, K, Cout]

    # attention-weighted aggregation -> [Bt, Cout]
    out_ref[...] = jnp.sum(probs[:, :, None] * kp, axis=1).astype(out_ref.dtype)


# ------------------------------ wrappers ------------------------------------

def proj_forward(word_vec, wp_bf16, bp_2d, *, block_n=256):
    n, cin = word_vec.shape
    cout = wp_bf16.shape[1]
    nt = min(_round_up(block_n, 8), _round_up(n, 8))
    xp = _pad_rows(word_vec, nt)
    n_pad = xp.shape[0]
    out = pl.pallas_call(
        proj_kernel,
        out_shape=jax.ShapeDtypeStruct((n_pad, cout), jnp.float32),
        grid=(n_pad // nt,),
        in_specs=[
            pl.BlockSpec((nt, cin), lambda i: (i, 0)),       # node rows stream / pipeline
            pl.BlockSpec((cin, cout), lambda i: (0, 0)),     # weight stays VMEM-resident
            pl.BlockSpec((1, cout), lambda i: (0, 0)),
        ],
        out_specs=pl.BlockSpec((nt, cout), lambda i: (i, 0)),
        compiler_params=pltpu.CompilerParams(
            dimension_semantics=("parallel",),
            vmem_limit_bytes=VMEM_LIMIT_BYTES),
    )(xp, wp_bf16, bp_2d)
    return out[:n]


def attn_forward(query, ka, mask, kparams, cout, *, block_b=128):
    b, cin = query.shape
    k = ka.shape[1]
    h = kparams['w1q'].shape[1]
    bt = min(_round_up(block_b, 8), _round_up(b, 8))

    qp = _pad_rows(query, bt)
    kap = _pad_rows(ka, bt)
    mp = _pad_rows(mask, bt)            # padded rows are fully masked -> discarded
    b_pad = qp.shape[0]
    ka_flat = kap.reshape(b_pad * k, kap.shape[2])

    out = pl.pallas_call(
        attn_kernel,
        out_shape=jax.ShapeDtypeStruct((b_pad, cout), jnp.float32),
        grid=(b_pad // bt,),
        in_specs=[
            # per-source-node activations stream in bf16
            pl.BlockSpec((bt, cin), lambda i: (i, 0)),
            pl.BlockSpec((bt * k, ka.shape[2]), lambda i: (i, 0)),
            pl.BlockSpec((bt, k), lambda i: (i, 0)),
            # weights: constant index maps -> loaded once, resident across the grid
            pl.BlockSpec(kparams['w1q'].shape, lambda i: (0, 0)),
            pl.BlockSpec(kparams['w1ka'].shape, lambda i: (0, 0)),
            pl.BlockSpec((1, h), lambda i: (0, 0)),
            pl.BlockSpec((1, h), lambda i: (0, 0)),
            pl.BlockSpec(kparams['wpp'].shape, lambda i: (0, 0)),
            pl.BlockSpec((1, cout), lambda i: (0, 0)),
            # scalar bias b2 lives on the scalar path
            pl.BlockSpec(memory_space=pltpu.MemorySpace.SMEM),
        ],
        out_specs=pl.BlockSpec((bt, cout), lambda i: (i, 0)),
        compiler_params=pltpu.CompilerParams(
            dimension_semantics=("parallel",),
            vmem_limit_bytes=VMEM_LIMIT_BYTES),
    )(qp, ka_flat, mp,
      kparams['w1q'], kparams['w1ka'], kparams['b1_2d'], kparams['w2_2d'],
      kparams['wpp'], kparams['bp_2d'], kparams['b2_1d'])
    return out[:b]


def prepare_params(params):
    cin, cout = params['wp'].shape
    h = params['b1'].shape[0]
    n_aux = params['w1a'].shape[0]
    wp = params['wp'].astype(jnp.float32)
    return {
        # proj weights: bf16 into the MXU, f32 bias / accumulation
        'wp_bf16': wp.astype(jnp.bfloat16),
        'bp_2d': params['bp'].reshape(1, cout).astype(jnp.float32),
        # atn_proj layer 1: keep w1q separate (amortized over K); fuse w1k|w1a
        'w1q': params['w1q'].astype(jnp.bfloat16),
        'w1ka': jnp.concatenate([params['w1k'], params['w1a']],
                                axis=0).astype(jnp.bfloat16),
        'b1_2d': params['b1'].reshape(1, h).astype(jnp.float32),
        # atn_proj layer 2 stays on the VPU in f32
        'w2_2d': params['w2'].reshape(1, h).astype(jnp.float32),
        'b2_1d': params['b2'].reshape(1).astype(jnp.float32),
        # Wp zero-padded over the aux columns so the in-kernel neighbor proj can
        # reuse the already-streamed [key|aux] rows with a single matmul.
        'wpp': jnp.concatenate([wp, jnp.zeros((n_aux, cout), jnp.float32)],
                               axis=0).astype(jnp.bfloat16),
    }


def graph_att_forward(params, word_vec, src_idx, neighs_idx, aux, src_mask,
                      *, block_n=256, block_b=128):
    # TODO(synk): the original PyTorch forward only defines `supports` inside the
    # dropout branch (NameError when dropout=False); intended eval semantics
    # (dropout == identity) are supports = word_vec.
    supports = word_vec
    kparams = prepare_params(params)
    cout = params['wp'].shape[1]

    # 1) supports_proj = LeakyReLU(supports @ Wp + bp) for every node (output slab).
    supports_proj = proj_forward(supports, kparams['wp_bf16'], kparams['bp_2d'],
                                 block_n=block_n)

    # 2) Gathers stay JAX glue; everything downstream (atn_proj MLP, masked softmax,
    #    neighbor proj, weighted aggregation) is fused in a single pallas_call, so
    #    the old [B,K,Cout] proj gather and its kernel round-trip are gone and the
    #    [B,K,*] activations stream in bf16 (half the HBM bytes).
    query = supports[src_idx].astype(jnp.bfloat16)                           # [B, Cin]
    ka = jnp.concatenate([supports[neighs_idx], aux],
                         axis=-1).astype(jnp.bfloat16)                       # [B, K, Cin+4]
    agg = attn_forward(query, ka, src_mask.astype(jnp.float32), kparams, cout,
                       block_b=block_b)                                      # [B, Cout]

    # 3) supports_proj[src_idx] = agg  (scatter is JAX glue; duplicate src_idx
    #    entries have unspecified which-write-wins semantics, same as PyTorch).
    return supports_proj.at[src_idx].set(agg)


# ------------------------------ pure-JAX reference ---------------------------

def reference_forward(params, word_vec, src_idx, neighs_idx, aux, src_mask,
                      mxu_dtype=jnp.float32):
    """Reference mirroring the PyTorch forward; `mxu_dtype` lets the check match
    the kernel's bf16-into-MXU numerics exactly."""
    def mm(a, b):
        return jnp.dot(a.astype(mxu_dtype), b.astype(mxu_dtype),
                       preferred_element_type=jnp.float32, precision=_HI)

    supports = word_vec
    k = neighs_idx.shape[1]
    query = jnp.repeat(supports[src_idx][:, None, :], k, axis=1)
    key = supports[neighs_idx]
    cmb = jnp.concatenate([query, key, aux], axis=-1)
    w1 = jnp.concatenate([params['w1q'], params['w1k'], params['w1a']], axis=0)
    hid = _leaky(mm(cmb, w1) + params['b1'])
    scores = jnp.einsum('bkh,h->bk', hid, params['w2'], precision=_HI) + params['b2'][0]
    scores = jnp.where(src_mask == 1, scores, -1000000.0)
    probs = jax.nn.softmax(scores, axis=-1)
    sp = _leaky(mm(supports, params['wp']) + params['bp'])
    agg = jnp.einsum('bk,bko->bo', probs, sp[neighs_idx], precision=_HI)
    return sp.at[src_idx].set(agg)


# ------------------------------ main -----------------------------------------

if __name__ == "__main__":
    # Small shapes consistent with GraphAtt (H=1024 fixed by the module); chosen so
    # both kernel grids have >1 step and exercise the pipelined path.
    N, Cin, Cout, B, K, H = 64, 8, 16, 32, 8, 1024

    key0 = jax.random.PRNGKey(0)
    ks = jax.random.split(key0, 13)

    params = {
        # proj: Linear(Cin, Cout) + LeakyReLU
        'wp': jax.random.normal(ks[0], (Cin, Cout), jnp.float32) * 0.2,
        'bp': jax.random.normal(ks[1], (Cout,), jnp.float32) * 0.1,
        # atn_proj layer 1: Linear(2*Cin + 4, 1024), W1 split column-block-wise
        'w1q': jax.random.normal(ks[2], (Cin, H), jnp.float32) * 0.05,
        'w1k': jax.random.normal(ks[3], (Cin, H), jnp.float32) * 0.05,
        'w1a': jax.random.normal(ks[4], (4, H), jnp.float32) * 0.05,
        'b1': jax.random.normal(ks[5], (H,), jnp.float32) * 0.05,
        # atn_proj layer 2: Linear(1024, 1)
        'w2': jax.random.normal(ks[6], (H,), jnp.float32) * 0.05,
        'b2': jax.random.normal(ks[7], (1,), jnp.float32) * 0.05,
        # NOTE: proj_after, aux_attn, relu are defined in __init__ but unused in forward.
    }

    word_vec = jax.random.normal(ks[8], (N, Cin), jnp.float32)
    src_idx = jax.random.permutation(ks[9], N)[:B].astype(jnp.int32)      # unique rows
    neighs_idx = jax.random.randint(ks[10], (B, K), 0, N, dtype=jnp.int32)
    aux = jax.random.normal(ks[11], (B, K, 4), jnp.float32)
    src_mask = (jax.random.uniform(ks[12], (B, K)) > 0.3).astype(jnp.float32)
    src_mask = src_mask.at[:, 0].set(1.0)   # at least one valid neighbor per row

    fwd = jax.jit(lambda *a: graph_att_forward(*a, block_n=32, block_b=16))
    out = jax.block_until_ready(fwd(params, word_vec, src_idx, neighs_idx, aux, src_mask))
    assert out.shape == (N, Cout), out.shape

    # Structural check: reference with the same bf16-into-MXU numerics (tight tol).
    ref_bf16 = reference_forward(params, word_vec, src_idx, neighs_idx, aux, src_mask,
                                 mxu_dtype=jnp.bfloat16)
    err_struct = float(jnp.max(jnp.abs(out - ref_bf16)))
    assert err_struct < 2e-3, err_struct

    # Semantic check vs pure-f32 PyTorch math (bf16 MXU inputs => looser tolerance).
    ref_f32 = reference_forward(params, word_vec, src_idx, neighs_idx, aux, src_mask)
    err_sem = float(jnp.max(jnp.abs(out - ref_f32)))
    assert err_sem < 5e-2, err_sem

    print("KERNEL_OK")
</pallas_src>

<mosaic_0001>
module attributes {stable_mosaic.version = 11 : i64} {
  func.func @attn_kernel(%arg0: i32, %arg1: memref<16x8xbf16, #tpu.memory_space<vmem>>, %arg2: memref<128x12xbf16, #tpu.memory_space<vmem>>, %arg3: memref<16x8xf32, #tpu.memory_space<vmem>>, %arg4: memref<8x1024xbf16, #tpu.memory_space<vmem>>, %arg5: memref<12x1024xbf16, #tpu.memory_space<vmem>>, %arg6: memref<1x1024xf32, #tpu.memory_space<vmem>>, %arg7: memref<1x1024xf32, #tpu.memory_space<vmem>>, %arg8: memref<12x16xbf16, #tpu.memory_space<vmem>>, %arg9: memref<1x16xf32, #tpu.memory_space<vmem>>, %arg10: memref<1xf32, #tpu.memory_space<smem>>, %arg11: memref<16x16xf32, #tpu.memory_space<vmem>>) attributes {dimension_semantics = [#tpu.dimension_semantics<parallel>], iteration_bounds = array<i64: 2>, scalar_prefetch = 0 : i64, scratch_operands = 0 : i64, tpu.core_type = #tpu.core_type<tc>, window_params = [{transform_indices = @transform_0, window_bounds = array<i64: 16, 8>}, {transform_indices = @transform_1, window_bounds = array<i64: 128, 12>}, {transform_indices = @transform_2, window_bounds = array<i64: 16, 8>}, {pipeline_mode = #tpu.pipeline_mode<synchronous>, transform_indices = @transform_3, window_bounds = array<i64: 8, 1024>}, {pipeline_mode = #tpu.pipeline_mode<synchronous>, transform_indices = @transform_4, window_bounds = array<i64: 12, 1024>}, {pipeline_mode = #tpu.pipeline_mode<synchronous>, transform_indices = @transform_5, window_bounds = array<i64: 1, 1024>}, {pipeline_mode = #tpu.pipeline_mode<synchronous>, transform_indices = @transform_6, window_bounds = array<i64: 1, 1024>}, {pipeline_mode = #tpu.pipeline_mode<synchronous>, transform_indices = @transform_7, window_bounds = array<i64: 12, 16>}, {pipeline_mode = #tpu.pipeline_mode<synchronous>, transform_indices = @transform_8, window_bounds = array<i64: 1, 16>}, {transform_indices = @transform_9, window_bounds = array<i64: 1>}, {transform_indices = @transform_10, window_bounds = array<i64: 16, 16>}]} {
    %c0 = arith.constant 0 : index
    %c0_0 = arith.constant 0 : index
    %0 = vector.load %arg1[%c0, %c0_0] : memref<16x8xbf16, #tpu.memory_space<vmem>>, vector<16x8xbf16>
    %c0_1 = arith.constant 0 : index
    %c0_2 = arith.constant 0 : index
    %1 = vector.load %arg2[%c0_1, %c0_2] : memref<128x12xbf16, #tpu.memory_space<vmem>>, vector<128x12xbf16>
    %cst = arith.constant 0.000000e+00 : f32
    %2 = vector.broadcast %cst : f32 to vector<16x8xf32>
    %c0_3 = arith.constant 0 : index
    %c0_4 = arith.constant 0 : index
    %3 = vector.load %arg4[%c0_3, %c0_4] : memref<8x1024xbf16, #tpu.memory_space<vmem>>, vector<8x256xbf16>
    %cst_5 = arith.constant dense<0.000000e+00> : vector<16x256xf32>
    %4 = tpu.matmul %0, %3, %cst_5 {dimension_numbers = #tpu.dot_dimension_numbers<[1], [0], [0], [1], [0, 0, 1, 1], [], []>} : vector<16x8xbf16>, vector<8x256xbf16>, vector<16x256xf32> -> vector<16x256xf32>
    %c0_6 = arith.constant 0 : index
    %c0_7 = arith.constant 0 : index
    %5 = vector.load %arg5[%c0_6, %c0_7] : memref<12x1024xbf16, #tpu.memory_space<vmem>>, vector<12x256xbf16>
    %cst_8 = arith.constant dense<0.000000e+00> : vector<128x256xf32>
    %6 = tpu.matmul %1, %5, %cst_8 {dimension_numbers = #tpu.dot_dimension_numbers<[1], [0], [0], [1], [0, 0, 1, 1], [], []>} : vector<128x12xbf16>, vector<12x256xbf16>, vector<128x256xf32> -> vector<128x256xf32>
    %7 = vector.shape_cast %6 : vector<128x256xf32> to vector<16x8x256xf32>
    %8 = vector.shape_cast %4 : vector<16x256xf32> to vector<16x1x256xf32>
    %9 = vector.broadcast %8 : vector<16x1x256xf32> to vector<16x8x256xf32>
    %10 = arith.addf %7, %9 : vector<16x8x256xf32>
    %c0_9 = arith.constant 0 : index
    %c0_10 = arith.constant 0 : index
    %11 = vector.load %arg6[%c0_9, %c0_10] : memref<1x1024xf32, #tpu.memory_space<vmem>>, vector<1x256xf32>
    %12 = vector.shape_cast %11 : vector<1x256xf32> to vector<1x1x256xf32>
    %13 = vector.broadcast %12 : vector<1x1x256xf32> to vector<16x8x256xf32>
    %14 = arith.addf %10, %13 : vector<16x8x256xf32>
    %cst_11 = arith.constant 0.000000e+00 : f32
    %15 = vector.broadcast %cst_11 : f32 to vector<16x8x256xf32>
    %16 = arith.cmpf oge, %14, %15 : vector<16x8x256xf32>
    %cst_12 = arith.constant 2.000000e-01 : f32
    %17 = vector.broadcast %cst_12 : f32 to vector<16x8x256xf32>
    %18 = arith.mulf %17, %14 : vector<16x8x256xf32>
    %19 = arith.select %16, %14, %18 : vector<16x8x256xi1>, vector<16x8x256xf32>
    %c0_13 = arith.constant 0 : index
    %c0_14 = arith.constant 0 : index
    %20 = vector.load %arg7[%c0_13, %c0_14] : memref<1x1024xf32, #tpu.memory_space<vmem>>, vector<1x256xf32>
    %21 = vector.shape_cast %20 : vector<1x256xf32> to vector<1x1x256xf32>
    %22 = vector.broadcast %21 : vector<1x1x256xf32> to vector<16x8x256xf32>
    %23 = arith.mulf %19, %22 : vector<16x8x256xf32>
    %cst_15 = arith.constant dense<0.000000e+00> : vector<16x8xf32>
    %24 = vector.multi_reduction <add>, %23, %cst_15 [2] : vector<16x8x256xf32> to vector<16x8xf32>
    %25 = arith.addf %2, %24 : vector<16x8xf32>
    %c0_16 = arith.constant 0 : index
    %c256 = arith.constant 256 : index
    %26 = vector.load %arg4[%c0_16, %c256] : memref<8x1024xbf16, #tpu.memory_space<vmem>>, vector<8x256xbf16>
    %cst_17 = arith.constant dense<0.000000e+00> : vector<16x256xf32>
    %27 = tpu.matmul %0, %26, %cst_17 {dimension_numbers = #tpu.dot_dimension_numbers<[1], [0], [0], [1], [0, 0, 1, 1], [], []>} : vector<16x8xbf16>, vector<8x256xbf16>, vector<16x256xf32> -> vector<16x256xf32>
    %c0_18 = arith.constant 0 : index
    %c256_19 = arith.constant 256 : index
    %28 = vector.load %arg5[%c0_18, %c256_19] : memref<12x1024xbf16, #tpu.memory_space<vmem>>, vector<12x256xbf16>
    %cst_20 = arith.constant dense<0.000000e+00> : vector<128x256xf32>
    %29 = tpu.matmul %1, %28, %cst_20 {dimension_numbers = #tpu.dot_dimension_numbers<[1], [0], [0], [1], [0, 0, 1, 1], [], []>} : vector<128x12xbf16>, vector<12x256xbf16>, vector<128x256xf32> -> vector<128x256xf32>
    %30 = vector.shape_cast %29 : vector<128x256xf32> to vector<16x8x256xf32>
    %31 = vector.shape_cast %27 : vector<16x256xf32> to vector<16x1x256xf32>
    %32 = vector.broadcast %31 : vector<16x1x256xf32> to vector<16x8x256xf32>
    %33 = arith.addf %30, %32 : vector<16x8x256xf32>
    %c0_21 = arith.constant 0 : index
    %c256_22 = arith.constant 256 : index
    %34 = vector.load %arg6[%c0_21, %c256_22] : memref<1x1024xf32, #tpu.memory_space<vmem>>, vector<1x256xf32>
    %35 = vector.shape_cast %34 : vector<1x256xf32> to vector<1x1x256xf32>
    %36 = vector.broadcast %35 : vector<1x1x256xf32> to vector<16x8x256xf32>
    %37 = arith.addf %33, %36 : vector<16x8x256xf32>
    %cst_23 = arith.constant 0.000000e+00 : f32
    %38 = vector.broadcast %cst_23 : f32 to vector<16x8x256xf32>
    %39 = arith.cmpf oge, %37, %38 : vector<16x8x256xf32>
    %cst_24 = arith.constant 2.000000e-01 : f32
    %40 = vector.broadcast %cst_24 : f32 to vector<16x8x256xf32>
    %41 = arith.mulf %40, %37 : vector<16x8x256xf32>
    %42 = arith.select %39, %37, %41 : vector<16x8x256xi1>, vector<16x8x256xf32>
    %c0_25 = arith.constant 0 : index
    %c256_26 = arith.constant 256 : index
    %43 = vector.load %arg7[%c0_25, %c256_26] : memref<1x1024xf32, #tpu.memory_space<vmem>>, vector<1x256xf32>
    %44 = vector.shape_cast %43 : vector<1x256xf32> to vector<1x1x256xf32>
    %45 = vector.broadcast %44 : vector<1x1x256xf32> to vector<16x8x256xf32>
    %46 = arith.mulf %42, %45 : vector<16x8x256xf32>
    %cst_27 = arith.constant dense<0.000000e+00> : vector<16x8xf32>
    %47 = vector.multi_reduction <add>, %46, %cst_27 [2] : vector<16x8x256xf32> to vector<16x8xf32>
    %48 = arith.addf %25, %47 : vector<16x8xf32>
    %c0_28 = arith.constant 0 : index
    %c512 = arith.constant 512 : index
    %49 = vector.load %arg4[%c0_28, %c512] : memref<8x1024xbf16, #tpu.memory_space<vmem>>, vector<8x256xbf16>
    %cst_29 = arith.constant dense<0.000000e+00> : vector<16x256xf32>
    %50 = tpu.matmul %0, %49, %cst_29 {dimension_numbers = #tpu.dot_dimension_numbers<[1], [0], [0], [1], [0, 0, 1, 1], [], []>} : vector<16x8xbf16>, vector<8x256xbf16>, vector<16x256xf32> -> vector<16x256xf32>
    %c0_30 = arith.constant 0 : index
    %c512_31 = arith.constant 512 : index
    %51 = vector.load %arg5[%c0_30, %c512_31] : memref<12x1024xbf16, #tpu.memory_space<vmem>>, vector<12x256xbf16>
    %cst_32 = arith.constant dense<0.000000e+00> : vector<128x256xf32>
    %52 = tpu.matmul %1, %51, %cst_32 {dimension_numbers = #tpu.dot_dimension_numbers<[1], [0], [0], [1], [0, 0, 1, 1], [], []>} : vector<128x12xbf16>, vector<12x256xbf16>, vector<128x256xf32> -> vector<128x256xf32>
    %53 = vector.shape_cast %52 : vector<128x256xf32> to vector<16x8x256xf32>
    %54 = vector.shape_cast %50 : vector<16x256xf32> to vector<16x1x256xf32>
    %55 = vector.broadcast %54 : vector<16x1x256xf32> to vector<16x8x256xf32>
    %56 = arith.addf %53, %55 : vector<16x8x256xf32>
    %c0_33 = arith.constant 0 : index
    %c512_34 = arith.constant 512 : index
    %57 = vector.load %arg6[%c0_33, %c512_34] : memref<1x1024xf32, #tpu.memory_space<vmem>>, vector<1x256xf32>
    %58 = vector.shape_cast %57 : vector<1x256xf32> to vector<1x1x256xf32>
    %59 = vector.broadcast %58 : vector<1x1x256xf32> to vector<16x8x256xf32>
    %60 = arith.addf %56, %59 : vector<16x8x256xf32>
    %cst_35 = arith.constant 0.000000e+00 : f32
    %61 = vector.broadcast %cst_35 : f32 to vector<16x8x256xf32>
    %62 = arith.cmpf oge, %60, %61 : vector<16x8x256xf32>
    %cst_36 = arith.constant 2.000000e-01 : f32
    %63 = vector.broadcast %cst_36 : f32 to vector<16x8x256xf32>
    %64 = arith.mulf %63, %60 : vector<16x8x256xf32>
    %65 = arith.select %62, %60, %64 : vector<16x8x256xi1>, vector<16x8x256xf32>
    %c0_37 = arith.constant 0 : index
    %c512_38 = arith.constant 512 : index
    %66 = vector.load %arg7[%c0_37, %c512_38] : memref<1x1024xf32, #tpu.memory_space<vmem>>, vector<1x256xf32>
    %67 = vector.shape_cast %66 : vector<1x256xf32> to vector<1x1x256xf32>
    %68 = vector.broadcast %67 : vector<1x1x256xf32> to vector<16x8x256xf32>
    %69 = arith.mulf %65, %68 : vector<16x8x256xf32>
    %cst_39 = arith.constant dense<0.000000e+00> : vector<16x8xf32>
    %70 = vector.multi_reduction <add>, %69, %cst_39 [2] : vector<16x8x256xf32> to vector<16x8xf32>
    %71 = arith.addf %48, %70 : vector<16x8xf32>
    %c0_40 = arith.constant 0 : index
    %c768 = arith.constant 768 : index
    %72 = vector.load %arg4[%c0_40, %c768] : memref<8x1024xbf16, #tpu.memory_space<vmem>>, vector<8x256xbf16>
    %cst_41 = arith.constant dense<0.000000e+00> : vector<16x256xf32>
    %73 = tpu.matmul %0, %72, %cst_41 {dimension_numbers = #tpu.dot_dimension_numbers<[1], [0], [0], [1], [0, 0, 1, 1], [], []>} : vector<16x8xbf16>, vector<8x256xbf16>, vector<16x256xf32> -> vector<16x256xf32>
    %c0_42 = arith.constant 0 : index
    %c768_43 = arith.constant 768 : index
    %74 = vector.load %arg5[%c0_42, %c768_43] : memref<12x1024xbf16, #tpu.memory_space<vmem>>, vector<12x256xbf16>
    %cst_44 = arith.constant dense<0.000000e+00> : vector<128x256xf32>
    %75 = tpu.matmul %1, %74, %cst_44 {dimension_numbers = #tpu.dot_dimension_numbers<[1], [0], [0], [1], [0, 0, 1, 1], [], []>} : vector<128x12xbf16>, vector<12x256xbf16>, vector<128x256xf32> -> vector<128x256xf32>
    %76 = vector.shape_cast %75 : vector<128x256xf32> to vector<16x8x256xf32>
    %77 = vector.shape_cast %73 : vector<16x256xf32> to vector<16x1x256xf32>
    %78 = vector.broadcast %77 : vector<16x1x256xf32> to vector<16x8x256xf32>
    %79 = arith.addf %76, %78 : vector<16x8x256xf32>
    %c0_45 = arith.constant 0 : index
    %c768_46 = arith.constant 768 : index
    %80 = vector.load %arg6[%c0_45, %c768_46] : memref<1x1024xf32, #tpu.memory_space<vmem>>, vector<1x256xf32>
    %81 = vector.shape_cast %80 : vector<1x256xf32> to vector<1x1x256xf32>
    %82 = vector.broadcast %81 : vector<1x1x256xf32> to vector<16x8x256xf32>
    %83 = arith.addf %79, %82 : vector<16x8x256xf32>
    %cst_47 = arith.constant 0.000000e+00 : f32
    %84 = vector.broadcast %cst_47 : f32 to vector<16x8x256xf32>
    %85 = arith.cmpf oge, %83, %84 : vector<16x8x256xf32>
    %cst_48 = arith.constant 2.000000e-01 : f32
    %86 = vector.broadcast %cst_48 : f32 to vector<16x8x256xf32>
    %87 = arith.mulf %86, %83 : vector<16x8x256xf32>
    %88 = arith.select %85, %83, %87 : vector<16x8x256xi1>, vector<16x8x256xf32>
    %c0_49 = arith.constant 0 : index
    %c768_50 = arith.constant 768 : index
    %89 = vector.load %arg7[%c0_49, %c768_50] : memref<1x1024xf32, #tpu.memory_space<vmem>>, vector<1x256xf32>
    %90 = vector.shape_cast %89 : vector<1x256xf32> to vector<1x1x256xf32>
    %91 = vector.broadcast %90 : vector<1x1x256xf32> to vector<16x8x256xf32>
    %92 = arith.mulf %88, %91 : vector<16x8x256xf32>
    %cst_51 = arith.constant dense<0.000000e+00> : vector<16x8xf32>
    %93 = vector.multi_reduction <add>, %92, %cst_51 [2] : vector<16x8x256xf32> to vector<16x8xf32>
    %94 = arith.addf %71, %93 : vector<16x8xf32>
    %c0_52 = arith.constant 0 : index
    %95 = memref.load %arg10[%c0_52] : memref<1xf32, #tpu.memory_space<smem>>
    %96 = vector.broadcast %95 : f32 to vector<16x8xf32>
    %97 = arith.addf %94, %96 : vector<16x8xf32>
    %c0_53 = arith.constant 0 : index
    %c0_54 = arith.constant 0 : index
    %98 = vector.load %arg3[%c0_53, %c0_54] : memref<16x8xf32, #tpu.memory_space<vmem>>, vector<16x8xf32>
    %cst_55 = arith.constant 5.000000e-01 : f32
    %99 = vector.broadcast %cst_55 : f32 to vector<16x8xf32>
    %100 = arith.cmpf ogt, %98, %99 : vector<16x8xf32>
    %cst_56 = arith.constant -1.000000e+06 : f32
    %101 = vector.broadcast %cst_56 : f32 to vector<16x8xf32>
    %102 = arith.select %100, %97, %101 : vector<16x8xi1>, vector<16x8xf32>
    %cst_57 = arith.constant dense<0xFF800000> : vector<16xf32>
    %103 = vector.multi_reduction <maximumf>, %102, %cst_57 [1] : vector<16x8xf32> to vector<16xf32>
    %104 = vector.shape_cast %103 : vector<16xf32> to vector<16x1xf32>
    %105 = vector.broadcast %104 : vector<16x1xf32> to vector<16x8xf32>
    %106 = arith.subf %102, %105 : vector<16x8xf32>
    %107 = math.exp %106 : vector<16x8xf32>
    %cst_58 = arith.constant dense<0.000000e+00> : vector<16xf32>
    %108 = vector.multi_reduction <add>, %107, %cst_58 [1] : vector<16x8xf32> to vector<16xf32>
    %109 = vector.shape_cast %108 : vector<16xf32> to vector<16x1xf32>
    %110 = vector.broadcast %109 : vector<16x1xf32> to vector<16x8xf32>
    %111 = arith.divf %107, %110 : vector<16x8xf32>
    %c0_59 = arith.constant 0 : index
    %c0_60 = arith.constant 0 : index
    %112 = vector.load %arg8[%c0_59, %c0_60] : memref<12x16xbf16, #tpu.memory_space<vmem>>, vector<12x16xbf16>
    %cst_61 = arith.constant dense<0.000000e+00> : vector<128x16xf32>
    %113 = tpu.matmul %1, %112, %cst_61 {dimension_numbers = #tpu.dot_dimension_numbers<[1], [0], [0], [1], [0, 0, 1, 1], [], []>} : vector<128x12xbf16>, vector<12x16xbf16>, vector<128x16xf32> -> vector<128x16xf32>
    %c0_62 = arith.constant 0 : index
    %c0_63 = arith.constant 0 : index
    %114 = vector.load %arg9[%c0_62, %c0_63] : memref<1x16xf32, #tpu.memory_space<vmem>>, vector<1x16xf32>
    %115 = vector.broadcast %114 : vector<1x16xf32> to vector<128x16xf32>
    %116 = arith.addf %113, %115 : vector<128x16xf32>
    %cst_64 = arith.constant 0.000000e+00 : f32
    %117 = vector.broadcast %cst_64 : f32 to vector<128x16xf32>
    %118 = arith.cmpf oge, %116, %117 : vector<128x16xf32>
    %cst_65 = arith.constant 2.000000e-01 : f32
    %119 = vector.broadcast %cst_65 : f32 to vector<128x16xf32>
    %120 = arith.mulf %119, %116 : vector<128x16xf32>
    %121 = arith.select %118, %116, %120 : vector<128x16xi1>, vector<128x16xf32>
    %122 = vector.shape_cast %121 : vector<128x16xf32> to vector<16x8x16xf32>
    %123 = vector.shape_cast %111 : vector<16x8xf32> to vector<16x8x1xf32>
    %124 = vector.broadcast %123 : vector<16x8x1xf32> to vector<16x8x16xf32>
    %125 = arith.mulf %124, %122 : vector<16x8x16xf32>
    %cst_66 = arith.constant dense<0.000000e+00> : vector<16x16xf32>
    %126 = vector.multi_reduction <add>, %125, %cst_66 [1] : vector<16x8x16xf32> to vector<16x16xf32>
    %c0_67 = arith.constant 0 : index
    %c0_68 = arith.constant 0 : index
    %127 = vector.load %arg11[%c0_67, %c0_68] : memref<16x16xf32, #tpu.memory_space<vmem>>, vector<16x16xf32>
    tpu.vector_store %arg11[%c0_67, %c0_68], %126 {strides = array<i32>} : memref<16x16xf32, #tpu.memory_space<vmem>>, vector<16x16xf32>,
    return
  }
  func.func @transform_0(%arg0: i32) -> (i32, i32) {
    %c0_i32 = arith.constant 0 : i32
    %c0_i32_0 = arith.constant 0 : i32
    return %arg0, %c0_i32 : i32, i32
  }
  func.func @transform_1(%arg0: i32) -> (i32, i32) {
    %c0_i32 = arith.constant 0 : i32
    %c0_i32_0 = arith.constant 0 : i32
    return %arg0, %c0_i32 : i32, i32
  }
  func.func @transform_2(%arg0: i32) -> (i32, i32) {
    %c0_i32 = arith.constant 0 : i32
    %c0_i32_0 = arith.constant 0 : i32
    return %arg0, %c0_i32 : i32, i32
  }
  func.func @transform_3(%arg0: i32) -> (i32, i32) {
    %c0_i32 = arith.constant 0 : i32
    %c0_i32_0 = arith.constant 0 : i32
    %c0_i32_1 = arith.constant 0 : i32
    return %c0_i32, %c0_i32_0 : i32, i32
  }
  func.func @transform_4(%arg0: i32) -> (i32, i32) {
    %c0_i32 = arith.constant 0 : i32
    %c0_i32_0 = arith.constant 0 : i32
    %c0_i32_1 = arith.constant 0 : i32
    return %c0_i32, %c0_i32_0 : i32, i32
  }
  func.func @transform_5(%arg0: i32) -> (i32, i32) {
    %c0_i32 = arith.constant 0 : i32
    %c0_i32_0 = arith.constant 0 : i32
    %c0_i32_1 = arith.constant 0 : i32
    return %c0_i32, %c0_i32_0 : i32, i32
  }
  func.func @transform_6(%arg0: i32) -> (i32, i32) {
    %c0_i32 = arith.constant 0 : i32
    %c0_i32_0 = arith.constant 0 : i32
    %c0_i32_1 = arith.constant 0 : i32
    return %c0_i32, %c0_i32_0 : i32, i32
  }
  func.func @transform_7(%arg0: i32) -> (i32, i32) {
    %c0_i32 = arith.constant 0 : i32
    %c0_i32_0 = arith.constant 0 : i32
    %c0_i32_1 = arith.constant 0 : i32
    return %c0_i32, %c0_i32_0 : i32, i32
  }
  func.func @transform_8(%arg0: i32) -> (i32, i32) {
    %c0_i32 = arith.constant 0 : i32
    %c0_i32_0 = arith.constant 0 : i32
    %c0_i32_1 = arith.constant 0 : i32
    return %c0_i32, %c0_i32_0 : i32, i32
  }
  func.func @transform_9(%arg0: i32) -> i32 {
    %c0_i32 = arith.constant 0 : i32
    %c0_i32_0 = arith.constant 0 : i32
    return %c0_i32 : i32
  }
  func.func @transform_10(%arg0: i32) -> (i32, i32) {
    %c0_i32 = arith.constant 0 : i32
    %c0_i32_0 = arith.constant 0 : i32
    return %arg0, %c0_i32 : i32, i32
  }
}

module attributes {stable_mosaic.version = 11 : i64} {
  func.func @proj_kernel(%arg0: i32, %arg1: memref<32x8xf32, #tpu.memory_space<vmem>>, %arg2: memref<8x16xbf16, #tpu.memory_space<vmem>>, %arg3: memref<1x16xf32, #tpu.memory_space<vmem>>, %arg4: memref<32x16xf32, #tpu.memory_space<vmem>>) attributes {dimension_semantics = [#tpu.dimension_semantics<parallel>], iteration_bounds = array<i64: 2>, scalar_prefetch = 0 : i64, scratch_operands = 0 : i64, tpu.core_type = #tpu.core_type<tc>, window_params = [{transform_indices = @transform_0, window_bounds = array<i64: 32, 8>}, {pipeline_mode = #tpu.pipeline_mode<synchronous>, transform_indices = @transform_1, window_bounds = array<i64: 8, 16>}, {pipeline_mode = #tpu.pipeline_mode<synchronous>, transform_indices = @transform_2, window_bounds = array<i64: 1, 16>}, {transform_indices = @transform_3, window_bounds = array<i64: 32, 16>}]} {
    %c0 = arith.constant 0 : index
    %c0_0 = arith.constant 0 : index
    %0 = vector.load %arg1[%c0, %c0_0] : memref<32x8xf32, #tpu.memory_space<vmem>>, vector<32x8xf32>
    %1 = arith.truncf %0 : vector<32x8xf32> to vector<32x8xbf16>
    %c0_1 = arith.constant 0 : index
    %c0_2 = arith.constant 0 : index
    %2 = vector.load %arg2[%c0_1, %c0_2] : memref<8x16xbf16, #tpu.memory_space<vmem>>, vector<8x16xbf16>
    %cst = arith.constant dense<0.000000e+00> : vector<32x16xf32>
    %3 = tpu.matmul %1, %2, %cst {dimension_numbers = #tpu.dot_dimension_numbers<[1], [0], [0], [1], [0, 0, 1, 1], [], []>} : vector<32x8xbf16>, vector<8x16xbf16>, vector<32x16xf32> -> vector<32x16xf32>
    %c0_3 = arith.constant 0 : index
    %c0_4 = arith.constant 0 : index
    %4 = vector.load %arg3[%c0_3, %c0_4] : memref<1x16xf32, #tpu.memory_space<vmem>>, vector<1x16xf32>
    %5 = vector.broadcast %4 : vector<1x16xf32> to vector<32x16xf32>
    %6 = arith.addf %3, %5 : vector<32x16xf32>
    %cst_5 = arith.constant 0.000000e+00 : f32
    %7 = vector.broadcast %cst_5 : f32 to vector<32x16xf32>
    %8 = arith.cmpf oge, %6, %7 : vector<32x16xf32>
    %cst_6 = arith.constant 2.000000e-01 : f32
    %9 = vector.broadcast %cst_6 : f32 to vector<32x16xf32>
    %10 = arith.mulf %9, %6 : vector<32x16xf32>
    %11 = arith.select %8, %6, %10 : vector<32x16xi1>, vector<32x16xf32>
    %c0_7 = arith.constant 0 : index
    %c0_8 = arith.constant 0 : index
    %12 = vector.load %arg4[%c0_7, %c0_8] : memref<32x16xf32, #tpu.memory_space<vmem>>, vector<32x16xf32>
    tpu.vector_store %arg4[%c0_7, %c0_8], %11 {strides = array<i32>} : memref<32x16xf32, #tpu.memory_space<vmem>>, vector<32x16xf32>,
    return
  }
  func.func @transform_0(%arg0: i32) -> (i32, i32) {
    %c0_i32 = arith.constant 0 : i32
    %c0_i32_0 = arith.constant 0 : i32
    return %arg0, %c0_i32 : i32, i32
  }
  func.func @transform_1(%arg0: i32) -> (i32, i32) {
    %c0_i32 = arith.constant 0 : i32
    %c0_i32_0 = arith.constant 0 : i32
    %c0_i32_1 = arith.constant 0 : i32
    return %c0_i32, %c0_i32_0 : i32, i32
  }
  func.func @transform_2(%arg0: i32) -> (i32, i32) {
    %c0_i32 = arith.constant 0 : i32
    %c0_i32_0 = arith.constant 0 : i32
    %c0_i32_1 = arith.constant 0 : i32
    return %c0_i32, %c0_i32_0 : i32, i32
  }
  func.func @transform_3(%arg0: i32) -> (i32, i32) {
    %c0_i32 = arith.constant 0 : i32
    %c0_i32_0 = arith.constant 0 : i32
    return %arg0, %c0_i32 : i32, i32
  }
}

</mosaic_0001>

<llo_original>
// kernel: _lambda_.2
$region0: #{_lambda_.2}
  #allocation0 [shape = 'u32[]', space=smem, size = 0x4, offset = 0x4, fixed_abs, tag = 'smem constant byte address 0x4 - core index']
  #allocation1 [shape = 'u32[72,128]{1,0:T(1,128)}', space=vmem, size = 0x9000, scoped, tag = 'internal scratch']
  %s0 = inlined_call_operand.vmem [shape: f32[64,8], index: 0, kind: input, shape index: {}]
  %s1 = inlined_call_operand.vmem [shape: bf16[8,16], index: 1, kind: input, shape index: {}]
  %s2 = inlined_call_operand.vmem [shape: f32[1,16], index: 2, kind: input, shape index: {}]
  %s3 = inlined_call_operand.vmem [shape: f32[64,16], index: 3, kind: output, shape index: {}]
  %s4 = sld [smem:[#allocation0]]
  $region45: #{_lambda_.2} parent=0
    _
  %s6 = ssub.s32 1, %s4
  %s7 = scalar_select 0, %s6, %s4
  loop: start=0, step=1, limit=4
  $region2: #{_lambda_.2} parent=0 // loop_pre_header
    _
  $region3: #{_lambda_.2} parent=0 // loop_header
    %s9 = sphi 0, %s13
    %p10 = scmp.ge.s32.totalorder %s9, 4
    %s19 = sphi 0, %s21
    %s22 = sphi 0, %s19
    %s23 = sphi 0, %s22
    %s39 = sphi 0, %s23
    %s43 = sphi 0, %s43
    %s45 = sphi 0, %s43
    %s46 = sphi 0, %s45
    %s60 = sphi 0, %s46
    %s64 = sphi 0, %s64
    %s66 = sphi 0, %s64
    %s67 = sphi 0, %s66
    %s81 = sphi 0, %s67
    %s87 = sphi 0, %s89
    %s90 = sphi 0, %s87
    %s91 = sphi 0, %s90
    %s107 = sphi 0, %s91
  $region4: #{_lambda_.2} parent=0 // loop_header_branch
    %12 = sbr.rel (%p10) target = $region8
  $region5: #{_lambda_.2} parent=0 // loop_body
    %s14 = ssub.s32 %s9, 1
    %s15 = ssub.s32 %s9, 2
    %s16 = sadd.s32 %s9, 1
    %s17 = ssub.s32 %s9, %s16
    %p18 = scmp.eq.s32.totalorder %s17, 0
    %s20 = sadd.s32 %s19, 1
    %s21 = scalar_select %p18, %s19, %s20
    %p24 = pneg %p18
    %p25 = scmp.eq.s32.totalorder %s9, 1
    %p26 = por %p24, %p25
    %p27 = scmp.ne.s32.totalorder %s19, %s22
    %p28 = scmp.eq.s32.totalorder %s9, 0
    %p29 = por %p27, %p28
    %p30 = scmp.ne.s32.totalorder %s19, %s22
    %p31 = scmp.eq.s32.totalorder %s14, 1
    %p32 = por %p30, %p31
    %p33 = scmp.ne.s32.totalorder %s22, %s23
    %p34 = scmp.eq.s32.totalorder %s14, 0
    %p35 = por %p33, %p34
    %p36 = scmp.ne.s32.totalorder %s22, %s23
    %p37 = scmp.eq.s32.totalorder %s15, 1
    %p38 = por %p36, %p37
    %p40 = scmp.ne.s32.totalorder %s23, %s39
    %p41 = scmp.eq.s32.totalorder %s15, 0
    %p42 = por %p40, %p41
    %s44 = sadd.s32 %s43, 1
    %p47 = scmp.eq.s32.totalorder %s9, 1
    %p48 = scmp.ne.s32.totalorder %s43, %s45
    %p49 = scmp.eq.s32.totalorder %s9, 0
    %p50 = por %p48, %p49
    %p51 = scmp.ne.s32.totalorder %s43, %s45
    %p52 = scmp.eq.s32.totalorder %s14, 1
    %p53 = por %p51, %p52
    %p54 = scmp.ne.s32.totalorder %s45, %s46
    %p55 = scmp.eq.s32.totalorder %s14, 0
    %p56 = por %p54, %p55
    %p57 = scmp.ne.s32.totalorder %s45, %s46
    %p58 = scmp.eq.s32.totalorder %s15, 1
    %p59 = por %p57, %p58
    %p61 = scmp.ne.s32.totalorder %s46, %s60
    %p62 = scmp.eq.s32.totalorder %s15, 0
    %p63 = por %p61, %p62
    %s65 = sadd.s32 %s64, 1
    %p68 = scmp.eq.s32.totalorder %s9, 1
    %p69 = scmp.ne.s32.totalorder %s64, %s66
    %p70 = scmp.eq.s32.totalorder %s9, 0
    %p71 = por %p69, %p70
    %p72 = scmp.ne.s32.totalorder %s64, %s66
    %p73 = scmp.eq.s32.totalorder %s14, 1
    %p74 = por %p72, %p73
    %p75 = scmp.ne.s32.totalorder %s66, %s67
    %p76 = scmp.eq.s32.totalorder %s14, 0
    %p77 = por %p75, %p76
    %p78 = scmp.ne.s32.totalorder %s66, %s67
    %p79 = scmp.eq.s32.totalorder %s15, 1
    %p80 = por %p78, %p79
    %p82 = scmp.ne.s32.totalorder %s67, %s81
    %p83 = scmp.eq.s32.totalorder %s15, 0
    %p84 = por %p82, %p83
    %s85 = ssub.s32 %s9, %s16
    %p86 = scmp.eq.s32.totalorder %s85, 0
    %s88 = sadd.s32 %s87, 1
    %s89 = scalar_select %p86, %s87, %s88
    %p92 = pneg %p86
    %p93 = scmp.eq.s32.totalorder %s9, 1
    %p94 = por %p92, %p93
    %p95 = scmp.ne.s32.totalorder %s87, %s90
    %p96 = scmp.eq.s32.totalorder %s9, 0
    %p97 = por %p95, %p96
    %p98 = scmp.ne.s32.totalorder %s87, %s90
    %p99 = scmp.eq.s32.totalorder %s14, 1
    %p100 = por %p98, %p99
    %p101 = scmp.ne.s32.totalorder %s90, %s91
    %p102 = scmp.eq.s32.totalorder %s14, 0
    %p103 = por %p101, %p102
    %p104 = scmp.ne.s32.totalorder %s90, %s91
    %p105 = scmp.eq.s32.totalorder %s15, 1
    %p106 = por %p104, %p105
    %p108 = scmp.ne.s32.totalorder %s91, %s107
    %p109 = scmp.eq.s32.totalorder %s15, 0
    %p110 = por %p108, %p109
    %p111 = scmp.le.s32.totalorder 1, %s9
    %p112 = scmp.lt.s32.totalorder %s9, 3
    %p113 = pnand %p111, %p112
    %p114 = pneg %p113
    // Predicated region
    $region9: #{_lambda_.2} parent=5 // pred_check
      _
    $region10: #{_lambda_.2} parent=5 // pred_check_branch
      %116 = sbr.rel (%p113) target = $region12
    $region11: #{_lambda_.2} parent=5 // pred_region
      %s117 = ssub.s32 %s9, 1
      // Predicated region
      $region13: #{_lambda_.2} parent=11 // pred_check
        %p118 = pneg %p56
      $region14: #{_lambda_.2} parent=11 // pred_check_branch
        %120 = sbr.rel (%p118) target = $region16
      $region15: #{_lambda_.2} parent=11 // pred_region
        _
      $region16: #{_lambda_.2} parent=11 // pred_fallthru
        _
      // Predicated region
      $region17: #{_lambda_.2} parent=11 // pred_check
        %p121 = pneg %p77
      $region18: #{_lambda_.2} parent=11 // pred_check_branch
        %123 = sbr.rel (%p121) target = $region20
      $region19: #{_lambda_.2} parent=11 // pred_region
        _
      $region20: #{_lambda_.2} parent=11 // pred_fallthru
        _
    $region12: #{_lambda_.2} parent=5 // pred_fallthru
      _
    %p124 = scmp.lt.s32.totalorder %s9, 2
    // Predicated region
    $region21: #{_lambda_.2} parent=5 // pred_check
      %p125 = pneg %p124
    $region22: #{_lambda_.2} parent=5 // pred_check_branch
      %127 = sbr.rel (%p125) target = $region24
    $region23: #{_lambda_.2} parent=5 // pred_region
      // Predicated region
      $region25: #{_lambda_.2} parent=23 // pred_check
        %p128 = pneg %p29
      $region26: #{_lambda_.2} parent=23 // pred_check_branch
        %130 = sbr.rel (%p128) target = $region28
      $region27: #{_lambda_.2} parent=23 // pred_region
        %s131 = smul.u32 4, %s9
        %p132 = scmp.lt.s32.totalorder %s131, 7
        %s133 = scalar_select %p132, %s131, 7
        %s134 = smul.addr %s133, 8
        %s135 = scalar_lea.vmem %s0, %s134
        %s136 = smul.u32 4, %s9
      $region28: #{_lambda_.2} parent=23 // pred_fallthru
        _
    $region24: #{_lambda_.2} parent=5 // pred_fallthru
      _
    %p137 = scmp.le.s32.totalorder 1, %s9
    %p138 = scmp.lt.s32.totalorder %s9, 3
    %p139 = pnand %p137, %p138
    %p140 = pneg %p139
    // Predicated region
    $region29: #{_lambda_.2} parent=5 // pred_check
      _
    $region30: #{_lambda_.2} parent=5 // pred_check_branch
      %142 = sbr.rel (%p139) target = $region32
    $region31: #{_lambda_.2} parent=5 // pred_region
      %s143 = ssub.s32 %s9, 1
      %s144 = smul.u32 4, %s14
      %p145 = scmp.lt.s32.totalorder %s144, 7
      %s146 = scalar_select %p145, %s144, 7
      %s147 = smul.addr %s146, 8
      %s148 = scalar_lea.vmem %s0, %s147
      %p149 = pneg %p35
      %p150 = pneg %p32
      %p151 = pneg %p56
      %p152 = pneg %p53
      %p153 = pneg %p77
      %p154 = pneg %p74
      %p155 = pneg %p103
      %p156 = pneg %p100
      %s157 = smul.u32 4, %s14
      %p158 = scmp.lt.s32.totalorder %s157, 7
      %s159 = scalar_select %p158, %s157, 7
      %s160 = smul.addr %s159, 8
      %s161 = scalar_lea.vmem %s3, %s160
      %s162 = smul.u32 4, %s14
      %p163 = scmp.lt.s32.totalorder %s162, 7
      %s164 = scalar_select %p163, %s162, 7
      %s165 = smul.addr %s164, 8
      %s166 = scalar_lea.vmem %s0, %s165
      %s167 = smul.u32 4, %s14
      %s168 = smul.u32 4, %s14
      %p169 = scmp.lt.s32.totalorder %s168, 7
      %s170 = scalar_select %p169, %s168, 7
      %s171 = smul.addr %s170, 8
      %s172 = scalar_lea.vmem %s3, %s171
      %s173 = smul.u32 4, %s14
      %v175 = vld [vmem:[%s166] sm:$0xff]
      %v176 = vld [vmem:[%s166 + $0x8] sm:$0xff]
      %v177 = vld [vmem:[%s166 + $0x10] sm:$0xff]
      %v178 = vld [vmem:[%s166 + $0x18] sm:$0xff]
      %v179 = vpack.c.bf16 %v176, %v175
      %v180 = vpack.c.bf16 %v178, %v177
      %v181 = vld [vmem:[%s1] sm:$0xf]
      %v182 = vld [vmem:[%s2] sm:$0x1]
      %v184 = vperm.slane %v182, 0
      %vm186 = vcmask 64512
      %v188 = vsel %vm186, %v179, 0
      %v191 = vsel %vm186, %v180, 0
      %vm193 = vcmask 1043456
      %v195 = vsel %vm193, %v181, 0
      %197 = vmatpush.bf16.msra.mxu0 0
      %198 = vmatpush.bf16.msra.mxu0 0
      %199 = vmatpush.bf16.msra.mxu0 0
      %200 = vmatpush.bf16.msra.mxu0 0
      %201 = vmatpush.bf16.msra.mxu0 0
      %202 = vmatpush.bf16.msra.mxu0 0
      %203 = vmatpush.bf16.msra.mxu0 0
      %204 = vmatpush.bf16.msra.mxu0 %v195
      %205 = vmatmul.bf16.gmra.mxu0 %v188
      %v206 = vpop.f32.mrf.mxu0
      %v207 = vadd.f32 %v184, %v206
      %v208 = vpop.f32.mrf.mxu0
      %v209 = vadd.f32 %v184, %v208
      %210 = vmatmul.bf16.gmra.mxu0 %v191
      %v211 = vpop.f32.mrf.mxu0
      %v212 = vadd.f32 %v184, %v211
      %v213 = vpop.f32.mrf.mxu0
      %v214 = vadd.f32 %v184, %v213
      %215 = vdwg.mxu0
      %vm216 = vcmp.ge.f32.partialorder %v207, 0.0
      %vm217 = vcmp.ge.f32.partialorder %v209, 0.0
      %vm218 = vcmp.ge.f32.partialorder %v212, 0.0
      %vm219 = vcmp.ge.f32.partialorder %v214, 0.0
      %v220 = vmul.f32 %v207, 0.2
      %v221 = vmul.f32 %v209, 0.2
      %v222 = vmul.f32 %v212, 0.2
      %v223 = vmul.f32 %v214, 0.2
      %v224 = vsel %vm216, %v207, %v220
      %v225 = vsel %vm217, %v209, %v221
      %v226 = vsel %vm218, %v212, %v222
      %v227 = vsel %vm219, %v214, %v223
      %vm228 = vcmask 130048
      %229 = vst.msk [vmem:[%s172] sm:$0xff] %vm228, %v224
      %230 = vst.msk [vmem:[%s172 + $0x8] sm:$0xff] %vm228, %v225
      %231 = vst.msk [vmem:[%s172 + $0x10] sm:$0xff] %vm228, %v226
      %232 = vst.msk [vmem:[%s172 + $0x18] sm:$0xff] %vm228, %v227
      %s233 = smul.u32 4, %s14
      %p234 = scmp.lt.s32.totalorder %s233, 7
      %s235 = scalar_select %p234, %s233, 7
      %s236 = smul.addr %s235, 8
      %s237 = scalar_lea.vmem %s3, %s236
      // Predicated region
      $region33: #{_lambda_.2} parent=31 // pred_check
        %p238 = pneg %p100
      $region34: #{_lambda_.2} parent=31 // pred_check_branch
        %240 = sbr.rel (%p238) target = $region36
      $region35: #{_lambda_.2} parent=31 // pred_region
        %s241 = smul.u32 4, %s14
      $region36: #{_lambda_.2} parent=31 // pred_fallthru
        _
    $region32: #{_lambda_.2} parent=5 // pred_fallthru
      _
    %p242 = scmp.le.s32.totalorder 2, %s9
    // Predicated region
    $region37: #{_lambda_.2} parent=5 // pred_check
      %p243 = pneg %p242
    $region38: #{_lambda_.2} parent=5 // pred_check_branch
      %245 = sbr.rel (%p243) target = $region40
    $region39: #{_lambda_.2} parent=5 // pred_region
      %s246 = ssub.s32 %s9, 2
      // Predicated region
      $region41: #{_lambda_.2} parent=39 // pred_check
        %p247 = pneg %p106
      $region42: #{_lambda_.2} parent=39 // pred_check_branch
        %249 = sbr.rel (%p247) target = $region44
      $region43: #{_lambda_.2} parent=39 // pred_region
        %s250 = smul.u32 4, %s15
        %p251 = scmp.lt.s32.totalorder %s250, 7
        %s252 = scalar_select %p251, %s250, 7
        %s253 = smul.addr %s252, 8
        %s254 = scalar_lea.vmem %s3, %s253
      $region44: #{_lambda_.2} parent=39 // pred_fallthru
        _
    $region40: #{_lambda_.2} parent=5 // pred_fallthru
      _
  $region6: #{_lambda_.2} parent=0 // loop_footer
    %s13 = sadd.s32 1, %s9
  $region7: #{_lambda_.2} parent=0 // loop_footer_branch
    %8 = sbr.rel target = $region3
  $region8: #{_lambda_.2} parent=0 // loop_exit
    _

// kernel: _lambda_.3
$region0: #{_lambda_.3}
  #allocation0 [shape = 'u32[]', space=smem, size = 0x4, offset = 0x4, fixed_abs, tag = 'smem constant byte address 0x4 - core index']
  #allocation1 [shape = 'u32[72,128]{1,0:T(1,128)}', space=vmem, size = 0x9000, scoped, tag = 'internal scratch']
  #allocation2 [shape = 'f32[1]{0:T(128)S(6)}', space=smem, size = 0x200, scoped, tag = 'scoped memory for _lambda_.3']
  %s0 = inlined_call_operand.vmem [shape: bf16[32,8], index: 0, kind: input, shape index: {}]
  %s1 = inlined_call_operand.vmem [shape: bf16[256,12], index: 1, kind: input, shape index: {}]
  %s2 = inlined_call_operand.vmem [shape: f32[32,8], index: 2, kind: input, shape index: {}]
  %s3 = inlined_call_operand.vmem [shape: bf16[8,1024], index: 3, kind: input, shape index: {}]
  %s4 = inlined_call_operand.vmem [shape: bf16[12,1024], index: 4, kind: input, shape index: {}]
  %s5 = inlined_call_operand.vmem [shape: f32[1,1024], index: 5, kind: input, shape index: {}]
  %s6 = inlined_call_operand.vmem [shape: f32[1,1024], index: 6, kind: input, shape index: {}]
  %s7 = inlined_call_operand.vmem [shape: bf16[12,16], index: 7, kind: input, shape index: {}]
  %s8 = inlined_call_operand.vmem [shape: f32[1,16], index: 8, kind: input, shape index: {}]
  %s9 = inlined_call_operand.<no memory space> [shape: f32[1], index: 9, kind: input, shape index: {}]
  %s10 = inlined_call_operand.vmem [shape: f32[32,16], index: 10, kind: output, shape index: {}]
  %s11 = sld [smem:[#allocation0]]
  $region73: #{_lambda_.3} parent=0
    _
  %s13 = ssub.s32 1, %s11
  %s14 = scalar_select 0, %s13, %s11
  %15 = sst [smem:[#allocation2]] %s9
  loop: start=0, step=1, limit=4
  $region2: #{_lambda_.3} parent=0 // loop_pre_header
    _
  $region3: #{_lambda_.3} parent=0 // loop_header
    %s17 = sphi 0, %s21
    %p18 = scmp.ge.s32.totalorder %s17, 4
    %s27 = sphi 0, %s29
    %s30 = sphi 0, %s27
    %s31 = sphi 0, %s30
    %s47 = sphi 0, %s31
    %s53 = sphi 0, %s55
    %s56 = sphi 0, %s53
    %s57 = sphi 0, %s56
    %s73 = sphi 0, %s57
    %s79 = sphi 0, %s81
    %s82 = sphi 0, %s79
    %s83 = sphi 0, %s82
    %s99 = sphi 0, %s83
    %s103 = sphi 0, %s103
    %s105 = sphi 0, %s103
    %s106 = sphi 0, %s105
    %s120 = sphi 0, %s106
    %s124 = sphi 0, %s124
    %s126 = sphi 0, %s124
    %s127 = sphi 0, %s126
    %s141 = sphi 0, %s127
    %s145 = sphi 0, %s145
    %s147 = sphi 0, %s145
    %s148 = sphi 0, %s147
    %s162 = sphi 0, %s148
    %s166 = sphi 0, %s166
    %s168 = sphi 0, %s166
    %s169 = sphi 0, %s168
    %s183 = sphi 0, %s169
    %s187 = sphi 0, %s187
    %s189 = sphi 0, %s187
    %s190 = sphi 0, %s189
    %s204 = sphi 0, %s190
    %s208 = sphi 0, %s208
    %s210 = sphi 0, %s208
    %s211 = sphi 0, %s210
    %s225 = sphi 0, %s211
    %s229 = sphi 0, %s229
    %s231 = sphi 0, %s229
    %s232 = sphi 0, %s231
    %s246 = sphi 0, %s232
    %s252 = sphi 0, %s254
    %s255 = sphi 0, %s252
    %s256 = sphi 0, %s255
    %s272 = sphi 0, %s256
  $region4: #{_lambda_.3} parent=0 // loop_header_branch
    %20 = sbr.rel (%p18) target = $region8
  $region5: #{_lambda_.3} parent=0 // loop_body
    %s22 = ssub.s32 %s17, 1
    %s23 = ssub.s32 %s17, 2
    %s24 = sadd.s32 %s17, 1
    %s25 = ssub.s32 %s17, %s24
    %p26 = scmp.eq.s32.totalorder %s25, 0
    %s28 = sadd.s32 %s27, 1
    %s29 = scalar_select %p26, %s27, %s28
    %p32 = pneg %p26
    %p33 = scmp.eq.s32.totalorder %s17, 1
    %p34 = por %p32, %p33
    %p35 = scmp.ne.s32.totalorder %s27, %s30
    %p36 = scmp.eq.s32.totalorder %s17, 0
    %p37 = por %p35, %p36
    %p38 = scmp.ne.s32.totalorder %s27, %s30
    %p39 = scmp.eq.s32.totalorder %s22, 1
    %p40 = por %p38, %p39
    %p41 = scmp.ne.s32.totalorder %s30, %s31
    %p42 = scmp.eq.s32.totalorder %s22, 0
    %p43 = por %p41, %p42
    %p44 = scmp.ne.s32.totalorder %s30, %s31
    %p45 = scmp.eq.s32.totalorder %s23, 1
    %p46 = por %p44, %p45
    %p48 = scmp.ne.s32.totalorder %s31, %s47
    %p49 = scmp.eq.s32.totalorder %s23, 0
    %p50 = por %p48, %p49
    %s51 = ssub.s32 %s17, %s24
    %p52 = scmp.eq.s32.totalorder %s51, 0
    %s54 = sadd.s32 %s53, 1
    %s55 = scalar_select %p52, %s53, %s54
    %p58 = pneg %p52
    %p59 = scmp.eq.s32.totalorder %s17, 1
    %p60 = por %p58, %p59
    %p61 = scmp.ne.s32.totalorder %s53, %s56
    %p62 = scmp.eq.s32.totalorder %s17, 0
    %p63 = por %p61, %p62
    %p64 = scmp.ne.s32.totalorder %s53, %s56
    %p65 = scmp.eq.s32.totalorder %s22, 1
    %p66 = por %p64, %p65
    %p67 = scmp.ne.s32.totalorder %s56, %s57
    %p68 = scmp.eq.s32.totalorder %s22, 0
    %p69 = por %p67, %p68
    %p70 = scmp.ne.s32.totalorder %s56, %s57
    %p71 = scmp.eq.s32.totalorder %s23, 1
    %p72 = por %p70, %p71
    %p74 = scmp.ne.s32.totalorder %s57, %s73
    %p75 = scmp.eq.s32.totalorder %s23, 0
    %p76 = por %p74, %p75
    %s77 = ssub.s32 %s17, %s24
    %p78 = scmp.eq.s32.totalorder %s77, 0
    %s80 = sadd.s32 %s79, 1
    %s81 = scalar_select %p78, %s79, %s80
    %p84 = pneg %p78
    %p85 = scmp.eq.s32.totalorder %s17, 1
    %p86 = por %p84, %p85
    %p87 = scmp.ne.s32.totalorder %s79, %s82
    %p88 = scmp.eq.s32.totalorder %s17, 0
    %p89 = por %p87, %p88
    %p90 = scmp.ne.s32.totalorder %s79, %s82
    %p91 = scmp.eq.s32.totalorder %s22, 1
    %p92 = por %p90, %p91
    %p93 = scmp.ne.s32.totalorder %s82, %s83
    %p94 = scmp.eq.s32.totalorder %s22, 0
    %p95 = por %p93, %p94
    %p96 = scmp.ne.s32.totalorder %s82, %s83
    %p97 = scmp.eq.s32.totalorder %s23, 1
    %p98 = por %p96, %p97
    %p100 = scmp.ne.s32.totalorder %s83, %s99
    %p101 = scmp.eq.s32.totalorder %s23, 0
    %p102 = por %p100, %p101
    %s104 = sadd.s32 %s103, 1
    %p107 = scmp.eq.s32.totalorder %s17, 1
    %p108 = scmp.ne.s32.totalorder %s103, %s105
    %p109 = scmp.eq.s32.totalorder %s17, 0
    %p110 = por %p108, %p109
    %p111 = scmp.ne.s32.totalorder %s103, %s105
    %p112 = scmp.eq.s32.totalorder %s22, 1
    %p113 = por %p111, %p112
    %p114 = scmp.ne.s32.totalorder %s105, %s106
    %p115 = scmp.eq.s32.totalorder %s22, 0
    %p116 = por %p114, %p115
    %p117 = scmp.ne.s32.totalorder %s105, %s106
    %p118 = scmp.eq.s32.totalorder %s23, 1
    %p119 = por %p117, %p118
    %p121 = scmp.ne.s32.totalorder %s106, %s120
    %p122 = scmp.eq.s32.totalorder %s23, 0
    %p123 = por %p121, %p122
    %s125 = sadd.s32 %s124, 1
    %p128 = scmp.eq.s32.totalorder %s17, 1
    %p129 = scmp.ne.s32.totalorder %s124, %s126
    %p130 = scmp.eq.s32.totalorder %s17, 0
    %p131 = por %p129, %p130
    %p132 = scmp.ne.s32.totalorder %s124, %s126
    %p133 = scmp.eq.s32.totalorder %s22, 1
    %p134 = por %p132, %p133
    %p135 = scmp.ne.s32.totalorder %s126, %s127
    %p136 = scmp.eq.s32.totalorder %s22, 0
    %p137 = por %p135, %p136
    %p138 = scmp.ne.s32.totalorder %s126, %s127
    %p139 = scmp.eq.s32.totalorder %s23, 1
    %p140 = por %p138, %p139
    %p142 = scmp.ne.s32.totalorder %s127, %s141
    %p143 = scmp.eq.s32.totalorder %s23, 0
    %p144 = por %p142, %p143
    %s146 = sadd.s32 %s145, 1
    %p149 = scmp.eq.s32.totalorder %s17, 1
    %p150 = scmp.ne.s32.totalorder %s145, %s147
    %p151 = scmp.eq.s32.totalorder %s17, 0
    %p152 = por %p150, %p151
    %p153 = scmp.ne.s32.totalorder %s145, %s147
    %p154 = scmp.eq.s32.totalorder %s22, 1
    %p155 = por %p153, %p154
    %p156 = scmp.ne.s32.totalorder %s147, %s148
    %p157 = scmp.eq.s32.totalorder %s22, 0
    %p158 = por %p156, %p157
    %p159 = scmp.ne.s32.totalorder %s147, %s148
    %p160 = scmp.eq.s32.totalorder %s23, 1
    %p161 = por %p159, %p160
    %p163 = scmp.ne.s32.totalorder %s148, %s162
    %p164 = scmp.eq.s32.totalorder %s23, 0
    %p165 = por %p163, %p164
    %s167 = sadd.s32 %s166, 1
    %p170 = scmp.eq.s32.totalorder %s17, 1
    %p171 = scmp.ne.s32.totalorder %s166, %s168
    %p172 = scmp.eq.s32.totalorder %s17, 0
    %p173 = por %p171, %p172
    %p174 = scmp.ne.s32.totalorder %s166, %s168
    %p175 = scmp.eq.s32.totalorder %s22, 1
    %p176 = por %p174, %p175
    %p177 = scmp.ne.s32.totalorder %s168, %s169
    %p178 = scmp.eq.s32.totalorder %s22, 0
    %p179 = por %p177, %p178
    %p180 = scmp.ne.s32.totalorder %s168, %s169
    %p181 = scmp.eq.s32.totalorder %s23, 1
    %p182 = por %p180, %p181
    %p184 = scmp.ne.s32.totalorder %s169, %s183
    %p185 = scmp.eq.s32.totalorder %s23, 0
    %p186 = por %p184, %p185
    %s188 = sadd.s32 %s187, 1
    %p191 = scmp.eq.s32.totalorder %s17, 1
    %p192 = scmp.ne.s32.totalorder %s187, %s189
    %p193 = scmp.eq.s32.totalorder %s17, 0
    %p194 = por %p192, %p193
    %p195 = scmp.ne.s32.totalorder %s187, %s189
    %p196 = scmp.eq.s32.totalorder %s22, 1
    %p197 = por %p195, %p196
    %p198 = scmp.ne.s32.totalorder %s189, %s190
    %p199 = scmp.eq.s32.totalorder %s22, 0
    %p200 = por %p198, %p199
    %p201 = scmp.ne.s32.totalorder %s189, %s190
    %p202 = scmp.eq.s32.totalorder %s23, 1
    %p203 = por %p201, %p202
    %p205 = scmp.ne.s32.totalorder %s190, %s204
    %p206 = scmp.eq.s32.totalorder %s23, 0
    %p207 = por %p205, %p206
    %s209 = sadd.s32 %s208, 1
    %p212 = scmp.eq.s32.totalorder %s17, 1
    %p213 = scmp.ne.s32.totalorder %s208, %s210
    %p214 = scmp.eq.s32.totalorder %s17, 0
    %p215 = por %p213, %p214
    %p216 = scmp.ne.s32.totalorder %s208, %s210
    %p217 = scmp.eq.s32.totalorder %s22, 1
    %p218 = por %p216, %p217
    %p219 = scmp.ne.s32.totalorder %s210, %s211
    %p220 = scmp.eq.s32.totalorder %s22, 0
    %p221 = por %p219, %p220
    %p222 = scmp.ne.s32.totalorder %s210, %s211
    %p223 = scmp.eq.s32.totalorder %s23, 1
    %p224 = por %p222, %p223
    %p226 = scmp.ne.s32.totalorder %s211, %s225
    %p227 = scmp.eq.s32.totalorder %s23, 0
    %p228 = por %p226, %p227
    %s230 = sadd.s32 %s229, 1
    %p233 = scmp.eq.s32.totalorder %s17, 1
    %p234 = scmp.ne.s32.totalorder %s229, %s231
    %p235 = scmp.eq.s32.totalorder %s17, 0
    %p236 = por %p234, %p235
    %p237 = scmp.ne.s32.totalorder %s229, %s231
    %p238 = scmp.eq.s32.totalorder %s22, 1
    %p239 = por %p237, %p238
    %p240 = scmp.ne.s32.totalorder %s231, %s232
    %p241 = scmp.eq.s32.totalorder %s22, 0
    %p242 = por %p240, %p241
    %p243 = scmp.ne.s32.totalorder %s231, %s232
    %p244 = scmp.eq.s32.totalorder %s23, 1
    %p245 = por %p243, %p244
    %p247 = scmp.ne.s32.totalorder %s232, %s246
    %p248 = scmp.eq.s32.totalorder %s23, 0
    %p249 = por %p247, %p248
    %s250 = ssub.s32 %s17, %s24
    %p251 = scmp.eq.s32.totalorder %s250, 0
    %s253 = sadd.s32 %s252, 1
    %s254 = scalar_select %p251, %s252, %s253
    %p257 = pneg %p251
    %p258 = scmp.eq.s32.totalorder %s17, 1
    %p259 = por %p257, %p258
    %p260 = scmp.ne.s32.totalorder %s252, %s255
    %p261 = scmp.eq.s32.totalorder %s17, 0
    %p262 = por %p260, %p261
    %p263 = scmp.ne.s32.totalorder %s252, %s255
    %p264 = scmp.eq.s32.totalorder %s22, 1
    %p265 = por %p263, %p264
    %p266 = scmp.ne.s32.totalorder %s255, %s256
    %p267 = scmp.eq.s32.totalorder %s22, 0
    %p268 = por %p266, %p267
    %p269 = scmp.ne.s32.totalorder %s255, %s256
    %p270 = scmp.eq.s32.totalorder %s23, 1
    %p271 = por %p269, %p270
    %p273 = scmp.ne.s32.totalorder %s256, %s272
    %p274 = scmp.eq.s32.totalorder %s23, 0
    %p275 = por %p273, %p274
    %p276 = scmp.le.s32.totalorder 1, %s17
    %p277 = scmp.lt.s32.totalorder %s17, 3
    %p278 = pnand %p276, %p277
    %p279 = pneg %p278
    // Predicated region
    $region9: #{_lambda_.3} parent=5 // pred_check
      _
    $region10: #{_lambda_.3} parent=5 // pred_check_branch
      %281 = sbr.rel (%p278) target = $region12
    $region11: #{_lambda_.3} parent=5 // pred_region
      %s282 = ssub.s32 %s17, 1
      // Predicated region
      $region13: #{_lambda_.3} parent=11 // pred_check
        %p283 = pneg %p116
      $region14: #{_lambda_.3} parent=11 // pred_check_branch
        %285 = sbr.rel (%p283) target = $region16
      $region15: #{_lambda_.3} parent=11 // pred_region
        _
      $region16: #{_lambda_.3} parent=11 // pred_fallthru
        _
      // Predicated region
      $region17: #{_lambda_.3} parent=11 // pred_check
        %p286 = pneg %p137
      $region18: #{_lambda_.3} parent=11 // pred_check_branch
        %288 = sbr.rel (%p286) target = $region20
      $region19: #{_lambda_.3} parent=11 // pred_region
        _
      $region20: #{_lambda_.3} parent=11 // pred_fallthru
        _
      // Predicated region
      $region21: #{_lambda_.3} parent=11 // pred_check
        %p289 = pneg %p158
      $region22: #{_lambda_.3} parent=11 // pred_check_branch
        %291 = sbr.rel (%p289) target = $region24
      $region23: #{_lambda_.3} parent=11 // pred_region
        _
      $region24: #{_lambda_.3} parent=11 // pred_fallthru
        _
      // Predicated region
      $region25: #{_lambda_.3} parent=11 // pred_check
        %p292 = pneg %p179
      $region26: #{_lambda_.3} parent=11 // pred_check_branch
        %294 = sbr.rel (%p292) target = $region28
      $region27: #{_lambda_.3} parent=11 // pred_region
        _
      $region28: #{_lambda_.3} parent=11 // pred_fallthru
        _
      // Predicated region
      $region29: #{_lambda_.3} parent=11 // pred_check
        %p295 = pneg %p200
      $region30: #{_lambda_.3} parent=11 // pred_check_branch
        %297 = sbr.rel (%p295) target = $region32
      $region31: #{_lambda_.3} parent=11 // pred_region
        _
      $region32: #{_lambda_.3} parent=11 // pred_fallthru
        _
      // Predicated region
      $region33: #{_lambda_.3} parent=11 // pred_check
        %p298 = pneg %p221
      $region34: #{_lambda_.3} parent=11 // pred_check_branch
        %300 = sbr.rel (%p298) target = $region36
      $region35: #{_lambda_.3} parent=11 // pred_region
        _
      $region36: #{_lambda_.3} parent=11 // pred_fallthru
        _
      // Predicated region
      $region37: #{_lambda_.3} parent=11 // pred_check
        %p301 = pneg %p242
      $region38: #{_lambda_.3} parent=11 // pred_check_branch
        %303 = sbr.rel (%p301) target = $region40
      $region39: #{_lambda_.3} parent=11 // pred_region
        _
      $region40: #{_lambda_.3} parent=11 // pred_fallthru
        _
    $region12: #{_lambda_.3} parent=5 // pred_fallthru
      _
    %p304 = scmp.lt.s32.totalorder %s17, 2
    // Predicated region
    $region41: #{_lambda_.3} parent=5 // pred_check
      %p305 = pneg %p304
    $region42: #{_lambda_.3} parent=5 // pred_check_branch
      %307 = sbr.rel (%p305) target = $region44
    $region43: #{_lambda_.3} parent=5 // pred_region
      // Predicated region
      $region45: #{_lambda_.3} parent=43 // pred_check
        %p308 = pneg %p37
      $region46: #{_lambda_.3} parent=43 // pred_check_branch
        %310 = sbr.rel (%p308) target = $region48
      $region47: #{_lambda_.3} parent=43 // pred_region
        %s311 = smul.u32 2, %s17
        %p312 = scmp.lt.s32.totalorder %s311, 3
        %s313 = scalar_select %p312, %s311, 3
        %s314 = smul.addr %s313, 4
        %s315 = scalar_lea.vmem %s0, %s314
        %s316 = smul.u32 2, %s17
      $region48: #{_lambda_.3} parent=43 // pred_fallthru
        _
      // Predicated region
      $region49: #{_lambda_.3} parent=43 // pred_check
        %p317 = pneg %p63
      $region50: #{_lambda_.3} parent=43 // pred_check_branch
        %319 = sbr.rel (%p317) target = $region52
      $region51: #{_lambda_.3} parent=43 // pred_region
        %s320 = smul.u32 16, %s17
        %p321 = scmp.lt.s32.totalorder %s320, 31
        %s322 = scalar_select %p321, %s320, 31
        %s323 = smul.addr %s322, 4
        %s324 = scalar_lea.vmem %s1, %s323
        %s325 = smul.u32 16, %s17
      $region52: #{_lambda_.3} parent=43 // pred_fallthru
        _
      // Predicated region
      $region53: #{_lambda_.3} parent=43 // pred_check
        %p326 = pneg %p89
      $region54: #{_lambda_.3} parent=43 // pred_check_branch
        %328 = sbr.rel (%p326) target = $region56
      $region55: #{_lambda_.3} parent=43 // pred_region
        %s329 = smul.u32 2, %s17
        %p330 = scmp.lt.s32.totalorder %s329, 3
        %s331 = scalar_select %p330, %s329, 3
        %s332 = smul.addr %s331, 8
        %s333 = scalar_lea.vmem %s2, %s332
        %s334 = smul.u32 2, %s17
      $region56: #{_lambda_.3} parent=43 // pred_fallthru
        _
    $region44: #{_lambda_.3} parent=5 // pred_fallthru
      _
    %p335 = scmp.le.s32.totalorder 1, %s17
    %p336 = scmp.lt.s32.totalorder %s17, 3
    %p337 = pnand %p335, %p336
    %p338 = pneg %p337
    // Predicated region
    $region57: #{_lambda_.3} parent=5 // pred_check
      _
    $region58: #{_lambda_.3} parent=5 // pred_check_branch
      %340 = sbr.rel (%p337) target = $region60
    $region59: #{_lambda_.3} parent=5 // pred_region
      %s341 = ssub.s32 %s17, 1
      %s342 = smul.u32 2, %s22
      %p343 = scmp.lt.s32.totalorder %s342, 3
      %s344 = scalar_select %p343, %s342, 3
      %s345 = smul.addr %s344, 4
      %s346 = scalar_lea.vmem %s0, %s345
      %p347 = pneg %p43
      %p348 = pneg %p40
      %s349 = smul.u32 16, %s22
      %p350 = scmp.lt.s32.totalorder %s349, 31
      %s351 = scalar_select %p350, %s349, 31
      %s352 = smul.addr %s351, 4
      %s353 = scalar_lea.vmem %s1, %s352
      %p354 = pneg %p69
      %p355 = pneg %p66
      %s356 = smul.u32 2, %s22
      %p357 = scmp.lt.s32.totalorder %s356, 3
      %s358 = scalar_select %p357, %s356, 3
      %s359 = smul.addr %s358, 8
      %s360 = scalar_lea.vmem %s2, %s359
      %p361 = pneg %p95
      %p362 = pneg %p92
      %p363 = pneg %p116
      %p364 = pneg %p113
      %p365 = pneg %p137
      %p366 = pneg %p134
      %p367 = pneg %p158
      %p368 = pneg %p155
      %p369 = pneg %p179
      %p370 = pneg %p176
      %p371 = pneg %p200
      %p372 = pneg %p197
      %p373 = pneg %p221
      %p374 = pneg %p218
      %p375 = pneg %p242
      %p376 = pneg %p239
      %p377 = pneg %p268
      %p378 = pneg %p265
      %s379 = smul.u32 2, %s22
      %p380 = scmp.lt.s32.totalorder %s379, 3
      %s381 = scalar_select %p380, %s379, 3
      %s382 = smul.addr %s381, 8
      %s383 = scalar_lea.vmem %s10, %s382
      %s384 = smul.u32 2, %s22
      %p385 = scmp.lt.s32.totalorder %s384, 3
      %s386 = scalar_select %p385, %s384, 3
      %s387 = smul.addr %s386, 4
      %s388 = scalar_lea.vmem %s0, %s387
      %s389 = smul.u32 2, %s22
      %s390 = smul.u32 16, %s22
      %p391 = scmp.lt.s32.totalorder %s390, 31
      %s392 = scalar_select %p391, %s390, 31
      %s393 = smul.addr %s392, 4
      %s394 = scalar_lea.vmem %s1, %s393
      %s395 = smul.u32 16, %s22
      %s396 = smul.u32 2, %s22
      %p397 = scmp.lt.s32.totalorder %s396, 3
      %s398 = scalar_select %p397, %s396, 3
      %s399 = smul.addr %s398, 8
      %s400 = scalar_lea.vmem %s2, %s399
      %s401 = smul.u32 2, %s22
      %s402 = smul.u32 2, %s22
      %p403 = scmp.lt.s32.totalorder %s402, 3
      %s404 = scalar_select %p403, %s402, 3
      %s405 = smul.addr %s404, 8
      %s406 = scalar_lea.vmem %s10, %s405
      %s407 = smul.u32 2, %s22
      %v409 = vld [vmem:[%s388] sm:$0xf]
      %v410 = vld [vmem:[%s388 + $0x4] sm:$0xf]
      %v411 = vld [vmem:[%s394] sm:$0xf]
      %v412 = vld [vmem:[%s394 + $0x4] sm:$0xf]
      %v413 = vld [vmem:[%s394 + $0x8] sm:$0xf]
      %v414 = vld [vmem:[%s394 + $0xc] sm:$0xf]
      %v415 = vld [vmem:[%s394 + $0x10] sm:$0xf]
      %v416 = vld [vmem:[%s394 + $0x14] sm:$0xf]
      %v417 = vld [vmem:[%s394 + $0x18] sm:$0xf]
      %v418 = vld [vmem:[%s394 + $0x1c] sm:$0xf]
      %v419 = vld [vmem:[%s394 + $0x20] sm:$0xf]
      %v420 = vld [vmem:[%s394 + $0x24] sm:$0xf]
      %v421 = vld [vmem:[%s394 + $0x28] sm:$0xf]
      %v422 = vld [vmem:[%s394 + $0x2c] sm:$0xf]
      %v423 = vld [vmem:[%s394 + $0x30] sm:$0xf]
      %v424 = vld [vmem:[%s394 + $0x34] sm:$0xf]
      %v425 = vld [vmem:[%s394 + $0x38] sm:$0xf]
      %v426 = vld [vmem:[%s394 + $0x3c] sm:$0xf]
      %v427 = vld [vmem:[%s3] sm:$0xff]
      %v430 = vunpack.c.l.b16 %v409
      %v431 = vunpack.c.l.b16 %v410
      %v432 = vpack.c.b16 %v431, %v430
      %v434 = vunpack.c.l.b16 %v427
      %v435 = vunpack.c.h.b16 %v427
      %v436 = vpack.c.b16 %v434, %v434
      %v437 = vpack.c.b16 %v435, %v435
      %vm438 = vcmask 64512
      %v440 = vsel %vm438, %v432, 0
      %vm442 = vcmask 1043456
      %v444 = vsel %vm442, %v436, 0
      %v447 = vsel %vm442, %v437, 0
      %449 = vmatpush.bf16.msra.mxu0 0
      %450 = vmatpush.bf16.msra.mxu0 0
      %451 = vmatpush.bf16.msra.mxu0 0
      %452 = vmatpush.bf16.msra.mxu0 0
      %453 = vmatpush.bf16.msra.mxu0 0
      %454 = vmatpush.bf16.msra.mxu0 0
      %455 = vmatpush.bf16.msra.mxu0 0
      %456 = vmatpush.bf16.msra.mxu0 %v444
      %457 = vmatmul.bf16.gmra.mxu0 %v440
      %v458 = vpop.f32.mrf.mxu0
      %v459 = vadd.f32 0.0, %v458
      %v460 = vpop.f32.mrf.mxu0
      %v461 = vadd.f32 0.0, %v460
      %462 = vdwg.mxu0
      %463 = vmatpush.bf16.msra.mxu0 0
      %464 = vmatpush.bf16.msra.mxu0 0
      %465 = vmatpush.bf16.msra.mxu0 0
      %466 = vmatpush.bf16.msra.mxu0 0
      %467 = vmatpush.bf16.msra.mxu0 0
      %468 = vmatpush.bf16.msra.mxu0 0
      %469 = vmatpush.bf16.msra.mxu0 0
      %470 = vmatpush.bf16.msra.mxu0 %v447
      %471 = vmatmul.bf16.gmra.mxu0 %v440
      %v472 = vpop.f32.mrf.mxu0
      %v473 = vadd.f32 0.0, %v472
      %v474 = vpop.f32.mrf.mxu0
      %v475 = vadd.f32 0.0, %v474
      %476 = vdwg.mxu0
      %v477 = vld [vmem:[%s4] sm:$0xff]
      %v478 = vld [vmem:[%s4 + $0x20] sm:$0x33]
      %v495 = vunpack.c.l.b16 %v411
      %v496 = vunpack.c.l.b16 %v412
      %v497 = vunpack.c.l.b16 %v413
      %v498 = vunpack.c.l.b16 %v414
      %v499 = vunpack.c.l.b16 %v415
      %v500 = vunpack.c.l.b16 %v416
      %v501 = vunpack.c.l.b16 %v417
      %v502 = vunpack.c.l.b16 %v418
      %v503 = vunpack.c.l.b16 %v419
      %v504 = vunpack.c.l.b16 %v420
      %v505 = vunpack.c.l.b16 %v421
      %v506 = vunpack.c.l.b16 %v422
      %v507 = vunpack.c.l.b16 %v423
      %v508 = vunpack.c.l.b16 %v424
      %v509 = vunpack.c.l.b16 %v425
      %v510 = vunpack.c.l.b16 %v426
      %v511 = vpack.c.b16 %v496, %v495
      %v512 = vpack.c.b16 %v498, %v497
      %v513 = vpack.c.b16 %v500, %v499
      %v514 = vpack.c.b16 %v502, %v501
      %v515 = vpack.c.b16 %v504, %v503
      %v516 = vpack.c.b16 %v506, %v505
      %v517 = vpack.c.b16 %v508, %v507
      %v518 = vpack.c.b16 %v510, %v509
      %v521 = vunpack.c.l.b16 %v477
      %v522 = vunpack.c.h.b16 %v477
      %v523 = vunpack.c.l.b16 %v478
      %v524 = vunpack.c.h.b16 %v478
      %v525 = vpack.c.b16 %v523, %v521
      %v526 = vpack.c.b16 %v524, %v522
      %vm527 = vcmask 97280
      %v529 = vsel %vm527, %v511, 0
      %v532 = vsel %vm527, %v512, 0
      %v535 = vsel %vm527, %v513, 0
      %v538 = vsel %vm527, %v514, 0
      %v541 = vsel %vm527, %v515, 0
      %v544 = vsel %vm527, %v516, 0
      %v547 = vsel %vm527, %v517, 0
      %v550 = vsel %vm527, %v518, 0
      %vm552 = vcmask 1045504
      %v554 = vsel %vm552, %v525, 0
      %v557 = vsel %vm552, %v526, 0
      %559 = vmatpush.bf16.msra.mxu0 0
      %560 = vmatpush.bf16.msra.mxu0 0
      %561 = vmatpush.bf16.msra.mxu0 0
      %562 = vmatpush.bf16.msra.mxu0 0
      %563 = vmatpush.bf16.msra.mxu0 0
      %564 = vmatpush.bf16.msra.mxu0 0
      %565 = vmatpush.bf16.msra.mxu0 0
      %566 = vmatpush.bf16.msra.mxu0 %v554
      %567 = vmatmul.bf16.gmra.mxu0 %v529
      %v568 = vpop.f32.mrf.mxu0
      %v569 = vadd.f32 0.0, %v568
      %v570 = vpop.f32.mrf.mxu0
      %v571 = vadd.f32 0.0, %v570
      %572 = vmatmul.bf16.gmra.mxu0 %v532
      %v573 = vpop.f32.mrf.mxu0
      %v574 = vadd.f32 0.0, %v573
      %v575 = vpop.f32.mrf.mxu0
      %v576 = vadd.f32 0.0, %v575
      %577 = vmatmul.bf16.gmra.mxu0 %v535
      %v578 = vpop.f32.mrf.mxu0
      %v579 = vadd.f32 0.0, %v578
      %v580 = vpop.f32.mrf.mxu0
      %v581 = vadd.f32 0.0, %v580
      %582 = vmatmul.bf16.gmra.mxu0 %v538
      %v583 = vpop.f32.mrf.mxu0
      %v584 = vadd.f32 0.0, %v583
      %v585 = vpop.f32.mrf.mxu0
      %v586 = vadd.f32 0.0, %v585
      %587 = vmatmul.bf16.gmra.mxu0 %v541
      %v588 = vpop.f32.mrf.mxu0
      %v589 = vadd.f32 0.0, %v588
      %v590 = vpop.f32.mrf.mxu0
      %v591 = vadd.f32 0.0, %v590
      %592 = vmatmul.bf16.gmra.mxu0 %v544
      %v593 = vpop.f32.mrf.mxu0
      %v594 = vadd.f32 0.0, %v593
      %v595 = vpop.f32.mrf.mxu0
      %v596 = vadd.f32 0.0, %v595
      %597 = vmatmul.bf16.gmra.mxu0 %v547
      %v598 = vpop.f32.mrf.mxu0
      %v599 = vadd.f32 0.0, %v598
      %v600 = vpop.f32.mrf.mxu0
      %v601 = vadd.f32 0.0, %v600
      %602 = vmatmul.bf16.gmra.mxu0 %v550
      %v603 = vpop.f32.mrf.mxu0
      %v604 = vadd.f32 0.0, %v603
      %v605 = vpop.f32.mrf.mxu0
      %v606 = vadd.f32 0.0, %v605
      %607 = vdwg.mxu0
      %608 = vmatpush.bf16.msra.mxu0 0
      %609 = vmatpush.bf16.msra.mxu0 0
      %610 = vmatpush.bf16.msra.mxu0 0
      %611 = vmatpush.bf16.msra.mxu0 0
      %612 = vmatpush.bf16.msra.mxu0 0
      %613 = vmatpush.bf16.msra.mxu0 0
      %614 = vmatpush.bf16.msra.mxu0 0
      %615 = vmatpush.bf16.msra.mxu0 %v557
      %616 = vmatmul.bf16.gmra.mxu0 %v529
      %v617 = vpop.f32.mrf.mxu0
      %v618 = vadd.f32 0.0, %v617
      %v619 = vpop.f32.mrf.mxu0
      %v620 = vadd.f32 0.0, %v619
      %621 = vmatmul.bf16.gmra.mxu0 %v532
      %v622 = vpop.f32.mrf.mxu0
      %v623 = vadd.f32 0.0, %v622
      %v624 = vpop.f32.mrf.mxu0
      %v625 = vadd.f32 0.0, %v624
      %626 = vmatmul.bf16.gmra.mxu0 %v535
      %v627 = vpop.f32.mrf.mxu0
      %v628 = vadd.f32 0.0, %v627
      %v629 = vpop.f32.mrf.mxu0
      %v630 = vadd.f32 0.0, %v629
      %631 = vmatmul.bf16.gmra.mxu0 %v538
      %v632 = vpop.f32.mrf.mxu0
      %v633 = vadd.f32 0.0, %v632
      %v634 = vpop.f32.mrf.mxu0
      %v635 = vadd.f32 0.0, %v634
      %636 = vmatmul.bf16.gmra.mxu0 %v541
      %v637 = vpop.f32.mrf.mxu0
      %v638 = vadd.f32 0.0, %v637
      %v639 = vpop.f32.mrf.mxu0
      %v640 = vadd.f32 0.0, %v639
      %641 = vmatmul.bf16.gmra.mxu0 %v544
      %v642 = vpop.f32.mrf.mxu0
      %v643 = vadd.f32 0.0, %v642
      %v644 = vpop.f32.mrf.mxu0
      %v645 = vadd.f32 0.0, %v644
      %646 = vmatmul.bf16.gmra.mxu0 %v547
      %v647 = vpop.f32.mrf.mxu0
      %v648 = vadd.f32 0.0, %v647
      %v649 = vpop.f32.mrf.mxu0
      %v650 = vadd.f32 0.0, %v649
      %651 = vmatmul.bf16.gmra.mxu0 %v550
      %v652 = vpop.f32.mrf.mxu0
      %v653 = vadd.f32 0.0, %v652
      %v654 = vpop.f32.mrf.mxu0
      %v655 = vadd.f32 0.0, %v654
      %656 = vdwg.mxu0
      %v661 = vrot.slane %v473, 7
      %v662 = vrot.slane %v475, 7
      %vm663 = vcmask 1040384
      %v664 = vsel %vm663, %v459, %v661
      %vm665 = vcmask 1041409
      %v666 = vsel %vm665, %v459, %v661
      %v667 = vrot.slane %v666, 1
      %vm668 = vcmask 1042434
      %v669 = vsel %vm668, %v459, %v661
      %v670 = vrot.slane %v669, 2
      %vm671 = vcmask 1043459
      %v672 = vsel %vm671, %v459, %v661
      %v673 = vrot.slane %v672, 3
      %vm674 = vcmask 1044484
      %v675 = vsel %vm674, %v459, %v661
      %v676 = vrot.slane %v675, 4
      %vm677 = vcmask 1045509
      %v678 = vsel %vm677, %v459, %v661
      %v679 = vrot.slane %v678, 5
      %vm680 = vcmask 1046534
      %v681 = vsel %vm680, %v459, %v661
      %v682 = vrot.slane %v681, 6
      %vm683 = vcmask 1046528
      %v684 = vsel %vm683, %v661, %v459
      %v685 = vrot.slane %v684, 7
      %v686 = vsel %vm663, %v461, %v662
      %v687 = vsel %vm665, %v461, %v662
      %v688 = vrot.slane %v687, 1
      %v689 = vsel %vm668, %v461, %v662
      %v690 = vrot.slane %v689, 2
      %v691 = vsel %vm671, %v461, %v662
      %v692 = vrot.slane %v691, 3
      %v693 = vsel %vm674, %v461, %v662
      %v694 = vrot.slane %v693, 4
      %v695 = vsel %vm677, %v461, %v662
      %v696 = vrot.slane %v695, 5
      %v697 = vsel %vm680, %v461, %v662
      %v698 = vrot.slane %v697, 6
      %v699 = vsel %vm683, %v662, %v461
      %v700 = vrot.slane %v699, 7
      %v701 = vperm.slane %v664, 0
      %v702 = vperm.slane %v664, 1
      %v703 = vperm.slane %v667, 0
      %v704 = vperm.slane %v667, 1
      %v705 = vperm.slane %v670, 0
      %v706 = vperm.slane %v670, 1
      %v707 = vperm.slane %v673, 0
      %v708 = vperm.slane %v673, 1
      %v709 = vperm.slane %v676, 0
      %v710 = vperm.slane %v676, 1
      %v711 = vperm.slane %v679, 0
      %v712 = vperm.slane %v679, 1
      %v713 = vperm.slane %v682, 0
      %v714 = vperm.slane %v682, 1
      %v715 = vperm.slane %v685, 0
      %v716 = vperm.slane %v685, 1
      %v717 = vperm.slane %v686, 0
      %v718 = vperm.slane %v686, 1
      %v719 = vperm.slane %v688, 0
      %v720 = vperm.slane %v688, 1
      %v721 = vperm.slane %v690, 0
      %v722 = vperm.slane %v690, 1
      %v723 = vperm.slane %v692, 0
      %v724 = vperm.slane %v692, 1
      %v725 = vperm.slane %v694, 0
      %v726 = vperm.slane %v694, 1
      %v727 = vperm.slane %v696, 0
      %v728 = vperm.slane %v696, 1
      %v729 = vperm.slane %v698, 0
      %v730 = vperm.slane %v698, 1
      %v731 = vperm.slane %v700, 0
      %v732 = vperm.slane %v700, 1
      %v765 = vadd.f32 %v569, %v701
      %v766 = vadd.f32 %v618, %v702
      %v767 = vadd.f32 %v571, %v703
      %v768 = vadd.f32 %v620, %v704
      %v769 = vadd.f32 %v574, %v705
      %v770 = vadd.f32 %v623, %v706
      %v771 = vadd.f32 %v576, %v707
      %v772 = vadd.f32 %v625, %v708
      %v773 = vadd.f32 %v579, %v709
      %v774 = vadd.f32 %v628, %v710
      %v775 = vadd.f32 %v581, %v711
      %v776 = vadd.f32 %v630, %v712
      %v777 = vadd.f32 %v584, %v713
      %v778 = vadd.f32 %v633, %v714
      %v779 = vadd.f32 %v586, %v715
      %v780 = vadd.f32 %v635, %v716
      %v781 = vadd.f32 %v589, %v717
      %v782 = vadd.f32 %v638, %v718
      %v783 = vadd.f32 %v591, %v719
      %v784 = vadd.f32 %v640, %v720
      %v785 = vadd.f32 %v594, %v721
      %v786 = vadd.f32 %v643, %v722
      %v787 = vadd.f32 %v596, %v723
      %v788 = vadd.f32 %v645, %v724
      %v789 = vadd.f32 %v599, %v725
      %v790 = vadd.f32 %v648, %v726
      %v791 = vadd.f32 %v601, %v727
      %v792 = vadd.f32 %v650, %v728
      %v793 = vadd.f32 %v604, %v729
      %v794 = vadd.f32 %v653, %v730
      %v795 = vadd.f32 %v606, %v731
      %v796 = vadd.f32 %v655, %v732
      %v797 = vld [vmem:[%s5] sm:$0x3]
      %v799 = vperm.slane %v797, 0
      %v800 = vperm.slane %v797, 1
      %v803 = vadd.f32 %v765, %v799
      %v804 = vadd.f32 %v766, %v800
      %v805 = vadd.f32 %v767, %v799
      %v806 = vadd.f32 %v768, %v800
      %v807 = vadd.f32 %v769, %v799
      %v808 = vadd.f32 %v770, %v800
      %v809 = vadd.f32 %v771, %v799
      %v810 = vadd.f32 %v772, %v800
      %v811 = vadd.f32 %v773, %v799
      %v812 = vadd.f32 %v774, %v800
      %v813 = vadd.f32 %v775, %v799
      %v814 = vadd.f32 %v776, %v800
      %v815 = vadd.f32 %v777, %v799
      %v816 = vadd.f32 %v778, %v800
      %v817 = vadd.f32 %v779, %v799
      %v818 = vadd.f32 %v780, %v800
      %v819 = vadd.f32 %v781, %v799
      %v820 = vadd.f32 %v782, %v800
      %v821 = vadd.f32 %v783, %v799
      %v822 = vadd.f32 %v784, %v800
      %v823 = vadd.f32 %v785, %v799
      %v824 = vadd.f32 %v786, %v800
      %v825 = vadd.f32 %v787, %v799
      %v826 = vadd.f32 %v788, %v800
      %v827 = vadd.f32 %v789, %v799
      %v828 = vadd.f32 %v790, %v800
      %v829 = vadd.f32 %v791, %v799
      %v830 = vadd.f32 %v792, %v800
      %v831 = vadd.f32 %v793, %v799
      %v832 = vadd.f32 %v794, %v800
      %v833 = vadd.f32 %v795, %v799
      %v834 = vadd.f32 %v796, %v800
      %vm835 = vcmp.ge.f32.partialorder %v803, 0.0
      %vm836 = vcmp.ge.f32.partialorder %v804, 0.0
      %vm837 = vcmp.ge.f32.partialorder %v805, 0.0
      %vm838 = vcmp.ge.f32.partialorder %v806, 0.0
      %vm839 = vcmp.ge.f32.partialorder %v807, 0.0
      %vm840 = vcmp.ge.f32.partialorder %v808, 0.0
      %vm841 = vcmp.ge.f32.partialorder %v809, 0.0
      %vm842 = vcmp.ge.f32.partialorder %v810, 0.0
      %vm843 = vcmp.ge.f32.partialorder %v811, 0.0
      %vm844 = vcmp.ge.f32.partialorder %v812, 0.0
      %vm845 = vcmp.ge.f32.partialorder %v813, 0.0
      %vm846 = vcmp.ge.f32.partialorder %v814, 0.0
      %vm847 = vcmp.ge.f32.partialorder %v815, 0.0
      %vm848 = vcmp.ge.f32.partialorder %v816, 0.0
      %vm849 = vcmp.ge.f32.partialorder %v817, 0.0
      %vm850 = vcmp.ge.f32.partialorder %v818, 0.0
      %vm851 = vcmp.ge.f32.partialorder %v819, 0.0
      %vm852 = vcmp.ge.f32.partialorder %v820, 0.0
      %vm853 = vcmp.ge.f32.partialorder %v821, 0.0
      %vm854 = vcmp.ge.f32.partialorder %v822, 0.0
      %vm855 = vcmp.ge.f32.partialorder %v823, 0.0
      %vm856 = vcmp.ge.f32.partialorder %v824, 0.0
      %vm857 = vcmp.ge.f32.partialorder %v825, 0.0
      %vm858 = vcmp.ge.f32.partialorder %v826, 0.0
      %vm859 = vcmp.ge.f32.partialorder %v827, 0.0
      %vm860 = vcmp.ge.f32.partialorder %v828, 0.0
      %vm861 = vcmp.ge.f32.partialorder %v829, 0.0
      %vm862 = vcmp.ge.f32.partialorder %v830, 0.0
      %vm863 = vcmp.ge.f32.partialorder %v831, 0.0
      %vm864 = vcmp.ge.f32.partialorder %v832, 0.0
      %vm865 = vcmp.ge.f32.partialorder %v833, 0.0
      %vm866 = vcmp.ge.f32.partialorder %v834, 0.0
      %v867 = vmul.f32 %v803, 0.2
      %v868 = vmul.f32 %v804, 0.2
      %v869 = vmul.f32 %v805, 0.2
      %v870 = vmul.f32 %v806, 0.2
      %v871 = vmul.f32 %v807, 0.2
      %v872 = vmul.f32 %v808, 0.2
      %v873 = vmul.f32 %v809, 0.2
      %v874 = vmul.f32 %v810, 0.2
      %v875 = vmul.f32 %v811, 0.2
      %v876 = vmul.f32 %v812, 0.2
      %v877 = vmul.f32 %v813, 0.2
      %v878 = vmul.f32 %v814, 0.2
      %v879 = vmul.f32 %v815, 0.2
      %v880 = vmul.f32 %v816, 0.2
      %v881 = vmul.f32 %v817, 0.2
      %v882 = vmul.f32 %v818, 0.2
      %v883 = vmul.f32 %v819, 0.2
      %v884 = vmul.f32 %v820, 0.2
      %v885 = vmul.f32 %v821, 0.2
      %v886 = vmul.f32 %v822, 0.2
      %v887 = vmul.f32 %v823, 0.2
      %v888 = vmul.f32 %v824, 0.2
      %v889 = vmul.f32 %v825, 0.2
      %v890 = vmul.f32 %v826, 0.2
      %v891 = vmul.f32 %v827, 0.2
      %v892 = vmul.f32 %v828, 0.2
      %v893 = vmul.f32 %v829, 0.2
      %v894 = vmul.f32 %v830, 0.2
      %v895 = vmul.f32 %v831, 0.2
      %v896 = vmul.f32 %v832, 0.2
      %v897 = vmul.f32 %v833, 0.2
      %v898 = vmul.f32 %v834, 0.2
      %v899 = vsel %vm835, %v803, %v867
      %v900 = vsel %vm836, %v804, %v868
      %v901 = vsel %vm837, %v805, %v869
      %v902 = vsel %vm838, %v806, %v870
      %v903 = vsel %vm839, %v807, %v871
      %v904 = vsel %vm840, %v808, %v872
      %v905 = vsel %vm841, %v809, %v873
      %v906 = vsel %vm842, %v810, %v874
      %v907 = vsel %vm843, %v811, %v875
      %v908 = vsel %vm844, %v812, %v876
      %v909 = vsel %vm845, %v813, %v877
      %v910 = vsel %vm846, %v814, %v878
      %v911 = vsel %vm847, %v815, %v879
      %v912 = vsel %vm848, %v816, %v880
      %v913 = vsel %vm849, %v817, %v881
      %v914 = vsel %vm850, %v818, %v882
      %v915 = vsel %vm851, %v819, %v883
      %v916 = vsel %vm852, %v820, %v884
      %v917 = vsel %vm853, %v821, %v885
      %v918 = vsel %vm854, %v822, %v886
      %v919 = vsel %vm855, %v823, %v887
      %v920 = vsel %vm856, %v824, %v888
      %v921 = vsel %vm857, %v825, %v889
      %v922 = vsel %vm858, %v826, %v890
      %v923 = vsel %vm859, %v827, %v891
      %v924 = vsel %vm860, %v828, %v892
      %v925 = vsel %vm861, %v829, %v893
      %v926 = vsel %vm862, %v830, %v894
      %v927 = vsel %vm863, %v831, %v895
      %v928 = vsel %vm864, %v832, %v896
      %v929 = vsel %vm865, %v833, %v897
      %v930 = vsel %vm866, %v834, %v898
      %v931 = vld [vmem:[%s6] sm:$0x3]
      %v933 = vperm.slane %v931, 0
      %v934 = vperm.slane %v931, 1
      %v937 = vmul.f32 %v899, %v933
      %v938 = vmul.f32 %v900, %v934
      %v939 = vmul.f32 %v901, %v933
      %v940 = vmul.f32 %v902, %v934
      %v941 = vmul.f32 %v903, %v933
      %v942 = vmul.f32 %v904, %v934
      %v943 = vmul.f32 %v905, %v933
      %v944 = vmul.f32 %v906, %v934
      %v945 = vmul.f32 %v907, %v933
      %v946 = vmul.f32 %v908, %v934
      %v947 = vmul.f32 %v909, %v933
      %v948 = vmul.f32 %v910, %v934
      %v949 = vmul.f32 %v911, %v933
      %v950 = vmul.f32 %v912, %v934
      %v951 = vmul.f32 %v913, %v933
      %v952 = vmul.f32 %v914, %v934
      %v953 = vmul.f32 %v915, %v933
      %v954 = vmul.f32 %v916, %v934
      %v955 = vmul.f32 %v917, %v933
      %v956 = vmul.f32 %v918, %v934
      %v957 = vmul.f32 %v919, %v933
      %v958 = vmul.f32 %v920, %v934
      %v959 = vmul.f32 %v921, %v933
      %v960 = vmul.f32 %v922, %v934
      %v961 = vmul.f32 %v923, %v933
      %v962 = vmul.f32 %v924, %v934
      %v963 = vmul.f32 %v925, %v933
      %v964 = vmul.f32 %v926, %v934
      %v965 = vmul.f32 %v927, %v933
      %v966 = vmul.f32 %v928, %v934
      %v967 = vmul.f32 %v929, %v933
      %v968 = vmul.f32 %v930, %v934
      %v969 = vadd.f32 %v937, %v938
      %970 = vadd.xlane.f32.xlu0 %v969
      %v971 = vpop.xlane.xlu0 %970
      %v972 = vadd.f32 %v939, %v940
      %973 = vadd.xlane.f32.xlu0 %v972
      %v974 = vpop.xlane.xlu0 %973
      %v975 = vadd.f32 %v941, %v942
      %976 = vadd.xlane.f32.xlu0 %v975
      %v977 = vpop.xlane.xlu0 %976
      %v978 = vadd.f32 %v943, %v944
      %979 = vadd.xlane.f32.xlu0 %v978
      %v980 = vpop.xlane.xlu0 %979
      %v981 = vadd.f32 %v945, %v946
      %982 = vadd.xlane.f32.xlu0 %v981
      %v983 = vpop.xlane.xlu0 %982
      %v984 = vadd.f32 %v947, %v948
      %985 = vadd.xlane.f32.xlu0 %v984
      %v986 = vpop.xlane.xlu0 %985
      %v987 = vadd.f32 %v949, %v950
      %988 = vadd.xlane.f32.xlu0 %v987
      %v989 = vpop.xlane.xlu0 %988
      %v990 = vadd.f32 %v951, %v952
      %991 = vadd.xlane.f32.xlu0 %v990
      %v992 = vpop.xlane.xlu0 %991
      %v993 = vadd.f32 %v953, %v954
      %994 = vadd.xlane.f32.xlu0 %v993
      %v995 = vpop.xlane.xlu0 %994
      %v996 = vadd.f32 %v955, %v956
      %997 = vadd.xlane.f32.xlu0 %v996
      %v998 = vpop.xlane.xlu0 %997
      %v999 = vadd.f32 %v957, %v958
      %1000 = vadd.xlane.f32.xlu0 %v999
      %v1001 = vpop.xlane.xlu0 %1000
      %v1002 = vadd.f32 %v959, %v960
      %1003 = vadd.xlane.f32.xlu0 %v1002
      %v1004 = vpop.xlane.xlu0 %1003
      %v1005 = vadd.f32 %v961, %v962
      %1006 = vadd.xlane.f32.xlu0 %v1005
      %v1007 = vpop.xlane.xlu0 %1006
      %v1008 = vadd.f32 %v963, %v964
      %1009 = vadd.xlane.f32.xlu0 %v1008
      %v1010 = vpop.xlane.xlu0 %1009
      %v1011 = vadd.f32 %v965, %v966
      %1012 = vadd.xlane.f32.xlu0 %v1011
      %v1013 = vpop.xlane.xlu0 %1012
      %v1014 = vadd.f32 %v967, %v968
      %1015 = vadd.xlane.f32.xlu0 %v1014
      %v1016 = vpop.xlane.xlu0 %1015
      %v1017 = vadd.f32 %v971, 0.0
      %v1018 = vadd.f32 %v974, 0.0
      %v1019 = vadd.f32 %v977, 0.0
      %v1020 = vadd.f32 %v980, 0.0
      %v1021 = vadd.f32 %v983, 0.0
      %v1022 = vadd.f32 %v986, 0.0
      %v1023 = vadd.f32 %v989, 0.0
      %v1024 = vadd.f32 %v992, 0.0
      %v1025 = vadd.f32 %v995, 0.0
      %v1026 = vadd.f32 %v998, 0.0
      %v1027 = vadd.f32 %v1001, 0.0
      %v1028 = vadd.f32 %v1004, 0.0
      %v1029 = vadd.f32 %v1007, 0.0
      %v1030 = vadd.f32 %v1010, 0.0
      %v1031 = vadd.f32 %v1013, 0.0
      %v1032 = vadd.f32 %v1016, 0.0
      %v1033 = vld [vmem:[%s3 + $0x8] sm:$0xff]
      %v1035 = vunpack.c.l.b16 %v1033
      %v1036 = vunpack.c.h.b16 %v1033
      %v1037 = vpack.c.b16 %v1035, %v1035
      %v1038 = vpack.c.b16 %v1036, %v1036
      %v1040 = vsel %vm442, %v1037, 0
      %v1043 = vsel %vm442, %v1038, 0
      %1045 = vmatpush.bf16.msra.mxu0 0
      %1046 = vmatpush.bf16.msra.mxu0 0
      %1047 = vmatpush.bf16.msra.mxu0 0
      %1048 = vmatpush.bf16.msra.mxu0 0
      %1049 = vmatpush.bf16.msra.mxu0 0
      %1050 = vmatpush.bf16.msra.mxu0 0
      %1051 = vmatpush.bf16.msra.mxu0 0
      %1052 = vmatpush.bf16.msra.mxu0 %v1040
      %1053 = vmatmul.bf16.gmra.mxu0 %v440
      %v1054 = vpop.f32.mrf.mxu0
      %v1055 = vadd.f32 0.0, %v1054
      %v1056 = vpop.f32.mrf.mxu0
      %v1057 = vadd.f32 0.0, %v1056
      %1058 = vdwg.mxu0
      %1059 = vmatpush.bf16.msra.mxu0 0
      %1060 = vmatpush.bf16.msra.mxu0 0
      %1061 = vmatpush.bf16.msra.mxu0 0
      %1062 = vmatpush.bf16.msra.mxu0 0
      %1063 = vmatpush.bf16.msra.mxu0 0
      %1064 = vmatpush.bf16.msra.mxu0 0
      %1065 = vmatpush.bf16.msra.mxu0 0
      %1066 = vmatpush.bf16.msra.mxu0 %v1043
      %1067 = vmatmul.bf16.gmra.mxu0 %v440
      %v1068 = vpop.f32.mrf.mxu0
      %v1069 = vadd.f32 0.0, %v1068
      %v1070 = vpop.f32.mrf.mxu0
      %v1071 = vadd.f32 0.0, %v1070
      %1072 = vdwg.mxu0
      %v1073 = vld [vmem:[%s4 + $0x8] sm:$0xff]
      %v1074 = vld [vmem:[%s4 + $0x28] sm:$0x33]
      %v1077 = vunpack.c.l.b16 %v1073
      %v1078 = vunpack.c.h.b16 %v1073
      %v1079 = vunpack.c.l.b16 %v1074
      %v1080 = vunpack.c.h.b16 %v1074
      %v1081 = vpack.c.b16 %v1079, %v1077
      %v1082 = vpack.c.b16 %v1080, %v1078
      %v1084 = vsel %vm552, %v1081, 0
      %v1087 = vsel %vm552, %v1082, 0
      %1089 = vmatpush.bf16.msra.mxu0 0
      %1090 = vmatpush.bf16.msra.mxu0 0
      %1091 = vmatpush.bf16.msra.mxu0 0
      %1092 = vmatpush.bf16.msra.mxu0 0
      %1093 = vmatpush.bf16.msra.mxu0 0
      %1094 = vmatpush.bf16.msra.mxu0 0
      %1095 = vmatpush.bf16.msra.mxu0 0
      %1096 = vmatpush.bf16.msra.mxu0 %v1084
      %1097 = vmatmul.bf16.gmra.mxu0 %v529
      %v1098 = vpop.f32.mrf.mxu0
      %v1099 = vadd.f32 0.0, %v1098
      %v1100 = vpop.f32.mrf.mxu0
      %v1101 = vadd.f32 0.0, %v1100
      %1102 = vmatmul.bf16.gmra.mxu0 %v532
      %v1103 = vpop.f32.mrf.mxu0
      %v1104 = vadd.f32 0.0, %v1103
      %v1105 = vpop.f32.mrf.mxu0
      %v1106 = vadd.f32 0.0, %v1105
      %1107 = vmatmul.bf16.gmra.mxu0 %v535
      %v1108 = vpop.f32.mrf.mxu0
      %v1109 = vadd.f32 0.0, %v1108
      %v1110 = vpop.f32.mrf.mxu0
      %v1111 = vadd.f32 0.0, %v1110
      %1112 = vmatmul.bf16.gmra.mxu0 %v538
      %v1113 = vpop.f32.mrf.mxu0
      %v1114 = vadd.f32 0.0, %v1113
      %v1115 = vpop.f32.mrf.mxu0
      %v1116 = vadd.f32 0.0, %v1115
      %1117 = vmatmul.bf16.gmra.mxu0 %v541
      %v1118 = vpop.f32.mrf.mxu0
      %v1119 = vadd.f32 0.0, %v1118
      %v1120 = vpop.f32.mrf.mxu0
      %v1121 = vadd.f32 0.0, %v1120
      %1122 = vmatmul.bf16.gmra.mxu0 %v544
      %v1123 = vpop.f32.mrf.mxu0
      %v1124 = vadd.f32 0.0, %v1123
      %v1125 = vpop.f32.mrf.mxu0
      %v1126 = vadd.f32 0.0, %v1125
      %1127 = vmatmul.bf16.gmra.mxu0 %v547
      %v1128 = vpop.f32.mrf.mxu0
      %v1129 = vadd.f32 0.0, %v1128
      %v1130 = vpop.f32.mrf.mxu0
      %v1131 = vadd.f32 0.0, %v1130
      %1132 = vmatmul.bf16.gmra.mxu0 %v550
      %v1133 = vpop.f32.mrf.mxu0
      %v1134 = vadd.f32 0.0, %v1133
      %v1135 = vpop.f32.mrf.mxu0
      %v1136 = vadd.f32 0.0, %v1135
      %1137 = vdwg.mxu0
      %1138 = vmatpush.bf16.msra.mxu0 0
      %1139 = vmatpush.bf16.msra.mxu0 0
      %1140 = vmatpush.bf16.msra.mxu0 0
      %1141 = vmatpush.bf16.msra.mxu0 0
      %1142 = vmatpush.bf16.msra.mxu0 0
      %1143 = vmatpush.bf16.msra.mxu0 0
      %1144 = vmatpush.bf16.msra.mxu0 0
      %1145 = vmatpush.bf16.msra.mxu0 %v1087
      %1146 = vmatmul.bf16.gmra.mxu0 %v529
      %v1147 = vpop.f32.mrf.mxu0
      %v1148 = vadd.f32 0.0, %v1147
      %v1149 = vpop.f32.mrf.mxu0
      %v1150 = vadd.f32 0.0, %v1149
      %1151 = vmatmul.bf16.gmra.mxu0 %v532
      %v1152 = vpop.f32.mrf.mxu0
      %v1153 = vadd.f32 0.0, %v1152
      %v1154 = vpop.f32.mrf.mxu0
      %v1155 = vadd.f32 0.0, %v1154
      %1156 = vmatmul.bf16.gmra.mxu0 %v535
      %v1157 = vpop.f32.mrf.mxu0
      %v1158 = vadd.f32 0.0, %v1157
      %v1159 = vpop.f32.mrf.mxu0
      %v1160 = vadd.f32 0.0, %v1159
      %1161 = vmatmul.bf16.gmra.mxu0 %v538
      %v1162 = vpop.f32.mrf.mxu0
      %v1163 = vadd.f32 0.0, %v1162
      %v1164 = vpop.f32.mrf.mxu0
      %v1165 = vadd.f32 0.0, %v1164
      %1166 = vmatmul.bf16.gmra.mxu0 %v541
      %v1167 = vpop.f32.mrf.mxu0
      %v1168 = vadd.f32 0.0, %v1167
      %v1169 = vpop.f32.mrf.mxu0
      %v1170 = vadd.f32 0.0, %v1169
      %1171 = vmatmul.bf16.gmra.mxu0 %v544
      %v1172 = vpop.f32.mrf.mxu0
      %v1173 = vadd.f32 0.0, %v1172
      %v1174 = vpop.f32.mrf.mxu0
      %v1175 = vadd.f32 0.0, %v1174
      %1176 = vmatmul.bf16.gmra.mxu0 %v547
      %v1177 = vpop.f32.mrf.mxu0
      %v1178 = vadd.f32 0.0, %v1177
      %v1179 = vpop.f32.mrf.mxu0
      %v1180 = vadd.f32 0.0, %v1179
      %1181 = vmatmul.bf16.gmra.mxu0 %v550
      %v1182 = vpop.f32.mrf.mxu0
      %v1183 = vadd.f32 0.0, %v1182
      %v1184 = vpop.f32.mrf.mxu0
      %v1185 = vadd.f32 0.0, %v1184
      %1186 = vdwg.mxu0
      %v1191 = vrot.slane %v1069, 7
      %v1192 = vrot.slane %v1071, 7
      %v1193 = vsel %vm663, %v1055, %v1191
      %v1194 = vsel %vm665, %v1055, %v1191
      %v1195 = vrot.slane %v1194, 1
      %v1196 = vsel %vm668, %v1055, %v1191
      %v1197 = vrot.slane %v1196, 2
      %v1198 = vsel %vm671, %v1055, %v1191
      %v1199 = vrot.slane %v1198, 3
      %v1200 = vsel %vm674, %v1055, %v1191
      %v1201 = vrot.slane %v1200, 4
      %v1202 = vsel %vm677, %v1055, %v1191
      %v1203 = vrot.slane %v1202, 5
      %v1204 = vsel %vm680, %v1055, %v1191
      %v1205 = vrot.slane %v1204, 6
      %v1206 = vsel %vm683, %v1191, %v1055
      %v1207 = vrot.slane %v1206, 7
      %v1208 = vsel %vm663, %v1057, %v1192
      %v1209 = vsel %vm665, %v1057, %v1192
      %v1210 = vrot.slane %v1209, 1
      %v1211 = vsel %vm668, %v1057, %v1192
      %v1212 = vrot.slane %v1211, 2
      %v1213 = vsel %vm671, %v1057, %v1192
      %v1214 = vrot.slane %v1213, 3
      %v1215 = vsel %vm674, %v1057, %v1192
      %v1216 = vrot.slane %v1215, 4
      %v1217 = vsel %vm677, %v1057, %v1192
      %v1218 = vrot.slane %v1217, 5
      %v1219 = vsel %vm680, %v1057, %v1192
      %v1220 = vrot.slane %v1219, 6
      %v1221 = vsel %vm683, %v1192, %v1057
      %v1222 = vrot.slane %v1221, 7
      %v1223 = vperm.slane %v1193, 0
      %v1224 = vperm.slane %v1193, 1
      %v1225 = vperm.slane %v1195, 0
      %v1226 = vperm.slane %v1195, 1
      %v1227 = vperm.slane %v1197, 0
      %v1228 = vperm.slane %v1197, 1
      %v1229 = vperm.slane %v1199, 0
      %v1230 = vperm.slane %v1199, 1
      %v1231 = vperm.slane %v1201, 0
      %v1232 = vperm.slane %v1201, 1
      %v1233 = vperm.slane %v1203, 0
      %v1234 = vperm.slane %v1203, 1
      %v1235 = vperm.slane %v1205, 0
      %v1236 = vperm.slane %v1205, 1
      %v1237 = vperm.slane %v1207, 0
      %v1238 = vperm.slane %v1207, 1
      %v1239 = vperm.slane %v1208, 0
      %v1240 = vperm.slane %v1208, 1
      %v1241 = vperm.slane %v1210, 0
      %v1242 = vperm.slane %v1210, 1
      %v1243 = vperm.slane %v1212, 0
      %v1244 = vperm.slane %v1212, 1
      %v1245 = vperm.slane %v1214, 0
      %v1246 = vperm.slane %v1214, 1
      %v1247 = vperm.slane %v1216, 0
      %v1248 = vperm.slane %v1216, 1
      %v1249 = vperm.slane %v1218, 0
      %v1250 = vperm.slane %v1218, 1
      %v1251 = vperm.slane %v1220, 0
      %v1252 = vperm.slane %v1220, 1
      %v1253 = vperm.slane %v1222, 0
      %v1254 = vperm.slane %v1222, 1
      %v1287 = vadd.f32 %v1099, %v1223
      %v1288 = vadd.f32 %v1148, %v1224
      %v1289 = vadd.f32 %v1101, %v1225
      %v1290 = vadd.f32 %v1150, %v1226
      %v1291 = vadd.f32 %v1104, %v1227
      %v1292 = vadd.f32 %v1153, %v1228
      %v1293 = vadd.f32 %v1106, %v1229
      %v1294 = vadd.f32 %v1155, %v1230
      %v1295 = vadd.f32 %v1109, %v1231
      %v1296 = vadd.f32 %v1158, %v1232
      %v1297 = vadd.f32 %v1111, %v1233
      %v1298 = vadd.f32 %v1160, %v1234
      %v1299 = vadd.f32 %v1114, %v1235
      %v1300 = vadd.f32 %v1163, %v1236
      %v1301 = vadd.f32 %v1116, %v1237
      %v1302 = vadd.f32 %v1165, %v1238
      %v1303 = vadd.f32 %v1119, %v1239
      %v1304 = vadd.f32 %v1168, %v1240
      %v1305 = vadd.f32 %v1121, %v1241
      %v1306 = vadd.f32 %v1170, %v1242
      %v1307 = vadd.f32 %v1124, %v1243
      %v1308 = vadd.f32 %v1173, %v1244
      %v1309 = vadd.f32 %v1126, %v1245
      %v1310 = vadd.f32 %v1175, %v1246
      %v1311 = vadd.f32 %v1129, %v1247
      %v1312 = vadd.f32 %v1178, %v1248
      %v1313 = vadd.f32 %v1131, %v1249
      %v1314 = vadd.f32 %v1180, %v1250
      %v1315 = vadd.f32 %v1134, %v1251
      %v1316 = vadd.f32 %v1183, %v1252
      %v1317 = vadd.f32 %v1136, %v1253
      %v1318 = vadd.f32 %v1185, %v1254
      %v1319 = vld [vmem:[%s5 + $0x2] sm:$0x3]
      %v1321 = vperm.slane %v1319, 0
      %v1322 = vperm.slane %v1319, 1
      %v1325 = vadd.f32 %v1287, %v1321
      %v1326 = vadd.f32 %v1288, %v1322
      %v1327 = vadd.f32 %v1289, %v1321
      %v1328 = vadd.f32 %v1290, %v1322
      %v1329 = vadd.f32 %v1291, %v1321
      %v1330 = vadd.f32 %v1292, %v1322
      %v1331 = vadd.f32 %v1293, %v1321
      %v1332 = vadd.f32 %v1294, %v1322
      %v1333 = vadd.f32 %v1295, %v1321
      %v1334 = vadd.f32 %v1296, %v1322
      %v1335 = vadd.f32 %v1297, %v1321
      %v1336 = vadd.f32 %v1298, %v1322
      %v1337 = vadd.f32 %v1299, %v1321
      %v1338 = vadd.f32 %v1300, %v1322
      %v1339 = vadd.f32 %v1301, %v1321
      %v1340 = vadd.f32 %v1302, %v1322
      %v1341 = vadd.f32 %v1303, %v1321
      %v1342 = vadd.f32 %v1304, %v1322
      %v1343 = vadd.f32 %v1305, %v1321
      %v1344 = vadd.f32 %v1306, %v1322
      %v1345 = vadd.f32 %v1307, %v1321
      %v1346 = vadd.f32 %v1308, %v1322
      %v1347 = vadd.f32 %v1309, %v1321
      %v1348 = vadd.f32 %v1310, %v1322
      %v1349 = vadd.f32 %v1311, %v1321
      %v1350 = vadd.f32 %v1312, %v1322
      %v1351 = vadd.f32 %v1313, %v1321
      %v1352 = vadd.f32 %v1314, %v1322
      %v1353 = vadd.f32 %v1315, %v1321
      %v1354 = vadd.f32 %v1316, %v1322
      %v1355 = vadd.f32 %v1317, %v1321
      %v1356 = vadd.f32 %v1318, %v1322
      %vm1357 = vcmp.ge.f32.partialorder %v1325, 0.0
      %vm1358 = vcmp.ge.f32.partialorder %v1326, 0.0
      %vm1359 = vcmp.ge.f32.partialorder %v1327, 0.0
      %vm1360 = vcmp.ge.f32.partialorder %v1328, 0.0
      %vm1361 = vcmp.ge.f32.partialorder %v1329, 0.0
      %vm1362 = vcmp.ge.f32.partialorder %v1330, 0.0
      %vm1363 = vcmp.ge.f32.partialorder %v1331, 0.0
      %vm1364 = vcmp.ge.f32.partialorder %v1332, 0.0
      %vm1365 = vcmp.ge.f32.partialorder %v1333, 0.0
      %vm1366 = vcmp.ge.f32.partialorder %v1334, 0.0
      %vm1367 = vcmp.ge.f32.partialorder %v1335, 0.0
      %vm1368 = vcmp.ge.f32.partialorder %v1336, 0.0
      %vm1369 = vcmp.ge.f32.partialorder %v1337, 0.0
      %vm1370 = vcmp.ge.f32.partialorder %v1338, 0.0
      %vm1371 = vcmp.ge.f32.partialorder %v1339, 0.0
      %vm1372 = vcmp.ge.f32.partialorder %v1340, 0.0
      %vm1373 = vcmp.ge.f32.partialorder %v1341, 0.0
      %vm1374 = vcmp.ge.f32.partialorder %v1342, 0.0
      %vm1375 = vcmp.ge.f32.partialorder %v1343, 0.0
      %vm1376 = vcmp.ge.f32.partialorder %v1344, 0.0
      %vm1377 = vcmp.ge.f32.partialorder %v1345, 0.0
      %vm1378 = vcmp.ge.f32.partialorder %v1346, 0.0
      %vm1379 = vcmp.ge.f32.partialorder %v1347, 0.0
      %vm1380 = vcmp.ge.f32.partialorder %v1348, 0.0
      %vm1381 = vcmp.ge.f32.partialorder %v1349, 0.0
      %vm1382 = vcmp.ge.f32.partialorder %v1350, 0.0
      %vm1383 = vcmp.ge.f32.partialorder %v1351, 0.0
      %vm1384 = vcmp.ge.f32.partialorder %v1352, 0.0
      %vm1385 = vcmp.ge.f32.partialorder %v1353, 0.0
      %vm1386 = vcmp.ge.f32.partialorder %v1354, 0.0
      %vm1387 = vcmp.ge.f32.partialorder %v1355, 0.0
      %vm1388 = vcmp.ge.f32.partialorder %v1356, 0.0
      %v1389 = vmul.f32 %v1325, 0.2
      %v1390 = vmul.f32 %v1326, 0.2
      %v1391 = vmul.f32 %v1327, 0.2
      %v1392 = vmul.f32 %v1328, 0.2
      %v1393 = vmul.f32 %v1329, 0.2
      %v1394 = vmul.f32 %v1330, 0.2
      %v1395 = vmul.f32 %v1331, 0.2
      %v1396 = vmul.f32 %v1332, 0.2
      %v1397 = vmul.f32 %v1333, 0.2
      %v1398 = vmul.f32 %v1334, 0.2
      %v1399 = vmul.f32 %v1335, 0.2
      %v1400 = vmul.f32 %v1336, 0.2
      %v1401 = vmul.f32 %v1337, 0.2
      %v1402 = vmul.f32 %v1338, 0.2
      %v1403 = vmul.f32 %v1339, 0.2
      %v1404 = vmul.f32 %v1340, 0.2
      %v1405 = vmul.f32 %v1341, 0.2
      %v1406 = vmul.f32 %v1342, 0.2
      %v1407 = vmul.f32 %v1343, 0.2
      %v1408 = vmul.f32 %v1344, 0.2
      %v1409 = vmul.f32 %v1345, 0.2
      %v1410 = vmul.f32 %v1346, 0.2
      %v1411 = vmul.f32 %v1347, 0.2
      %v1412 = vmul.f32 %v1348, 0.2
      %v1413 = vmul.f32 %v1349, 0.2
      %v1414 = vmul.f32 %v1350, 0.2
      %v1415 = vmul.f32 %v1351, 0.2
      %v1416 = vmul.f32 %v1352, 0.2
      %v1417 = vmul.f32 %v1353, 0.2
      %v1418 = vmul.f32 %v1354, 0.2
      %v1419 = vmul.f32 %v1355, 0.2
      %v1420 = vmul.f32 %v1356, 0.2
      %v1421 = vsel %vm1357, %v1325, %v1389
      %v1422 = vsel %vm1358, %v1326, %v1390
      %v1423 = vsel %vm1359, %v1327, %v1391
      %v1424 = vsel %vm1360, %v1328, %v1392
      %v1425 = vsel %vm1361, %v1329, %v1393
      %v1426 = vsel %vm1362, %v1330, %v1394
      %v1427 = vsel %vm1363, %v1331, %v1395
      %v1428 = vsel %vm1364, %v1332, %v1396
      %v1429 = vsel %vm1365, %v1333, %v1397
      %v1430 = vsel %vm1366, %v1334, %v1398
      %v1431 = vsel %vm1367, %v1335, %v1399
      %v1432 = vsel %vm1368, %v1336, %v1400
      %v1433 = vsel %vm1369, %v1337, %v1401
      %v1434 = vsel %vm1370, %v1338, %v1402
      %v1435 = vsel %vm1371, %v1339, %v1403
      %v1436 = vsel %vm1372, %v1340, %v1404
      %v1437 = vsel %vm1373, %v1341, %v1405
      %v1438 = vsel %vm1374, %v1342, %v1406
      %v1439 = vsel %vm1375, %v1343, %v1407
      %v1440 = vsel %vm1376, %v1344, %v1408
      %v1441 = vsel %vm1377, %v1345, %v1409
      %v1442 = vsel %vm1378, %v1346, %v1410
      %v1443 = vsel %vm1379, %v1347, %v1411
      %v1444 = vsel %vm1380, %v1348, %v1412
      %v1445 = vsel %vm1381, %v1349, %v1413
      %v1446 = vsel %vm1382, %v1350, %v1414
      %v1447 = vsel %vm1383, %v1351, %v1415
      %v1448 = vsel %vm1384, %v1352, %v1416
      %v1449 = vsel %vm1385, %v1353, %v1417
      %v1450 = vsel %vm1386, %v1354, %v1418
      %v1451 = vsel %vm1387, %v1355, %v1419
      %v1452 = vsel %vm1388, %v1356, %v1420
      %v1453 = vld [vmem:[%s6 + $0x2] sm:$0x3]
      %v1455 = vperm.slane %v1453, 0
      %v1456 = vperm.slane %v1453, 1
      %v1459 = vmul.f32 %v1421, %v1455
      %v1460 = vmul.f32 %v1422, %v1456
      %v1461 = vmul.f32 %v1423, %v1455
      %v1462 = vmul.f32 %v1424, %v1456
      %v1463 = vmul.f32 %v1425, %v1455
      %v1464 = vmul.f32 %v1426, %v1456
      %v1465 = vmul.f32 %v1427, %v1455
      %v1466 = vmul.f32 %v1428, %v1456
      %v1467 = vmul.f32 %v1429, %v1455
      %v1468 = vmul.f32 %v1430, %v1456
      %v1469 = vmul.f32 %v1431, %v1455
      %v1470 = vmul.f32 %v1432, %v1456
      %v1471 = vmul.f32 %v1433, %v1455
      %v1472 = vmul.f32 %v1434, %v1456
      %v1473 = vmul.f32 %v1435, %v1455
      %v1474 = vmul.f32 %v1436, %v1456
      %v1475 = vmul.f32 %v1437, %v1455
      %v1476 = vmul.f32 %v1438, %v1456
      %v1477 = vmul.f32 %v1439, %v1455
      %v1478 = vmul.f32 %v1440, %v1456
      %v1479 = vmul.f32 %v1441, %v1455
      %v1480 = vmul.f32 %v1442, %v1456
      %v1481 = vmul.f32 %v1443, %v1455
      %v1482 = vmul.f32 %v1444, %v1456
      %v1483 = vmul.f32 %v1445, %v1455
      %v1484 = vmul.f32 %v1446, %v1456
      %v1485 = vmul.f32 %v1447, %v1455
      %v1486 = vmul.f32 %v1448, %v1456
      %v1487 = vmul.f32 %v1449, %v1455
      %v1488 = vmul.f32 %v1450, %v1456
      %v1489 = vmul.f32 %v1451, %v1455
      %v1490 = vmul.f32 %v1452, %v1456
      %v1491 = vadd.f32 %v1459, %v1460
      %1492 = vadd.xlane.f32.xlu0 %v1491
      %v1493 = vpop.xlane.xlu0 %1492
      %v1494 = vadd.f32 %v1461, %v1462
      %1495 = vadd.xlane.f32.xlu0 %v1494
      %v1496 = vpop.xlane.xlu0 %1495
      %v1497 = vadd.f32 %v1463, %v1464
      %1498 = vadd.xlane.f32.xlu0 %v1497
      %v1499 = vpop.xlane.xlu0 %1498
      %v1500 = vadd.f32 %v1465, %v1466
      %1501 = vadd.xlane.f32.xlu0 %v1500
      %v1502 = vpop.xlane.xlu0 %1501
      %v1503 = vadd.f32 %v1467, %v1468
      %1504 = vadd.xlane.f32.xlu0 %v1503
      %v1505 = vpop.xlane.xlu0 %1504
      %v1506 = vadd.f32 %v1469, %v1470
      %1507 = vadd.xlane.f32.xlu0 %v1506
      %v1508 = vpop.xlane.xlu0 %1507
      %v1509 = vadd.f32 %v1471, %v1472
      %1510 = vadd.xlane.f32.xlu0 %v1509
      %v1511 = vpop.xlane.xlu0 %1510
      %v1512 = vadd.f32 %v1473, %v1474
      %1513 = vadd.xlane.f32.xlu0 %v1512
      %v1514 = vpop.xlane.xlu0 %1513
      %v1515 = vadd.f32 %v1475, %v1476
      %1516 = vadd.xlane.f32.xlu0 %v1515
      %v1517 = vpop.xlane.xlu0 %1516
      %v1518 = vadd.f32 %v1477, %v1478
      %1519 = vadd.xlane.f32.xlu0 %v1518
      %v1520 = vpop.xlane.xlu0 %1519
      %v1521 = vadd.f32 %v1479, %v1480
      %1522 = vadd.xlane.f32.xlu0 %v1521
      %v1523 = vpop.xlane.xlu0 %1522
      %v1524 = vadd.f32 %v1481, %v1482
      %1525 = vadd.xlane.f32.xlu0 %v1524
      %v1526 = vpop.xlane.xlu0 %1525
      %v1527 = vadd.f32 %v1483, %v1484
      %1528 = vadd.xlane.f32.xlu0 %v1527
      %v1529 = vpop.xlane.xlu0 %1528
      %v1530 = vadd.f32 %v1485, %v1486
      %1531 = vadd.xlane.f32.xlu0 %v1530
      %v1532 = vpop.xlane.xlu0 %1531
      %v1533 = vadd.f32 %v1487, %v1488
      %1534 = vadd.xlane.f32.xlu0 %v1533
      %v1535 = vpop.xlane.xlu0 %1534
      %v1536 = vadd.f32 %v1489, %v1490
      %1537 = vadd.xlane.f32.xlu0 %v1536
      %v1538 = vpop.xlane.xlu0 %1537
      %v1539 = vadd.f32 %v1017, %v1493
      %v1540 = vadd.f32 %v1018, %v1496
      %v1541 = vadd.f32 %v1019, %v1499
      %v1542 = vadd.f32 %v1020, %v1502
      %v1543 = vadd.f32 %v1021, %v1505
      %v1544 = vadd.f32 %v1022, %v1508
      %v1545 = vadd.f32 %v1023, %v1511
      %v1546 = vadd.f32 %v1024, %v1514
      %v1547 = vadd.f32 %v1025, %v1517
      %v1548 = vadd.f32 %v1026, %v1520
      %v1549 = vadd.f32 %v1027, %v1523
      %v1550 = vadd.f32 %v1028, %v1526
      %v1551 = vadd.f32 %v1029, %v1529
      %v1552 = vadd.f32 %v1030, %v1532
      %v1553 = vadd.f32 %v1031, %v1535
      %v1554 = vadd.f32 %v1032, %v1538
      %v1555 = vld [vmem:[%s3 + $0x10] sm:$0xff]
      %v1557 = vunpack.c.l.b16 %v1555
      %v1558 = vunpack.c.h.b16 %v1555
      %v1559 = vpack.c.b16 %v1557, %v1557
      %v1560 = vpack.c.b16 %v1558, %v1558
      %v1562 = vsel %vm442, %v1559, 0
      %v1565 = vsel %vm442, %v1560, 0
      %1567 = vmatpush.bf16.msra.mxu0 0
      %1568 = vmatpush.bf16.msra.mxu0 0
      %1569 = vmatpush.bf16.msra.mxu0 0
      %1570 = vmatpush.bf16.msra.mxu0 0
      %1571 = vmatpush.bf16.msra.mxu0 0
      %1572 = vmatpush.bf16.msra.mxu0 0
      %1573 = vmatpush.bf16.msra.mxu0 0
      %1574 = vmatpush.bf16.msra.mxu0 %v1562
      %1575 = vmatmul.bf16.gmra.mxu0 %v440
      %v1576 = vpop.f32.mrf.mxu0
      %v1577 = vadd.f32 0.0, %v1576
      %v1578 = vpop.f32.mrf.mxu0
      %v1579 = vadd.f32 0.0, %v1578
      %1580 = vdwg.mxu0
      %1581 = vmatpush.bf16.msra.mxu0 0
      %1582 = vmatpush.bf16.msra.mxu0 0
      %1583 = vmatpush.bf16.msra.mxu0 0
      %1584 = vmatpush.bf16.msra.mxu0 0
      %1585 = vmatpush.bf16.msra.mxu0 0
      %1586 = vmatpush.bf16.msra.mxu0 0
      %1587 = vmatpush.bf16.msra.mxu0 0
      %1588 = vmatpush.bf16.msra.mxu0 %v1565
      %1589 = vmatmul.bf16.gmra.mxu0 %v440
      %v1590 = vpop.f32.mrf.mxu0
      %v1591 = vadd.f32 0.0, %v1590
      %v1592 = vpop.f32.mrf.mxu0
      %v1593 = vadd.f32 0.0, %v1592
      %1594 = vdwg.mxu0
      %v1595 = vld [vmem:[%s4 + $0x10] sm:$0xff]
      %v1596 = vld [vmem:[%s4 + $0x30] sm:$0x33]
      %v1599 = vunpack.c.l.b16 %v1595
      %v1600 = vunpack.c.h.b16 %v1595
      %v1601 = vunpack.c.l.b16 %v1596
      %v1602 = vunpack.c.h.b16 %v1596
      %v1603 = vpack.c.b16 %v1601, %v1599
      %v1604 = vpack.c.b16 %v1602, %v1600
      %v1606 = vsel %vm552, %v1603, 0
      %v1609 = vsel %vm552, %v1604, 0
      %1611 = vmatpush.bf16.msra.mxu0 0
      %1612 = vmatpush.bf16.msra.mxu0 0
      %1613 = vmatpush.bf16.msra.mxu0 0
      %1614 = vmatpush.bf16.msra.mxu0 0
      %1615 = vmatpush.bf16.msra.mxu0 0
      %1616 = vmatpush.bf16.msra.mxu0 0
      %1617 = vmatpush.bf16.msra.mxu0 0
      %1618 = vmatpush.bf16.msra.mxu0 %v1606
      %1619 = vmatmul.bf16.gmra.mxu0 %v529
      %v1620 = vpop.f32.mrf.mxu0
      %v1621 = vadd.f32 0.0, %v1620
      %v1622 = vpop.f32.mrf.mxu0
      %v1623 = vadd.f32 0.0, %v1622
      %1624 = vmatmul.bf16.gmra.mxu0 %v532
      %v1625 = vpop.f32.mrf.mxu0
      %v1626 = vadd.f32 0.0, %v1625
      %v1627 = vpop.f32.mrf.mxu0
      %v1628 = vadd.f32 0.0, %v1627
      %1629 = vmatmul.bf16.gmra.mxu0 %v535
      %v1630 = vpop.f32.mrf.mxu0
      %v1631 = vadd.f32 0.0, %v1630
      %v1632 = vpop.f32.mrf.mxu0
      %v1633 = vadd.f32 0.0, %v1632
      %1634 = vmatmul.bf16.gmra.mxu0 %v538
      %v1635 = vpop.f32.mrf.mxu0
      %v1636 = vadd.f32 0.0, %v1635
      %v1637 = vpop.f32.mrf.mxu0
      %v1638 = vadd.f32 0.0, %v1637
      %1639 = vmatmul.bf16.gmra.mxu0 %v541
      %v1640 = vpop.f32.mrf.mxu0
      %v1641 = vadd.f32 0.0, %v1640
      %v1642 = vpop.f32.mrf.mxu0
      %v1643 = vadd.f32 0.0, %v1642
      %1644 = vmatmul.bf16.gmra.mxu0 %v544
      %v1645 = vpop.f32.mrf.mxu0
      %v1646 = vadd.f32 0.0, %v1645
      %v1647 = vpop.f32.mrf.mxu0
      %v1648 = vadd.f32 0.0, %v1647
      %1649 = vmatmul.bf16.gmra.mxu0 %v547
      %v1650 = vpop.f32.mrf.mxu0
      %v1651 = vadd.f32 0.0, %v1650
      %v1652 = vpop.f32.mrf.mxu0
      %v1653 = vadd.f32 0.0, %v1652
      %1654 = vmatmul.bf16.gmra.mxu0 %v550
      %v1655 = vpop.f32.mrf.mxu0
      %v1656 = vadd.f32 0.0, %v1655
      %v1657 = vpop.f32.mrf.mxu0
      %v1658 = vadd.f32 0.0, %v1657
      %1659 = vdwg.mxu0
      %1660 = vmatpush.bf16.msra.mxu0 0
      %1661 = vmatpush.bf16.msra.mxu0 0
      %1662 = vmatpush.bf16.msra.mxu0 0
      %1663 = vmatpush.bf16.msra.mxu0 0
      %1664 = vmatpush.bf16.msra.mxu0 0
      %1665 = vmatpush.bf16.msra.mxu0 0
      %1666 = vmatpush.bf16.msra.mxu0 0
      %1667 = vmatpush.bf16.msra.mxu0 %v1609
      %1668 = vmatmul.bf16.gmra.mxu0 %v529
      %v1669 = vpop.f32.mrf.mxu0
      %v1670 = vadd.f32 0.0, %v1669
      %v1671 = vpop.f32.mrf.mxu0
      %v1672 = vadd.f32 0.0, %v1671
      %1673 = vmatmul.bf16.gmra.mxu0 %v532
      %v1674 = vpop.f32.mrf.mxu0
      %v1675 = vadd.f32 0.0, %v1674
      %v1676 = vpop.f32.mrf.mxu0
      %v1677 = vadd.f32 0.0, %v1676
      %1678 = vmatmul.bf16.gmra.mxu0 %v535
      %v1679 = vpop.f32.mrf.mxu0
      %v1680 = vadd.f32 0.0, %v1679
      %v1681 = vpop.f32.mrf.mxu0
      %v1682 = vadd.f32 0.0, %v1681
      %1683 = vmatmul.bf16.gmra.mxu0 %v538
      %v1684 = vpop.f32.mrf.mxu0
      %v1685 = vadd.f32 0.0, %v1684
      %v1686 = vpop.f32.mrf.mxu0
      %v1687 = vadd.f32 0.0, %v1686
      %1688 = vmatmul.bf16.gmra.mxu0 %v541
      %v1689 = vpop.f32.mrf.mxu0
      %v1690 = vadd.f32 0.0, %v1689
      %v1691 = vpop.f32.mrf.mxu0
      %v1692 = vadd.f32 0.0, %v1691
      %1693 = vmatmul.bf16.gmra.mxu0 %v544
      %v1694 = vpop.f32.mrf.mxu0
      %v1695 = vadd.f32 0.0, %v1694
      %v1696 = vpop.f32.mrf.mxu0
      %v1697 = vadd.f32 0.0, %v1696
      %1698 = vmatmul.bf16.gmra.mxu0 %v547
      %v1699 = vpop.f32.mrf.mxu0
      %v1700 = vadd.f32 0.0, %v1699
      %v1701 = vpop.f32.mrf.mxu0
      %v1702 = vadd.f32 0.0, %v1701
      %1703 = vmatmul.bf16.gmra.mxu0 %v550
      %v1704 = vpop.f32.mrf.mxu0
      %v1705 = vadd.f32 0.0, %v1704
      %v1706 = vpop.f32.mrf.mxu0
      %v1707 = vadd.f32 0.0, %v1706
      %1708 = vdwg.mxu0
      %v1713 = vrot.slane %v1591, 7
      %v1714 = vrot.slane %v1593, 7
      %v1715 = vsel %vm663, %v1577, %v1713
      %v1716 = vsel %vm665, %v1577, %v1713
      %v1717 = vrot.slane %v1716, 1
      %v1718 = vsel %vm668, %v1577, %v1713
      %v1719 = vrot.slane %v1718, 2
      %v1720 = vsel %vm671, %v1577, %v1713
      %v1721 = vrot.slane %v1720, 3
      %v1722 = vsel %vm674, %v1577, %v1713
      %v1723 = vrot.slane %v1722, 4
      %v1724 = vsel %vm677, %v1577, %v1713
      %v1725 = vrot.slane %v1724, 5
      %v1726 = vsel %vm680, %v1577, %v1713
      %v1727 = vrot.slane %v1726, 6
      %v1728 = vsel %vm683, %v1713, %v1577
      %v1729 = vrot.slane %v1728, 7
      %v1730 = vsel %vm663, %v1579, %v1714
      %v1731 = vsel %vm665, %v1579, %v1714
      %v1732 = vrot.slane %v1731, 1
      %v1733 = vsel %vm668, %v1579, %v1714
      %v1734 = vrot.slane %v1733, 2
      %v1735 = vsel %vm671, %v1579, %v1714
      %v1736 = vrot.slane %v1735, 3
      %v1737 = vsel %vm674, %v1579, %v1714
      %v1738 = vrot.slane %v1737, 4
      %v1739 = vsel %vm677, %v1579, %v1714
      %v1740 = vrot.slane %v1739, 5
      %v1741 = vsel %vm680, %v1579, %v1714
      %v1742 = vrot.slane %v1741, 6
      %v1743 = vsel %vm683, %v1714, %v1579
      %v1744 = vrot.slane %v1743, 7
      %v1745 = vperm.slane %v1715, 0
      %v1746 = vperm.slane %v1715, 1
      %v1747 = vperm.slane %v1717, 0
      %v1748 = vperm.slane %v1717, 1
      %v1749 = vperm.slane %v1719, 0
      %v1750 = vperm.slane %v1719, 1
      %v1751 = vperm.slane %v1721, 0
      %v1752 = vperm.slane %v1721, 1
      %v1753 = vperm.slane %v1723, 0
      %v1754 = vperm.slane %v1723, 1
      %v1755 = vperm.slane %v1725, 0
      %v1756 = vperm.slane %v1725, 1
      %v1757 = vperm.slane %v1727, 0
      %v1758 = vperm.slane %v1727, 1
      %v1759 = vperm.slane %v1729, 0
      %v1760 = vperm.slane %v1729, 1
      %v1761 = vperm.slane %v1730, 0
      %v1762 = vperm.slane %v1730, 1
      %v1763 = vperm.slane %v1732, 0
      %v1764 = vperm.slane %v1732, 1
      %v1765 = vperm.slane %v1734, 0
      %v1766 = vperm.slane %v1734, 1
      %v1767 = vperm.slane %v1736, 0
      %v1768 = vperm.slane %v1736, 1
      %v1769 = vperm.slane %v1738, 0
      %v1770 = vperm.slane %v1738, 1
      %v1771 = vperm.slane %v1740, 0
      %v1772 = vperm.slane %v1740, 1
      %v1773 = vperm.slane %v1742, 0
      %v1774 = vperm.slane %v1742, 1
      %v1775 = vperm.slane %v1744, 0
      %v1776 = vperm.slane %v1744, 1
      %v1809 = vadd.f32 %v1621, %v1745
      %v1810 = vadd.f32 %v1670, %v1746
      %v1811 = vadd.f32 %v1623, %v1747
      %v1812 = vadd.f32 %v1672, %v1748
      %v1813 = vadd.f32 %v1626, %v1749
      %v1814 = vadd.f32 %v1675, %v1750
      %v1815 = vadd.f32 %v1628, %v1751
      %v1816 = vadd.f32 %v1677, %v1752
      %v1817 = vadd.f32 %v1631, %v1753
      %v1818 = vadd.f32 %v1680, %v1754
      %v1819 = vadd.f32 %v1633, %v1755
      %v1820 = vadd.f32 %v1682, %v1756
      %v1821 = vadd.f32 %v1636, %v1757
      %v1822 = vadd.f32 %v1685, %v1758
      %v1823 = vadd.f32 %v1638, %v1759
      %v1824 = vadd.f32 %v1687, %v1760
      %v1825 = vadd.f32 %v1641, %v1761
      %v1826 = vadd.f32 %v1690, %v1762
      %v1827 = vadd.f32 %v1643, %v1763
      %v1828 = vadd.f32 %v1692, %v1764
      %v1829 = vadd.f32 %v1646, %v1765
      %v1830 = vadd.f32 %v1695, %v1766
      %v1831 = vadd.f32 %v1648, %v1767
      %v1832 = vadd.f32 %v1697, %v1768
      %v1833 = vadd.f32 %v1651, %v1769
      %v1834 = vadd.f32 %v1700, %v1770
      %v1835 = vadd.f32 %v1653, %v1771
      %v1836 = vadd.f32 %v1702, %v1772
      %v1837 = vadd.f32 %v1656, %v1773
      %v1838 = vadd.f32 %v1705, %v1774
      %v1839 = vadd.f32 %v1658, %v1775
      %v1840 = vadd.f32 %v1707, %v1776
      %v1841 = vld [vmem:[%s5 + $0x4] sm:$0x3]
      %v1843 = vperm.slane %v1841, 0
      %v1844 = vperm.slane %v1841, 1
      %v1847 = vadd.f32 %v1809, %v1843
      %v1848 = vadd.f32 %v1810, %v1844
      %v1849 = vadd.f32 %v1811, %v1843
      %v1850 = vadd.f32 %v1812, %v1844
      %v1851 = vadd.f32 %v1813, %v1843
      %v1852 = vadd.f32 %v1814, %v1844
      %v1853 = vadd.f32 %v1815, %v1843
      %v1854 = vadd.f32 %v1816, %v1844
      %v1855 = vadd.f32 %v1817, %v1843
      %v1856 = vadd.f32 %v1818, %v1844
      %v1857 = vadd.f32 %v1819, %v1843
      %v1858 = vadd.f32 %v1820, %v1844
      %v1859 = vadd.f32 %v1821, %v1843
      %v1860 = vadd.f32 %v1822, %v1844
      %v1861 = vadd.f32 %v1823, %v1843
      %v1862 = vadd.f32 %v1824, %v1844
      %v1863 = vadd.f32 %v1825, %v1843
      %v1864 = vadd.f32 %v1826, %v1844
      %v1865 = vadd.f32 %v1827, %v1843
      %v1866 = vadd.f32 %v1828, %v1844
      %v1867 = vadd.f32 %v1829, %v1843
      %v1868 = vadd.f32 %v1830, %v1844
      %v1869 = vadd.f32 %v1831, %v1843
      %v1870 = vadd.f32 %v1832, %v1844
      %v1871 = vadd.f32 %v1833, %v1843
      %v1872 = vadd.f32 %v1834, %v1844
      %v1873 = vadd.f32 %v1835, %v1843
      %v1874 = vadd.f32 %v1836, %v1844
      %v1875 = vadd.f32 %v1837, %v1843
      %v1876 = vadd.f32 %v1838, %v1844
      %v1877 = vadd.f32 %v1839, %v1843
      %v1878 = vadd.f32 %v1840, %v1844
      %vm1879 = vcmp.ge.f32.partialorder %v1847, 0.0
      %vm1880 = vcmp.ge.f32.partialorder %v1848, 0.0
      %vm1881 = vcmp.ge.f32.partialorder %v1849, 0.0
      %vm1882 = vcmp.ge.f32.partialorder %v1850, 0.0
      %vm1883 = vcmp.ge.f32.partialorder %v1851, 0.0
      %vm1884 = vcmp.ge.f32.partialorder %v1852, 0.0
      %vm1885 = vcmp.ge.f32.partialorder %v1853, 0.0
      %vm1886 = vcmp.ge.f32.partialorder %v1854, 0.0
      %vm1887 = vcmp.ge.f32.partialorder %v1855, 0.0
      %vm1888 = vcmp.ge.f32.partialorder %v1856, 0.0
      %vm1889 = vcmp.ge.f32.partialorder %v1857, 0.0
      %vm1890 = vcmp.ge.f32.partialorder %v1858, 0.0
      %vm1891 = vcmp.ge.f32.partialorder %v1859, 0.0
      %vm1892 = vcmp.ge.f32.partialorder %v1860, 0.0
      %vm1893 = vcmp.ge.f32.partialorder %v1861, 0.0
      %vm1894 = vcmp.ge.f32.partialorder %v1862, 0.0
      %vm1895 = vcmp.ge.f32.partialorder %v1863, 0.0
      %vm1896 = vcmp.ge.f32.partialorder %v1864, 0.0
      %vm1897 = vcmp.ge.f32.partialorder %v1865, 0.0
      %vm1898 = vcmp.ge.f32.partialorder %v1866, 0.0
      %vm1899 = vcmp.ge.f32.partialorder %v1867, 0.0
      %vm1900 = vcmp.ge.f32.partialorder %v1868, 0.0
      %vm1901 = vcmp.ge.f32.partialorder %v1869, 0.0
      %vm1902 = vcmp.ge.f32.partialorder %v1870, 0.0
      %vm1903 = vcmp.ge.f32.partialorder %v1871, 0.0
      %vm1904 = vcmp.ge.f32.partialorder %v1872, 0.0
      %vm1905 = vcmp.ge.f32.partialorder %v1873, 0.0
      %vm1906 = vcmp.ge.f32.partialorder %v1874, 0.0
      %vm1907 = vcmp.ge.f32.partialorder %v1875, 0.0
      %vm1908 = vcmp.ge.f32.partialorder %v1876, 0.0
      %vm1909 = vcmp.ge.f32.partialorder %v1877, 0.0
      %vm1910 = vcmp.ge.f32.partialorder %v1878, 0.0
      %v1911 = vmul.f32 %v1847, 0.2
      %v1912 = vmul.f32 %v1848, 0.2
      %v1913 = vmul.f32 %v1849, 0.2
      %v1914 = vmul.f32 %v1850, 0.2
      %v1915 = vmul.f32 %v1851, 0.2
      %v1916 = vmul.f32 %v1852, 0.2
      %v1917 = vmul.f32 %v1853, 0.2
      %v1918 = vmul.f32 %v1854, 0.2
      %v1919 = vmul.f32 %v1855, 0.2
      %v1920 = vmul.f32 %v1856, 0.2
      %v1921 = vmul.f32 %v1857, 0.2
      %v1922 = vmul.f32 %v1858, 0.2
      %v1923 = vmul.f32 %v1859, 0.2
      %v1924 = vmul.f32 %v1860, 0.2
      %v1925 = vmul.f32 %v1861, 0.2
      %v1926 = vmul.f32 %v1862, 0.2
      %v1927 = vmul.f32 %v1863, 0.2
      %v1928 = vmul.f32 %v1864, 0.2
      %v1929 = vmul.f32 %v1865, 0.2
      %v1930 = vmul.f32 %v1866, 0.2
      %v1931 = vmul.f32 %v1867, 0.2
      %v1932 = vmul.f32 %v1868, 0.2
      %v1933 = vmul.f32 %v1869, 0.2
      %v1934 = vmul.f32 %v1870, 0.2
      %v1935 = vmul.f32 %v1871, 0.2
      %v1936 = vmul.f32 %v1872, 0.2
      %v1937 = vmul.f32 %v1873, 0.2
      %v1938 = vmul.f32 %v1874, 0.2
      %v1939 = vmul.f32 %v1875, 0.2
      %v1940 = vmul.f32 %v1876, 0.2
      %v1941 = vmul.f32 %v1877, 0.2
      %v1942 = vmul.f32 %v1878, 0.2
      %v1943 = vsel %vm1879, %v1847, %v1911
      %v1944 = vsel %vm1880, %v1848, %v1912
      %v1945 = vsel %vm1881, %v1849, %v1913
      %v1946 = vsel %vm1882, %v1850, %v1914
      %v1947 = vsel %vm1883, %v1851, %v1915
      %v1948 = vsel %vm1884, %v1852, %v1916
      %v1949 = vsel %vm1885, %v1853, %v1917
      %v1950 = vsel %vm1886, %v1854, %v1918
      %v1951 = vsel %vm1887, %v1855, %v1919
      %v1952 = vsel %vm1888, %v1856, %v1920
      %v1953 = vsel %vm1889, %v1857, %v1921
      %v1954 = vsel %vm1890, %v1858, %v1922
      %v1955 = vsel %vm1891, %v1859, %v1923
      %v1956 = vsel %vm1892, %v1860, %v1924
      %v1957 = vsel %vm1893, %v1861, %v1925
      %v1958 = vsel %vm1894, %v1862, %v1926
      %v1959 = vsel %vm1895, %v1863, %v1927
      %v1960 = vsel %vm1896, %v1864, %v1928
      %v1961 = vsel %vm1897, %v1865, %v1929
      %v1962 = vsel %vm1898, %v1866, %v1930
      %v1963 = vsel %vm1899, %v1867, %v1931
      %v1964 = vsel %vm1900, %v1868, %v1932
      %v1965 = vsel %vm1901, %v1869, %v1933
      %v1966 = vsel %vm1902, %v1870, %v1934
      %v1967 = vsel %vm1903, %v1871, %v1935
      %v1968 = vsel %vm1904, %v1872, %v1936
      %v1969 = vsel %vm1905, %v1873, %v1937
      %v1970 = vsel %vm1906, %v1874, %v1938
      %v1971 = vsel %vm1907, %v1875, %v1939
      %v1972 = vsel %vm1908, %v1876, %v1940
      %v1973 = vsel %vm1909, %v1877, %v1941
      %v1974 = vsel %vm1910, %v1878, %v1942
      %v1975 = vld [vmem:[%s6 + $0x4] sm:$0x3]
      %v1977 = vperm.slane %v1975, 0
      %v1978 = vperm.slane %v1975, 1
      %v1981 = vmul.f32 %v1943, %v1977
      %v1982 = vmul.f32 %v1944, %v1978
      %v1983 = vmul.f32 %v1945, %v1977
      %v1984 = vmul.f32 %v1946, %v1978
      %v1985 = vmul.f32 %v1947, %v1977
      %v1986 = vmul.f32 %v1948, %v1978
      %v1987 = vmul.f32 %v1949, %v1977
      %v1988 = vmul.f32 %v1950, %v1978
      %v1989 = vmul.f32 %v1951, %v1977
      %v1990 = vmul.f32 %v1952, %v1978
      %v1991 = vmul.f32 %v1953, %v1977
      %v1992 = vmul.f32 %v1954, %v1978
      %v1993 = vmul.f32 %v1955, %v1977
      %v1994 = vmul.f32 %v1956, %v1978
      %v1995 = vmul.f32 %v1957, %v1977
      %v1996 = vmul.f32 %v1958, %v1978
      %v1997 = vmul.f32 %v1959, %v1977
      %v1998 = vmul.f32 %v1960, %v1978
      %v1999 = vmul.f32 %v1961, %v1977
      %v2000 = vmul.f32 %v1962, %v1978
      %v2001 = vmul.f32 %v1963, %v1977
      %v2002 = vmul.f32 %v1964, %v1978
      %v2003 = vmul.f32 %v1965, %v1977
      %v2004 = vmul.f32 %v1966, %v1978
      %v2005 = vmul.f32 %v1967, %v1977
      %v2006 = vmul.f32 %v1968, %v1978
      %v2007 = vmul.f32 %v1969, %v1977
      %v2008 = vmul.f32 %v1970, %v1978
      %v2009 = vmul.f32 %v1971, %v1977
      %v2010 = vmul.f32 %v1972, %v1978
      %v2011 = vmul.f32 %v1973, %v1977
      %v2012 = vmul.f32 %v1974, %v1978
      %v2013 = vadd.f32 %v1981, %v1982
      %2014 = vadd.xlane.f32.xlu0 %v2013
      %v2015 = vpop.xlane.xlu0 %2014
      %v2016 = vadd.f32 %v1983, %v1984
      %2017 = vadd.xlane.f32.xlu0 %v2016
      %v2018 = vpop.xlane.xlu0 %2017
      %v2019 = vadd.f32 %v1985, %v1986
      %2020 = vadd.xlane.f32.xlu0 %v2019
      %v2021 = vpop.xlane.xlu0 %2020
      %v2022 = vadd.f32 %v1987, %v1988
      %2023 = vadd.xlane.f32.xlu0 %v2022
      %v2024 = vpop.xlane.xlu0 %2023
      %v2025 = vadd.f32 %v1989, %v1990
      %2026 = vadd.xlane.f32.xlu0 %v2025
      %v2027 = vpop.xlane.xlu0 %2026
      %v2028 = vadd.f32 %v1991, %v1992
      %2029 = vadd.xlane.f32.xlu0 %v2028
      %v2030 = vpop.xlane.xlu0 %2029
      %v2031 = vadd.f32 %v1993, %v1994
      %2032 = vadd.xlane.f32.xlu0 %v2031
      %v2033 = vpop.xlane.xlu0 %2032
      %v2034 = vadd.f32 %v1995, %v1996
      %2035 = vadd.xlane.f32.xlu0 %v2034
      %v2036 = vpop.xlane.xlu0 %2035
      %v2037 = vadd.f32 %v1997, %v1998
      %2038 = vadd.xlane.f32.xlu0 %v2037
      %v2039 = vpop.xlane.xlu0 %2038
      %v2040 = vadd.f32 %v1999, %v2000
      %2041 = vadd.xlane.f32.xlu0 %v2040
      %v2042 = vpop.xlane.xlu0 %2041
      %v2043 = vadd.f32 %v2001, %v2002
      %2044 = vadd.xlane.f32.xlu0 %v2043
      %v2045 = vpop.xlane.xlu0 %2044
      %v2046 = vadd.f32 %v2003, %v2004
      %2047 = vadd.xlane.f32.xlu0 %v2046
      %v2048 = vpop.xlane.xlu0 %2047
      %v2049 = vadd.f32 %v2005, %v2006
      %2050 = vadd.xlane.f32.xlu0 %v2049
      %v2051 = vpop.xlane.xlu0 %2050
      %v2052 = vadd.f32 %v2007, %v2008
      %2053 = vadd.xlane.f32.xlu0 %v2052
      %v2054 = vpop.xlane.xlu0 %2053
      %v2055 = vadd.f32 %v2009, %v2010
      %2056 = vadd.xlane.f32.xlu0 %v2055
      %v2057 = vpop.xlane.xlu0 %2056
      %v2058 = vadd.f32 %v2011, %v2012
      %2059 = vadd.xlane.f32.xlu0 %v2058
      %v2060 = vpop.xlane.xlu0 %2059
      %v2061 = vadd.f32 %v1539, %v2015
      %v2062 = vadd.f32 %v1540, %v2018
      %v2063 = vadd.f32 %v1541, %v2021
      %v2064 = vadd.f32 %v1542, %v2024
      %v2065 = vadd.f32 %v1543, %v2027
      %v2066 = vadd.f32 %v1544, %v2030
      %v2067 = vadd.f32 %v1545, %v2033
      %v2068 = vadd.f32 %v1546, %v2036
      %v2069 = vadd.f32 %v1547, %v2039
      %v2070 = vadd.f32 %v1548, %v2042
      %v2071 = vadd.f32 %v1549, %v2045
      %v2072 = vadd.f32 %v1550, %v2048
      %v2073 = vadd.f32 %v1551, %v2051
      %v2074 = vadd.f32 %v1552, %v2054
      %v2075 = vadd.f32 %v1553, %v2057
      %v2076 = vadd.f32 %v1554, %v2060
      %v2077 = vld [vmem:[%s3 + $0x18] sm:$0xff]
      %v2079 = vunpack.c.l.b16 %v2077
      %v2080 = vunpack.c.h.b16 %v2077
      %v2081 = vpack.c.b16 %v2079, %v2079
      %v2082 = vpack.c.b16 %v2080, %v2080
      %v2084 = vsel %vm442, %v2081, 0
      %v2087 = vsel %vm442, %v2082, 0
      %2089 = vmatpush.bf16.msra.mxu0 0
      %2090 = vmatpush.bf16.msra.mxu0 0
      %2091 = vmatpush.bf16.msra.mxu0 0
      %2092 = vmatpush.bf16.msra.mxu0 0
      %2093 = vmatpush.bf16.msra.mxu0 0
      %2094 = vmatpush.bf16.msra.mxu0 0
      %2095 = vmatpush.bf16.msra.mxu0 0
      %2096 = vmatpush.bf16.msra.mxu0 %v2084
      %2097 = vmatmul.bf16.gmra.mxu0 %v440
      %v2098 = vpop.f32.mrf.mxu0
      %v2099 = vadd.f32 0.0, %v2098
      %v2100 = vpop.f32.mrf.mxu0
      %v2101 = vadd.f32 0.0, %v2100
      %2102 = vdwg.mxu0
      %2103 = vmatpush.bf16.msra.mxu0 0
      %2104 = vmatpush.bf16.msra.mxu0 0
      %2105 = vmatpush.bf16.msra.mxu0 0
      %2106 = vmatpush.bf16.msra.mxu0 0
      %2107 = vmatpush.bf16.msra.mxu0 0
      %2108 = vmatpush.bf16.msra.mxu0 0
      %2109 = vmatpush.bf16.msra.mxu0 0
      %2110 = vmatpush.bf16.msra.mxu0 %v2087
      %2111 = vmatmul.bf16.gmra.mxu0 %v440
      %v2112 = vpop.f32.mrf.mxu0
      %v2113 = vadd.f32 0.0, %v2112
      %v2114 = vpop.f32.mrf.mxu0
      %v2115 = vadd.f32 0.0, %v2114
      %2116 = vdwg.mxu0
      %v2117 = vld [vmem:[%s4 + $0x18] sm:$0xff]
      %v2118 = vld [vmem:[%s4 + $0x38] sm:$0x33]
      %v2121 = vunpack.c.l.b16 %v2117
      %v2122 = vunpack.c.h.b16 %v2117
      %v2123 = vunpack.c.l.b16 %v2118
      %v2124 = vunpack.c.h.b16 %v2118
      %v2125 = vpack.c.b16 %v2123, %v2121
      %v2126 = vpack.c.b16 %v2124, %v2122
      %v2128 = vsel %vm552, %v2125, 0
      %v2131 = vsel %vm552, %v2126, 0
      %2133 = vmatpush.bf16.msra.mxu0 0
      %2134 = vmatpush.bf16.msra.mxu0 0
      %2135 = vmatpush.bf16.msra.mxu0 0
      %2136 = vmatpush.bf16.msra.mxu0 0
      %2137 = vmatpush.bf16.msra.mxu0 0
      %2138 = vmatpush.bf16.msra.mxu0 0
      %2139 = vmatpush.bf16.msra.mxu0 0
      %2140 = vmatpush.bf16.msra.mxu0 %v2128
      %2141 = vmatmul.bf16.gmra.mxu0 %v529
      %v2142 = vpop.f32.mrf.mxu0
      %v2143 = vadd.f32 0.0, %v2142
      %v2144 = vpop.f32.mrf.mxu0
      %v2145 = vadd.f32 0.0, %v2144
      %2146 = vmatmul.bf16.gmra.mxu0 %v532
      %v2147 = vpop.f32.mrf.mxu0
      %v2148 = vadd.f32 0.0, %v2147
      %v2149 = vpop.f32.mrf.mxu0
      %v2150 = vadd.f32 0.0, %v2149
      %2151 = vmatmul.bf16.gmra.mxu0 %v535
      %v2152 = vpop.f32.mrf.mxu0
      %v2153 = vadd.f32 0.0, %v2152
      %v2154 = vpop.f32.mrf.mxu0
      %v2155 = vadd.f32 0.0, %v2154
      %2156 = vmatmul.bf16.gmra.mxu0 %v538
      %v2157 = vpop.f32.mrf.mxu0
      %v2158 = vadd.f32 0.0, %v2157
      %v2159 = vpop.f32.mrf.mxu0
      %v2160 = vadd.f32 0.0, %v2159
      %2161 = vmatmul.bf16.gmra.mxu0 %v541
      %v2162 = vpop.f32.mrf.mxu0
      %v2163 = vadd.f32 0.0, %v2162
      %v2164 = vpop.f32.mrf.mxu0
      %v2165 = vadd.f32 0.0, %v2164
      %2166 = vmatmul.bf16.gmra.mxu0 %v544
      %v2167 = vpop.f32.mrf.mxu0
      %v2168 = vadd.f32 0.0, %v2167
      %v2169 = vpop.f32.mrf.mxu0
      %v2170 = vadd.f32 0.0, %v2169
      %2171 = vmatmul.bf16.gmra.mxu0 %v547
      %v2172 = vpop.f32.mrf.mxu0
      %v2173 = vadd.f32 0.0, %v2172
      %v2174 = vpop.f32.mrf.mxu0
      %v2175 = vadd.f32 0.0, %v2174
      %2176 = vmatmul.bf16.gmra.mxu0 %v550
      %v2177 = vpop.f32.mrf.mxu0
      %v2178 = vadd.f32 0.0, %v2177
      %v2179 = vpop.f32.mrf.mxu0
      %v2180 = vadd.f32 0.0, %v2179
      %2181 = vdwg.mxu0
      %2182 = vmatpush.bf16.msra.mxu0 0
      %2183 = vmatpush.bf16.msra.mxu0 0
      %2184 = vmatpush.bf16.msra.mxu0 0
      %2185 = vmatpush.bf16.msra.mxu0 0
      %2186 = vmatpush.bf16.msra.mxu0 0
      %2187 = vmatpush.bf16.msra.mxu0 0
      %2188 = vmatpush.bf16.msra.mxu0 0
      %2189 = vmatpush.bf16.msra.mxu0 %v2131
      %2190 = vmatmul.bf16.gmra.mxu0 %v529
      %v2191 = vpop.f32.mrf.mxu0
      %v2192 = vadd.f32 0.0, %v2191
      %v2193 = vpop.f32.mrf.mxu0
      %v2194 = vadd.f32 0.0, %v2193
      %2195 = vmatmul.bf16.gmra.mxu0 %v532
      %v2196 = vpop.f32.mrf.mxu0
      %v2197 = vadd.f32 0.0, %v2196
      %v2198 = vpop.f32.mrf.mxu0
      %v2199 = vadd.f32 0.0, %v2198
      %2200 = vmatmul.bf16.gmra.mxu0 %v535
      %v2201 = vpop.f32.mrf.mxu0
      %v2202 = vadd.f32 0.0, %v2201
      %v2203 = vpop.f32.mrf.mxu0
      %v2204 = vadd.f32 0.0, %v2203
      %2205 = vmatmul.bf16.gmra.mxu0 %v538
      %v2206 = vpop.f32.mrf.mxu0
      %v2207 = vadd.f32 0.0, %v2206
      %v2208 = vpop.f32.mrf.mxu0
      %v2209 = vadd.f32 0.0, %v2208
      %2210 = vmatmul.bf16.gmra.mxu0 %v541
      %v2211 = vpop.f32.mrf.mxu0
      %v2212 = vadd.f32 0.0, %v2211
      %v2213 = vpop.f32.mrf.mxu0
      %v2214 = vadd.f32 0.0, %v2213
      %2215 = vmatmul.bf16.gmra.mxu0 %v544
      %v2216 = vpop.f32.mrf.mxu0
      %v2217 = vadd.f32 0.0, %v2216
      %v2218 = vpop.f32.mrf.mxu0
      %v2219 = vadd.f32 0.0, %v2218
      %2220 = vmatmul.bf16.gmra.mxu0 %v547
      %v2221 = vpop.f32.mrf.mxu0
      %v2222 = vadd.f32 0.0, %v2221
      %v2223 = vpop.f32.mrf.mxu0
      %v2224 = vadd.f32 0.0, %v2223
      %2225 = vmatmul.bf16.gmra.mxu0 %v550
      %v2226 = vpop.f32.mrf.mxu0
      %v2227 = vadd.f32 0.0, %v2226
      %v2228 = vpop.f32.mrf.mxu0
      %v2229 = vadd.f32 0.0, %v2228
      %2230 = vdwg.mxu0
      %v2235 = vrot.slane %v2113, 7
      %v2236 = vrot.slane %v2115, 7
      %v2237 = vsel %vm663, %v2099, %v2235
      %v2238 = vsel %vm665, %v2099, %v2235
      %v2239 = vrot.slane %v2238, 1
      %v2240 = vsel %vm668, %v2099, %v2235
      %v2241 = vrot.slane %v2240, 2
      %v2242 = vsel %vm671, %v2099, %v2235
      %v2243 = vrot.slane %v2242, 3
      %v2244 = vsel %vm674, %v2099, %v2235
      %v2245 = vrot.slane %v2244, 4
      %v2246 = vsel %vm677, %v2099, %v2235
      %v2247 = vrot.slane %v2246, 5
      %v2248 = vsel %vm680, %v2099, %v2235
      %v2249 = vrot.slane %v2248, 6
      %v2250 = vsel %vm683, %v2235, %v2099
      %v2251 = vrot.slane %v2250, 7
      %v2252 = vsel %vm663, %v2101, %v2236
      %v2253 = vsel %vm665, %v2101, %v2236
      %v2254 = vrot.slane %v2253, 1
      %v2255 = vsel %vm668, %v2101, %v2236
      %v2256 = vrot.slane %v2255, 2
      %v2257 = vsel %vm671, %v2101, %v2236
      %v2258 = vrot.slane %v2257, 3
      %v2259 = vsel %vm674, %v2101, %v2236
      %v2260 = vrot.slane %v2259, 4
      %v2261 = vsel %vm677, %v2101, %v2236
      %v2262 = vrot.slane %v2261, 5
      %v2263 = vsel %vm680, %v2101, %v2236
      %v2264 = vrot.slane %v2263, 6
      %v2265 = vsel %vm683, %v2236, %v2101
      %v2266 = vrot.slane %v2265, 7
      %v2267 = vperm.slane %v2237, 0
      %v2268 = vperm.slane %v2237, 1
      %v2269 = vperm.slane %v2239, 0
      %v2270 = vperm.slane %v2239, 1
      %v2271 = vperm.slane %v2241, 0
      %v2272 = vperm.slane %v2241, 1
      %v2273 = vperm.slane %v2243, 0
      %v2274 = vperm.slane %v2243, 1
      %v2275 = vperm.slane %v2245, 0
      %v2276 = vperm.slane %v2245, 1
      %v2277 = vperm.slane %v2247, 0
      %v2278 = vperm.slane %v2247, 1
      %v2279 = vperm.slane %v2249, 0
      %v2280 = vperm.slane %v2249, 1
      %v2281 = vperm.slane %v2251, 0
      %v2282 = vperm.slane %v2251, 1
      %v2283 = vperm.slane %v2252, 0
      %v2284 = vperm.slane %v2252, 1
      %v2285 = vperm.slane %v2254, 0
      %v2286 = vperm.slane %v2254, 1
      %v2287 = vperm.slane %v2256, 0
      %v2288 = vperm.slane %v2256, 1
      %v2289 = vperm.slane %v2258, 0
      %v2290 = vperm.slane %v2258, 1
      %v2291 = vperm.slane %v2260, 0
      %v2292 = vperm.slane %v2260, 1
      %v2293 = vperm.slane %v2262, 0
      %v2294 = vperm.slane %v2262, 1
      %v2295 = vperm.slane %v2264, 0
      %v2296 = vperm.slane %v2264, 1
      %v2297 = vperm.slane %v2266, 0
      %v2298 = vperm.slane %v2266, 1
      %v2331 = vadd.f32 %v2143, %v2267
      %v2332 = vadd.f32 %v2192, %v2268
      %v2333 = vadd.f32 %v2145, %v2269
      %v2334 = vadd.f32 %v2194, %v2270
      %v2335 = vadd.f32 %v2148, %v2271
      %v2336 = vadd.f32 %v2197, %v2272
      %v2337 = vadd.f32 %v2150, %v2273
      %v2338 = vadd.f32 %v2199, %v2274
      %v2339 = vadd.f32 %v2153, %v2275
      %v2340 = vadd.f32 %v2202, %v2276
      %v2341 = vadd.f32 %v2155, %v2277
      %v2342 = vadd.f32 %v2204, %v2278
      %v2343 = vadd.f32 %v2158, %v2279
      %v2344 = vadd.f32 %v2207, %v2280
      %v2345 = vadd.f32 %v2160, %v2281
      %v2346 = vadd.f32 %v2209, %v2282
      %v2347 = vadd.f32 %v2163, %v2283
      %v2348 = vadd.f32 %v2212, %v2284
      %v2349 = vadd.f32 %v2165, %v2285
      %v2350 = vadd.f32 %v2214, %v2286
      %v2351 = vadd.f32 %v2168, %v2287
      %v2352 = vadd.f32 %v2217, %v2288
      %v2353 = vadd.f32 %v2170, %v2289
      %v2354 = vadd.f32 %v2219, %v2290
      %v2355 = vadd.f32 %v2173, %v2291
      %v2356 = vadd.f32 %v2222, %v2292
      %v2357 = vadd.f32 %v2175, %v2293
      %v2358 = vadd.f32 %v2224, %v2294
      %v2359 = vadd.f32 %v2178, %v2295
      %v2360 = vadd.f32 %v2227, %v2296
      %v2361 = vadd.f32 %v2180, %v2297
      %v2362 = vadd.f32 %v2229, %v2298
      %v2363 = vld [vmem:[%s5 + $0x6] sm:$0x3]
      %v2365 = vperm.slane %v2363, 0
      %v2366 = vperm.slane %v2363, 1
      %v2369 = vadd.f32 %v2331, %v2365
      %v2370 = vadd.f32 %v2332, %v2366
      %v2371 = vadd.f32 %v2333, %v2365
      %v2372 = vadd.f32 %v2334, %v2366
      %v2373 = vadd.f32 %v2335, %v2365
      %v2374 = vadd.f32 %v2336, %v2366
      %v2375 = vadd.f32 %v2337, %v2365
      %v2376 = vadd.f32 %v2338, %v2366
      %v2377 = vadd.f32 %v2339, %v2365
      %v2378 = vadd.f32 %v2340, %v2366
      %v2379 = vadd.f32 %v2341, %v2365
      %v2380 = vadd.f32 %v2342, %v2366
      %v2381 = vadd.f32 %v2343, %v2365
      %v2382 = vadd.f32 %v2344, %v2366
      %v2383 = vadd.f32 %v2345, %v2365
      %v2384 = vadd.f32 %v2346, %v2366
      %v2385 = vadd.f32 %v2347, %v2365
      %v2386 = vadd.f32 %v2348, %v2366
      %v2387 = vadd.f32 %v2349, %v2365
      %v2388 = vadd.f32 %v2350, %v2366
      %v2389 = vadd.f32 %v2351, %v2365
      %v2390 = vadd.f32 %v2352, %v2366
      %v2391 = vadd.f32 %v2353, %v2365
      %v2392 = vadd.f32 %v2354, %v2366
      %v2393 = vadd.f32 %v2355, %v2365
      %v2394 = vadd.f32 %v2356, %v2366
      %v2395 = vadd.f32 %v2357, %v2365
      %v2396 = vadd.f32 %v2358, %v2366
      %v2397 = vadd.f32 %v2359, %v2365
      %v2398 = vadd.f32 %v2360, %v2366
      %v2399 = vadd.f32 %v2361, %v2365
      %v2400 = vadd.f32 %v2362, %v2366
      %vm2401 = vcmp.ge.f32.partialorder %v2369, 0.0
      %vm2402 = vcmp.ge.f32.partialorder %v2370, 0.0
      %vm2403 = vcmp.ge.f32.partialorder %v2371, 0.0
      %vm2404 = vcmp.ge.f32.partialorder %v2372, 0.0
      %vm2405 = vcmp.ge.f32.partialorder %v2373, 0.0
      %vm2406 = vcmp.ge.f32.partialorder %v2374, 0.0
      %vm2407 = vcmp.ge.f32.partialorder %v2375, 0.0
      %vm2408 = vcmp.ge.f32.partialorder %v2376, 0.0
      %vm2409 = vcmp.ge.f32.partialorder %v2377, 0.0
      %vm2410 = vcmp.ge.f32.partialorder %v2378, 0.0
      %vm2411 = vcmp.ge.f32.partialorder %v2379, 0.0
      %vm2412 = vcmp.ge.f32.partialorder %v2380, 0.0
      %vm2413 = vcmp.ge.f32.partialorder %v2381, 0.0
      %vm2414 = vcmp.ge.f32.partialorder %v2382, 0.0
      %vm2415 = vcmp.ge.f32.partialorder %v2383, 0.0
      %vm2416 = vcmp.ge.f32.partialorder %v2384, 0.0
      %vm2417 = vcmp.ge.f32.partialorder %v2385, 0.0
      %vm2418 = vcmp.ge.f32.partialorder %v2386, 0.0
      %vm2419 = vcmp.ge.f32.partialorder %v2387, 0.0
      %vm2420 = vcmp.ge.f32.partialorder %v2388, 0.0
      %vm2421 = vcmp.ge.f32.partialorder %v2389, 0.0
      %vm2422 = vcmp.ge.f32.partialorder %v2390, 0.0
      %vm2423 = vcmp.ge.f32.partialorder %v2391, 0.0
      %vm2424 = vcmp.ge.f32.partialorder %v2392, 0.0
      %vm2425 = vcmp.ge.f32.partialorder %v2393, 0.0
      %vm2426 = vcmp.ge.f32.partialorder %v2394, 0.0
      %vm2427 = vcmp.ge.f32.partialorder %v2395, 0.0
      %vm2428 = vcmp.ge.f32.partialorder %v2396, 0.0
      %vm2429 = vcmp.ge.f32.partialorder %v2397, 0.0
      %vm2430 = vcmp.ge.f32.partialorder %v2398, 0.0
      %vm2431 = vcmp.ge.f32.partialorder %v2399, 0.0
      %vm2432 = vcmp.ge.f32.partialorder %v2400, 0.0
      %v2433 = vmul.f32 %v2369, 0.2
      %v2434 = vmul.f32 %v2370, 0.2
      %v2435 = vmul.f32 %v2371, 0.2
      %v2436 = vmul.f32 %v2372, 0.2
      %v2437 = vmul.f32 %v2373, 0.2
      %v2438 = vmul.f32 %v2374, 0.2
      %v2439 = vmul.f32 %v2375, 0.2
      %v2440 = vmul.f32 %v2376, 0.2
      %v2441 = vmul.f32 %v2377, 0.2
      %v2442 = vmul.f32 %v2378, 0.2
      %v2443 = vmul.f32 %v2379, 0.2
      %v2444 = vmul.f32 %v2380, 0.2
      %v2445 = vmul.f32 %v2381, 0.2
      %v2446 = vmul.f32 %v2382, 0.2
      %v2447 = vmul.f32 %v2383, 0.2
      %v2448 = vmul.f32 %v2384, 0.2
      %v2449 = vmul.f32 %v2385, 0.2
      %v2450 = vmul.f32 %v2386, 0.2
      %v2451 = vmul.f32 %v2387, 0.2
      %v2452 = vmul.f32 %v2388, 0.2
      %v2453 = vmul.f32 %v2389, 0.2
      %v2454 = vmul.f32 %v2390, 0.2
      %v2455 = vmul.f32 %v2391, 0.2
      %v2456 = vmul.f32 %v2392, 0.2
      %v2457 = vmul.f32 %v2393, 0.2
      %v2458 = vmul.f32 %v2394, 0.2
      %v2459 = vmul.f32 %v2395, 0.2
      %v2460 = vmul.f32 %v2396, 0.2
      %v2461 = vmul.f32 %v2397, 0.2
      %v2462 = vmul.f32 %v2398, 0.2
      %v2463 = vmul.f32 %v2399, 0.2
      %v2464 = vmul.f32 %v2400, 0.2
      %v2465 = vsel %vm2401, %v2369, %v2433
      %v2466 = vsel %vm2402, %v2370, %v2434
      %v2467 = vsel %vm2403, %v2371, %v2435
      %v2468 = vsel %vm2404, %v2372, %v2436
      %v2469 = vsel %vm2405, %v2373, %v2437
      %v2470 = vsel %vm2406, %v2374, %v2438
      %v2471 = vsel %vm2407, %v2375, %v2439
      %v2472 = vsel %vm2408, %v2376, %v2440
      %v2473 = vsel %vm2409, %v2377, %v2441
      %v2474 = vsel %vm2410, %v2378, %v2442
      %v2475 = vsel %vm2411, %v2379, %v2443
      %v2476 = vsel %vm2412, %v2380, %v2444
      %v2477 = vsel %vm2413, %v2381, %v2445
      %v2478 = vsel %vm2414, %v2382, %v2446
      %v2479 = vsel %vm2415, %v2383, %v2447
      %v2480 = vsel %vm2416, %v2384, %v2448
      %v2481 = vsel %vm2417, %v2385, %v2449
      %v2482 = vsel %vm2418, %v2386, %v2450
      %v2483 = vsel %vm2419, %v2387, %v2451
      %v2484 = vsel %vm2420, %v2388, %v2452
      %v2485 = vsel %vm2421, %v2389, %v2453
      %v2486 = vsel %vm2422, %v2390, %v2454
      %v2487 = vsel %vm2423, %v2391, %v2455
      %v2488 = vsel %vm2424, %v2392, %v2456
      %v2489 = vsel %vm2425, %v2393, %v2457
      %v2490 = vsel %vm2426, %v2394, %v2458
      %v2491 = vsel %vm2427, %v2395, %v2459
      %v2492 = vsel %vm2428, %v2396, %v2460
      %v2493 = vsel %vm2429, %v2397, %v2461
      %v2494 = vsel %vm2430, %v2398, %v2462
      %v2495 = vsel %vm2431, %v2399, %v2463
      %v2496 = vsel %vm2432, %v2400, %v2464
      %v2497 = vld [vmem:[%s6 + $0x6] sm:$0x3]
      %v2499 = vperm.slane %v2497, 0
      %v2500 = vperm.slane %v2497, 1
      %v2503 = vmul.f32 %v2465, %v2499
      %v2504 = vmul.f32 %v2466, %v2500
      %v2505 = vmul.f32 %v2467, %v2499
      %v2506 = vmul.f32 %v2468, %v2500
      %v2507 = vmul.f32 %v2469, %v2499
      %v2508 = vmul.f32 %v2470, %v2500
      %v2509 = vmul.f32 %v2471, %v2499
      %v2510 = vmul.f32 %v2472, %v2500
      %v2511 = vmul.f32 %v2473, %v2499
      %v2512 = vmul.f32 %v2474, %v2500
      %v2513 = vmul.f32 %v2475, %v2499
      %v2514 = vmul.f32 %v2476, %v2500
      %v2515 = vmul.f32 %v2477, %v2499
      %v2516 = vmul.f32 %v2478, %v2500
      %v2517 = vmul.f32 %v2479, %v2499
      %v2518 = vmul.f32 %v2480, %v2500
      %v2519 = vmul.f32 %v2481, %v2499
      %v2520 = vmul.f32 %v2482, %v2500
      %v2521 = vmul.f32 %v2483, %v2499
      %v2522 = vmul.f32 %v2484, %v2500
      %v2523 = vmul.f32 %v2485, %v2499
      %v2524 = vmul.f32 %v2486, %v2500
      %v2525 = vmul.f32 %v2487, %v2499
      %v2526 = vmul.f32 %v2488, %v2500
      %v2527 = vmul.f32 %v2489, %v2499
      %v2528 = vmul.f32 %v2490, %v2500
      %v2529 = vmul.f32 %v2491, %v2499
      %v2530 = vmul.f32 %v2492, %v2500
      %v2531 = vmul.f32 %v2493, %v2499
      %v2532 = vmul.f32 %v2494, %v2500
      %v2533 = vmul.f32 %v2495, %v2499
      %v2534 = vmul.f32 %v2496, %v2500
      %v2535 = vadd.f32 %v2503, %v2504
      %2536 = vadd.xlane.f32.xlu0 %v2535
      %v2537 = vpop.xlane.xlu0 %2536
      %v2538 = vadd.f32 %v2505, %v2506
      %2539 = vadd.xlane.f32.xlu0 %v2538
      %v2540 = vpop.xlane.xlu0 %2539
      %v2541 = vadd.f32 %v2507, %v2508
      %2542 = vadd.xlane.f32.xlu0 %v2541
      %v2543 = vpop.xlane.xlu0 %2542
      %v2544 = vadd.f32 %v2509, %v2510
      %2545 = vadd.xlane.f32.xlu0 %v2544
      %v2546 = vpop.xlane.xlu0 %2545
      %v2547 = vadd.f32 %v2511, %v2512
      %2548 = vadd.xlane.f32.xlu0 %v2547
      %v2549 = vpop.xlane.xlu0 %2548
      %v2550 = vadd.f32 %v2513, %v2514
      %2551 = vadd.xlane.f32.xlu0 %v2550
      %v2552 = vpop.xlane.xlu0 %2551
      %v2553 = vadd.f32 %v2515, %v2516
      %2554 = vadd.xlane.f32.xlu0 %v2553
      %v2555 = vpop.xlane.xlu0 %2554
      %v2556 = vadd.f32 %v2517, %v2518
      %2557 = vadd.xlane.f32.xlu0 %v2556
      %v2558 = vpop.xlane.xlu0 %2557
      %v2559 = vadd.f32 %v2519, %v2520
      %2560 = vadd.xlane.f32.xlu0 %v2559
      %v2561 = vpop.xlane.xlu0 %2560
      %v2562 = vadd.f32 %v2521, %v2522
      %2563 = vadd.xlane.f32.xlu0 %v2562
      %v2564 = vpop.xlane.xlu0 %2563
      %v2565 = vadd.f32 %v2523, %v2524
      %2566 = vadd.xlane.f32.xlu0 %v2565
      %v2567 = vpop.xlane.xlu0 %2566
      %v2568 = vadd.f32 %v2525, %v2526
      %2569 = vadd.xlane.f32.xlu0 %v2568
      %v2570 = vpop.xlane.xlu0 %2569
      %v2571 = vadd.f32 %v2527, %v2528
      %2572 = vadd.xlane.f32.xlu0 %v2571
      %v2573 = vpop.xlane.xlu0 %2572
      %v2574 = vadd.f32 %v2529, %v2530
      %2575 = vadd.xlane.f32.xlu0 %v2574
      %v2576 = vpop.xlane.xlu0 %2575
      %v2577 = vadd.f32 %v2531, %v2532
      %2578 = vadd.xlane.f32.xlu0 %v2577
      %v2579 = vpop.xlane.xlu0 %2578
      %v2580 = vadd.f32 %v2533, %v2534
      %2581 = vadd.xlane.f32.xlu0 %v2580
      %v2582 = vpop.xlane.xlu0 %2581
      %v2583 = vadd.f32 %v2061, %v2537
      %v2584 = vadd.f32 %v2062, %v2540
      %v2585 = vadd.f32 %v2063, %v2543
      %v2586 = vadd.f32 %v2064, %v2546
      %v2587 = vadd.f32 %v2065, %v2549
      %v2588 = vadd.f32 %v2066, %v2552
      %v2589 = vadd.f32 %v2067, %v2555
      %v2590 = vadd.f32 %v2068, %v2558
      %v2591 = vadd.f32 %v2069, %v2561
      %v2592 = vadd.f32 %v2070, %v2564
      %v2593 = vadd.f32 %v2071, %v2567
      %v2594 = vadd.f32 %v2072, %v2570
      %v2595 = vadd.f32 %v2073, %v2573
      %v2596 = vadd.f32 %v2074, %v2576
      %v2597 = vadd.f32 %v2075, %v2579
      %v2598 = vadd.f32 %v2076, %v2582
      %s2599 = sld [smem:[#allocation2]]
      %v2600 = vstv %s2599
      %v2601 = vadd.f32 %v2583, %v2600
      %v2602 = vadd.f32 %v2584, %v2600
      %v2603 = vadd.f32 %v2585, %v2600
      %v2604 = vadd.f32 %v2586, %v2600
      %v2605 = vadd.f32 %v2587, %v2600
      %v2606 = vadd.f32 %v2588, %v2600
      %v2607 = vadd.f32 %v2589, %v2600
      %v2608 = vadd.f32 %v2590, %v2600
      %v2609 = vadd.f32 %v2591, %v2600
      %v2610 = vadd.f32 %v2592, %v2600
      %v2611 = vadd.f32 %v2593, %v2600
      %v2612 = vadd.f32 %v2594, %v2600
      %v2613 = vadd.f32 %v2595, %v2600
      %v2614 = vadd.f32 %v2596, %v2600
      %v2615 = vadd.f32 %v2597, %v2600
      %v2616 = vadd.f32 %v2598, %v2600
      %v2617 = vld [vmem:[%s400] sm:$0xff]
      %v2618 = vld [vmem:[%s400 + $0x8] sm:$0xff]
      %vm2619 = vcmp.gt.f32.partialorder %v2617, 0.5
      %vm2620 = vcmp.gt.f32.partialorder %v2618, 0.5
      %v2637 = vlaneseq
      %v2638 = vand.u32 %v2637, 127
      %v2639 = vperm.slane %v2601, %v2638
      %v2640 = vperm.slane %v2602, %v2638
      %v2641 = vperm.slane %v2603, %v2638
      %v2642 = vperm.slane %v2604, %v2638
      %v2643 = vperm.slane %v2605, %v2638
      %v2644 = vperm.slane %v2606, %v2638
      %v2645 = vperm.slane %v2607, %v2638
      %v2646 = vperm.slane %v2608, %v2638
      %v2647 = vperm.slane %v2609, %v2638
      %v2648 = vperm.slane %v2610, %v2638
      %v2649 = vperm.slane %v2611, %v2638
      %v2650 = vperm.slane %v2612, %v2638
      %v2651 = vperm.slane %v2613, %v2638
      %v2652 = vperm.slane %v2614, %v2638
      %v2653 = vperm.slane %v2615, %v2638
      %v2654 = vperm.slane %v2616, %v2638
      %v2655 = vsel %vm665, %v2640, %v2639
      %v2656 = vsel %vm668, %v2641, %v2655
      %v2657 = vsel %vm671, %v2642, %v2656
      %v2658 = vsel %vm674, %v2643, %v2657
      %v2659 = vsel %vm677, %v2644, %v2658
      %v2660 = vsel %vm680, %v2645, %v2659
      %vm2661 = vcmask 1047559
      %v2662 = vsel %vm2661, %v2646, %v2660
      %v2663 = vsel %vm665, %v2648, %v2647
      %v2664 = vsel %vm668, %v2649, %v2663
      %v2665 = vsel %vm671, %v2650, %v2664
      %v2666 = vsel %vm674, %v2651, %v2665
      %v2667 = vsel %vm677, %v2652, %v2666
      %v2668 = vsel %vm680, %v2653, %v2667
      %v2669 = vsel %vm2661, %v2654, %v2668
      %v2672 = vsel %vm2619, %v2662, -1000000.0
      %v2673 = vsel %vm2620, %v2669, -1000000.0
      %v2674 = vsel %vm438, %v2672, -inf
      %2675 = vmax.xlane.f32.xlu0 %v2674
      %v2676 = vpop.xlane.xlu0 %2675
      %v2677 = vsel %vm438, %v2673, -inf
      %2678 = vmax.xlane.f32.xlu0 %v2677
      %v2679 = vpop.xlane.xlu0 %2678
      %v2680 = vsub.f32 %v2672, %v2676
      %v2681 = vsub.f32 %v2673, %v2679
      %v2682 = vmul.f32 %v2680, 1.442695
      %v2683 = vpow.pop %v2682
      %v2684 = vmul.f32 %v2681, 1.442695
      %v2685 = vpow.pop %v2684
      %v2686 = vsel %vm438, %v2683, 0.0
      %2687 = vadd.xlane.f32.xlu0 %v2686
      %v2688 = vpop.xlane.xlu0 %2687
      %v2689 = vsel %vm438, %v2685, 0.0
      %2690 = vadd.xlane.f32.xlu0 %v2689
      %v2691 = vpop.xlane.xlu0 %2690
      %v2692 = vrcp.pop %v2688
      %v2693 = vmul.f32 %v2688, %v2692
      %v2694 = vsub.f32 1.0, %v2693
      %v2695 = vmul.f32 %v2692, %v2694
      %v2696 = vadd.f32 %v2692, %v2695
      %vm2697 = vweird.f32 %v2688
      %vm2698 = vweird.f32 %v2692
      %vm2699 = vmor %vm2697, %vm2698
      %v2700 = vsel %vm2699, %v2692, %v2696
      %v2701 = vand.u32 2147483647, %v2688
      %vm2702 = vcmp.eq.f32.partialorder %v2701, 8.507059e+37
      %v2703 = vand.u32 %v2688, 2147483648
      %v2704 = vor.u32 1.1754944e-38, %v2703
      %v2705 = vsel %vm2702, %v2704, %v2700
      %v2706 = vmul.f32 %v2683, %v2705
      %v2707 = vrcp.pop %v2691
      %v2708 = vmul.f32 %v2691, %v2707
      %v2709 = vsub.f32 1.0, %v2708
      %v2710 = vmul.f32 %v2707, %v2709
      %v2711 = vadd.f32 %v2707, %v2710
      %vm2712 = vweird.f32 %v2691
      %vm2713 = vweird.f32 %v2707
      %vm2714 = vmor %vm2712, %vm2713
      %v2715 = vsel %vm2714, %v2707, %v2711
      %v2716 = vand.u32 2147483647, %v2691
      %vm2717 = vcmp.eq.f32.partialorder %v2716, 8.507059e+37
      %v2718 = vand.u32 %v2691, 2147483648
      %v2719 = vor.u32 1.1754944e-38, %v2718
      %v2720 = vsel %vm2717, %v2719, %v2715
      %v2721 = vmul.f32 %v2685, %v2720
      %v2722 = vld [vmem:[%s7] sm:$0xf]
      %v2723 = vld [vmem:[%s7 + $0x4] sm:$0x3]
      %v2724 = vld [vmem:[%s8] sm:$0x1]
      %v2726 = vperm.slane %v2724, 0
      %v2730 = vunpack.c.l.b16 %v2722
      %v2731 = vunpack.c.l.b16 %v2723
      %v2732 = vpack.c.b16 %v2731, %v2730
      %v2734 = vsel %vm552, %v2732, 0
      %2736 = vmatpush.bf16.msra.mxu0 0
      %2737 = vmatpush.bf16.msra.mxu0 0
      %2738 = vmatpush.bf16.msra.mxu0 0
      %2739 = vmatpush.bf16.msra.mxu0 0
      %2740 = vmatpush.bf16.msra.mxu0 0
      %2741 = vmatpush.bf16.msra.mxu0 0
      %2742 = vmatpush.bf16.msra.mxu0 0
      %2743 = vmatpush.bf16.msra.mxu0 %v2734
      %2744 = vmatmul.bf16.gmra.mxu0 %v529
      %v2745 = vpop.f32.mrf.mxu0
      %v2746 = vadd.f32 %v2726, %v2745
      %v2747 = vpop.f32.mrf.mxu0
      %v2748 = vadd.f32 %v2726, %v2747
      %2749 = vmatmul.bf16.gmra.mxu0 %v532
      %v2750 = vpop.f32.mrf.mxu0
      %v2751 = vadd.f32 %v2726, %v2750
      %v2752 = vpop.f32.mrf.mxu0
      %v2753 = vadd.f32 %v2726, %v2752
      %2754 = vmatmul.bf16.gmra.mxu0 %v535
      %v2755 = vpop.f32.mrf.mxu0
      %v2756 = vadd.f32 %v2726, %v2755
      %v2757 = vpop.f32.mrf.mxu0
      %v2758 = vadd.f32 %v2726, %v2757
      %2759 = vmatmul.bf16.gmra.mxu0 %v538
      %v2760 = vpop.f32.mrf.mxu0
      %v2761 = vadd.f32 %v2726, %v2760
      %v2762 = vpop.f32.mrf.mxu0
      %v2763 = vadd.f32 %v2726, %v2762
      %2764 = vmatmul.bf16.gmra.mxu0 %v541
      %v2765 = vpop.f32.mrf.mxu0
      %v2766 = vadd.f32 %v2726, %v2765
      %v2767 = vpop.f32.mrf.mxu0
      %v2768 = vadd.f32 %v2726, %v2767
      %2769 = vmatmul.bf16.gmra.mxu0 %v544
      %v2770 = vpop.f32.mrf.mxu0
      %v2771 = vadd.f32 %v2726, %v2770
      %v2772 = vpop.f32.mrf.mxu0
      %v2773 = vadd.f32 %v2726, %v2772
      %2774 = vmatmul.bf16.gmra.mxu0 %v547
      %v2775 = vpop.f32.mrf.mxu0
      %v2776 = vadd.f32 %v2726, %v2775
      %v2777 = vpop.f32.mrf.mxu0
      %v2778 = vadd.f32 %v2726, %v2777
      %2779 = vmatmul.bf16.gmra.mxu0 %v550
      %v2780 = vpop.f32.mrf.mxu0
      %v2781 = vadd.f32 %v2726, %v2780
      %v2782 = vpop.f32.mrf.mxu0
      %v2783 = vadd.f32 %v2726, %v2782
      %2784 = vdwg.mxu0
      %vm2785 = vcmp.ge.f32.partialorder %v2746, 0.0
      %vm2786 = vcmp.ge.f32.partialorder %v2748, 0.0
      %vm2787 = vcmp.ge.f32.partialorder %v2751, 0.0
      %vm2788 = vcmp.ge.f32.partialorder %v2753, 0.0
      %vm2789 = vcmp.ge.f32.partialorder %v2756, 0.0
      %vm2790 = vcmp.ge.f32.partialorder %v2758, 0.0
      %vm2791 = vcmp.ge.f32.partialorder %v2761, 0.0
      %vm2792 = vcmp.ge.f32.partialorder %v2763, 0.0
      %vm2793 = vcmp.ge.f32.partialorder %v2766, 0.0
      %vm2794 = vcmp.ge.f32.partialorder %v2768, 0.0
      %vm2795 = vcmp.ge.f32.partialorder %v2771, 0.0
      %vm2796 = vcmp.ge.f32.partialorder %v2773, 0.0
      %vm2797 = vcmp.ge.f32.partialorder %v2776, 0.0
      %vm2798 = vcmp.ge.f32.partialorder %v2778, 0.0
      %vm2799 = vcmp.ge.f32.partialorder %v2781, 0.0
      %vm2800 = vcmp.ge.f32.partialorder %v2783, 0.0
      %v2801 = vmul.f32 %v2746, 0.2
      %v2802 = vmul.f32 %v2748, 0.2
      %v2803 = vmul.f32 %v2751, 0.2
      %v2804 = vmul.f32 %v2753, 0.2
      %v2805 = vmul.f32 %v2756, 0.2
      %v2806 = vmul.f32 %v2758, 0.2
      %v2807 = vmul.f32 %v2761, 0.2
      %v2808 = vmul.f32 %v2763, 0.2
      %v2809 = vmul.f32 %v2766, 0.2
      %v2810 = vmul.f32 %v2768, 0.2
      %v2811 = vmul.f32 %v2771, 0.2
      %v2812 = vmul.f32 %v2773, 0.2
      %v2813 = vmul.f32 %v2776, 0.2
      %v2814 = vmul.f32 %v2778, 0.2
      %v2815 = vmul.f32 %v2781, 0.2
      %v2816 = vmul.f32 %v2783, 0.2
      %v2817 = vsel %vm2785, %v2746, %v2801
      %v2818 = vsel %vm2786, %v2748, %v2802
      %v2819 = vsel %vm2787, %v2751, %v2803
      %v2820 = vsel %vm2788, %v2753, %v2804
      %v2821 = vsel %vm2789, %v2756, %v2805
      %v2822 = vsel %vm2790, %v2758, %v2806
      %v2823 = vsel %vm2791, %v2761, %v2807
      %v2824 = vsel %vm2792, %v2763, %v2808
      %v2825 = vsel %vm2793, %v2766, %v2809
      %v2826 = vsel %vm2794, %v2768, %v2810
      %v2827 = vsel %vm2795, %v2771, %v2811
      %v2828 = vsel %vm2796, %v2773, %v2812
      %v2829 = vsel %vm2797, %v2776, %v2813
      %v2830 = vsel %vm2798, %v2778, %v2814
      %v2831 = vsel %vm2799, %v2781, %v2815
      %v2832 = vsel %vm2800, %v2783, %v2816
      %v2833 = vperm.slane %v2706, 0
      %v2834 = vlaneseq
      %v2835 = vshrl.u32 %v2834, 7
      %2837 = vset.pattern.permute.xlu0 %v2835
      %2838 = vperm.xlu0 %2837, %v2833
      %v2839 = vpop.permute.xlu0 %2838
      %v2840 = vperm.slane %v2706, 1
      %v2841 = vlaneseq
      %v2842 = vshrl.u32 %v2841, 7
      %2844 = vset.pattern.permute.xlu0 %v2842
      %2845 = vperm.xlu0 %2844, %v2840
      %v2846 = vpop.permute.xlu0 %2845
      %v2847 = vperm.slane %v2706, 2
      %v2848 = vlaneseq
      %v2849 = vshrl.u32 %v2848, 7
      %2851 = vset.pattern.permute.xlu0 %v2849
      %2852 = vperm.xlu0 %2851, %v2847
      %v2853 = vpop.permute.xlu0 %2852
      %v2854 = vperm.slane %v2706, 3
      %v2855 = vlaneseq
      %v2856 = vshrl.u32 %v2855, 7
      %2858 = vset.pattern.permute.xlu0 %v2856
      %2859 = vperm.xlu0 %2858, %v2854
      %v2860 = vpop.permute.xlu0 %2859
      %v2861 = vperm.slane %v2706, 4
      %v2862 = vlaneseq
      %v2863 = vshrl.u32 %v2862, 7
      %2865 = vset.pattern.permute.xlu0 %v2863
      %2866 = vperm.xlu0 %2865, %v2861
      %v2867 = vpop.permute.xlu0 %2866
      %v2868 = vperm.slane %v2706, 5
      %v2869 = vlaneseq
      %v2870 = vshrl.u32 %v2869, 7
      %2872 = vset.pattern.permute.xlu0 %v2870
      %2873 = vperm.xlu0 %2872, %v2868
      %v2874 = vpop.permute.xlu0 %2873
      %v2875 = vperm.slane %v2706, 6
      %v2876 = vlaneseq
      %v2877 = vshrl.u32 %v2876, 7
      %2879 = vset.pattern.permute.xlu0 %v2877
      %2880 = vperm.xlu0 %2879, %v2875
      %v2881 = vpop.permute.xlu0 %2880
      %v2882 = vperm.slane %v2706, 7
      %v2883 = vlaneseq
      %v2884 = vshrl.u32 %v2883, 7
      %2886 = vset.pattern.permute.xlu0 %v2884
      %2887 = vperm.xlu0 %2886, %v2882
      %v2888 = vpop.permute.xlu0 %2887
      %v2889 = vperm.slane %v2721, 0
      %v2890 = vlaneseq
      %v2891 = vshrl.u32 %v2890, 7
      %2893 = vset.pattern.permute.xlu0 %v2891
      %2894 = vperm.xlu0 %2893, %v2889
      %v2895 = vpop.permute.xlu0 %2894
      %v2896 = vperm.slane %v2721, 1
      %v2897 = vlaneseq
      %v2898 = vshrl.u32 %v2897, 7
      %2900 = vset.pattern.permute.xlu0 %v2898
      %2901 = vperm.xlu0 %2900, %v2896
      %v2902 = vpop.permute.xlu0 %2901
      %v2903 = vperm.slane %v2721, 2
      %v2904 = vlaneseq
      %v2905 = vshrl.u32 %v2904, 7
      %2907 = vset.pattern.permute.xlu0 %v2905
      %2908 = vperm.xlu0 %2907, %v2903
      %v2909 = vpop.permute.xlu0 %2908
      %v2910 = vperm.slane %v2721, 3
      %v2911 = vlaneseq
      %v2912 = vshrl.u32 %v2911, 7
      %2914 = vset.pattern.permute.xlu0 %v2912
      %2915 = vperm.xlu0 %2914, %v2910
      %v2916 = vpop.permute.xlu0 %2915
      %v2917 = vperm.slane %v2721, 4
      %v2918 = vlaneseq
      %v2919 = vshrl.u32 %v2918, 7
      %2921 = vset.pattern.permute.xlu0 %v2919
      %2922 = vperm.xlu0 %2921, %v2917
      %v2923 = vpop.permute.xlu0 %2922
      %v2924 = vperm.slane %v2721, 5
      %v2925 = vlaneseq
      %v2926 = vshrl.u32 %v2925, 7
      %2928 = vset.pattern.permute.xlu0 %v2926
      %2929 = vperm.xlu0 %2928, %v2924
      %v2930 = vpop.permute.xlu0 %2929
      %v2931 = vperm.slane %v2721, 6
      %v2932 = vlaneseq
      %v2933 = vshrl.u32 %v2932, 7
      %2935 = vset.pattern.permute.xlu0 %v2933
      %2936 = vperm.xlu0 %2935, %v2931
      %v2937 = vpop.permute.xlu0 %2936
      %v2938 = vperm.slane %v2721, 7
      %v2939 = vlaneseq
      %v2940 = vshrl.u32 %v2939, 7
      %2942 = vset.pattern.permute.xlu0 %v2940
      %2943 = vperm.xlu0 %2942, %v2938
      %v2944 = vpop.permute.xlu0 %2943
      %v2945 = vmul.f32 %v2839, %v2817
      %v2946 = vmul.f32 %v2846, %v2818
      %v2947 = vmul.f32 %v2853, %v2819
      %v2948 = vmul.f32 %v2860, %v2820
      %v2949 = vmul.f32 %v2867, %v2821
      %v2950 = vmul.f32 %v2874, %v2822
      %v2951 = vmul.f32 %v2881, %v2823
      %v2952 = vmul.f32 %v2888, %v2824
      %v2953 = vmul.f32 %v2895, %v2825
      %v2954 = vmul.f32 %v2902, %v2826
      %v2955 = vmul.f32 %v2909, %v2827
      %v2956 = vmul.f32 %v2916, %v2828
      %v2957 = vmul.f32 %v2923, %v2829
      %v2958 = vmul.f32 %v2930, %v2830
      %v2959 = vmul.f32 %v2937, %v2831
      %v2960 = vmul.f32 %v2944, %v2832
      %vm2961 = vcmask 130048
      %v2962 = vsel %vm2961, %v2945, 0.0
      %v2963 = vrot.slane %v2962, 4
      %v2964 = vadd.f32 %v2962, %v2963
      %v2965 = vrot.slane %v2964, 2
      %v2966 = vadd.f32 %v2964, %v2965
      %v2967 = vrot.slane %v2966, 1
      %v2968 = vadd.f32 %v2966, %v2967
      %v2969 = vsel %vm2961, %v2946, 0.0
      %v2970 = vrot.slane %v2969, 4
      %v2971 = vadd.f32 %v2969, %v2970
      %v2972 = vrot.slane %v2971, 2
      %v2973 = vadd.f32 %v2971, %v2972
      %v2974 = vrot.slane %v2973, 1
      %v2975 = vadd.f32 %v2973, %v2974
      %v2976 = vsel %vm2961, %v2947, 0.0
      %v2977 = vrot.slane %v2976, 4
      %v2978 = vadd.f32 %v2976, %v2977
      %v2979 = vrot.slane %v2978, 2
      %v2980 = vadd.f32 %v2978, %v2979
      %v2981 = vrot.slane %v2980, 1
      %v2982 = vadd.f32 %v2980, %v2981
      %v2983 = vsel %vm2961, %v2948, 0.0
      %v2984 = vrot.slane %v2983, 4
      %v2985 = vadd.f32 %v2983, %v2984
      %v2986 = vrot.slane %v2985, 2
      %v2987 = vadd.f32 %v2985, %v2986
      %v2988 = vrot.slane %v2987, 1
      %v2989 = vadd.f32 %v2987, %v2988
      %v2990 = vsel %vm2961, %v2949, 0.0
      %v2991 = vrot.slane %v2990, 4
      %v2992 = vadd.f32 %v2990, %v2991
      %v2993 = vrot.slane %v2992, 2
      %v2994 = vadd.f32 %v2992, %v2993
      %v2995 = vrot.slane %v2994, 1
      %v2996 = vadd.f32 %v2994, %v2995
      %v2997 = vsel %vm2961, %v2950, 0.0
      %v2998 = vrot.slane %v2997, 4
      %v2999 = vadd.f32 %v2997, %v2998
      %v3000 = vrot.slane %v2999, 2
      %v3001 = vadd.f32 %v2999, %v3000
      %v3002 = vrot.slane %v3001, 1
      %v3003 = vadd.f32 %v3001, %v3002
      %v3004 = vsel %vm2961, %v2951, 0.0
      %v3005 = vrot.slane %v3004, 4
      %v3006 = vadd.f32 %v3004, %v3005
      %v3007 = vrot.slane %v3006, 2
      %v3008 = vadd.f32 %v3006, %v3007
      %v3009 = vrot.slane %v3008, 1
      %v3010 = vadd.f32 %v3008, %v3009
      %v3011 = vsel %vm2961, %v2952, 0.0
      %v3012 = vrot.slane %v3011, 4
      %v3013 = vadd.f32 %v3011, %v3012
      %v3014 = vrot.slane %v3013, 2
      %v3015 = vadd.f32 %v3013, %v3014
      %v3016 = vrot.slane %v3015, 1
      %v3017 = vadd.f32 %v3015, %v3016
      %v3018 = vsel %vm2961, %v2953, 0.0
      %v3019 = vrot.slane %v3018, 4
      %v3020 = vadd.f32 %v3018, %v3019
      %v3021 = vrot.slane %v3020, 2
      %v3022 = vadd.f32 %v3020, %v3021
      %v3023 = vrot.slane %v3022, 1
      %v3024 = vadd.f32 %v3022, %v3023
      %v3025 = vsel %vm2961, %v2954, 0.0
      %v3026 = vrot.slane %v3025, 4
      %v3027 = vadd.f32 %v3025, %v3026
      %v3028 = vrot.slane %v3027, 2
      %v3029 = vadd.f32 %v3027, %v3028
      %v3030 = vrot.slane %v3029, 1
      %v3031 = vadd.f32 %v3029, %v3030
      %v3032 = vsel %vm2961, %v2955, 0.0
      %v3033 = vrot.slane %v3032, 4
      %v3034 = vadd.f32 %v3032, %v3033
      %v3035 = vrot.slane %v3034, 2
      %v3036 = vadd.f32 %v3034, %v3035
      %v3037 = vrot.slane %v3036, 1
      %v3038 = vadd.f32 %v3036, %v3037
      %v3039 = vsel %vm2961, %v2956, 0.0
      %v3040 = vrot.slane %v3039, 4
      %v3041 = vadd.f32 %v3039, %v3040
      %v3042 = vrot.slane %v3041, 2
      %v3043 = vadd.f32 %v3041, %v3042
      %v3044 = vrot.slane %v3043, 1
      %v3045 = vadd.f32 %v3043, %v3044
      %v3046 = vsel %vm2961, %v2957, 0.0
      %v3047 = vrot.slane %v3046, 4
      %v3048 = vadd.f32 %v3046, %v3047
      %v3049 = vrot.slane %v3048, 2
      %v3050 = vadd.f32 %v3048, %v3049
      %v3051 = vrot.slane %v3050, 1
      %v3052 = vadd.f32 %v3050, %v3051
      %v3053 = vsel %vm2961, %v2958, 0.0
      %v3054 = vrot.slane %v3053, 4
      %v3055 = vadd.f32 %v3053, %v3054
      %v3056 = vrot.slane %v3055, 2
      %v3057 = vadd.f32 %v3055, %v3056
      %v3058 = vrot.slane %v3057, 1
      %v3059 = vadd.f32 %v3057, %v3058
      %v3060 = vsel %vm2961, %v2959, 0.0
      %v3061 = vrot.slane %v3060, 4
      %v3062 = vadd.f32 %v3060, %v3061
      %v3063 = vrot.slane %v3062, 2
      %v3064 = vadd.f32 %v3062, %v3063
      %v3065 = vrot.slane %v3064, 1
      %v3066 = vadd.f32 %v3064, %v3065
      %v3067 = vsel %vm2961, %v2960, 0.0
      %v3068 = vrot.slane %v3067, 4
      %v3069 = vadd.f32 %v3067, %v3068
      %v3070 = vrot.slane %v3069, 2
      %v3071 = vadd.f32 %v3069, %v3070
      %v3072 = vrot.slane %v3071, 1
      %v3073 = vadd.f32 %v3071, %v3072
      %v3090 = vsel %vm665, %v2975, %v2968
      %v3091 = vsel %vm668, %v2982, %v3090
      %v3092 = vsel %vm671, %v2989, %v3091
      %v3093 = vsel %vm674, %v2996, %v3092
      %v3094 = vsel %vm677, %v3003, %v3093
      %v3095 = vsel %vm680, %v3010, %v3094
      %v3096 = vsel %vm2661, %v3017, %v3095
      %v3097 = vsel %vm665, %v3031, %v3024
      %v3098 = vsel %vm668, %v3038, %v3097
      %v3099 = vsel %vm671, %v3045, %v3098
      %v3100 = vsel %vm674, %v3052, %v3099
      %v3101 = vsel %vm677, %v3059, %v3100
      %v3102 = vsel %vm680, %v3066, %v3101
      %v3103 = vsel %vm2661, %v3073, %v3102
      %3106 = vst.msk [vmem:[%s406] sm:$0xff] %vm2961, %v3096
      %3107 = vst.msk [vmem:[%s406 + $0x8] sm:$0xff] %vm2961, %v3103
      %s3108 = smul.u32 2, %s22
      %p3109 = scmp.lt.s32.totalorder %s3108, 3
      %s3110 = scalar_select %p3109, %s3108, 3
      %s3111 = smul.addr %s3110, 8
      %s3112 = scalar_lea.vmem %s10, %s3111
      // Predicated region
      $region61: #{_lambda_.3} parent=59 // pred_check
        %p3113 = pneg %p265
      $region62: #{_lambda_.3} parent=59 // pred_check_branch
        %3115 = sbr.rel (%p3113) target = $region64
      $region63: #{_lambda_.3} parent=59 // pred_region
        %s3116 = smul.u32 2, %s22
      $region64: #{_lambda_.3} parent=59 // pred_fallthru
        _
    $region60: #{_lambda_.3} parent=5 // pred_fallthru
      _
    %p3117 = scmp.le.s32.totalorder 2, %s17
    // Predicated region
    $region65: #{_lambda_.3} parent=5 // pred_check
      %p3118 = pneg %p3117
    $region66: #{_lambda_.3} parent=5 // pred_check_branch
      %3120 = sbr.rel (%p3118) target = $region68
    $region67: #{_lambda_.3} parent=5 // pred_region
      %s3121 = ssub.s32 %s17, 2
      // Predicated region
      $region69: #{_lambda_.3} parent=67 // pred_check
        %p3122 = pneg %p271
      $region70: #{_lambda_.3} parent=67 // pred_check_branch
        %3124 = sbr.rel (%p3122) target = $region72
      $region71: #{_lambda_.3} parent=67 // pred_region
        %s3125 = smul.u32 2, %s23
        %p3126 = scmp.lt.s32.totalorder %s3125, 3
        %s3127 = scalar_select %p3126, %s3125, 3
        %s3128 = smul.addr %s3127, 8
        %s3129 = scalar_lea.vmem %s10, %s3128
      $region72: #{_lambda_.3} parent=67 // pred_fallthru
        _
    $region68: #{_lambda_.3} parent=5 // pred_fallthru
      _
  $region6: #{_lambda_.3} parent=0 // loop_footer
    %s21 = sadd.s32 1, %s17
  $region7: #{_lambda_.3} parent=0 // loop_footer_branch
    %16 = sbr.rel target = $region3
  $region8: #{_lambda_.3} parent=0 // loop_exit
    _

</llo_original>
